<compile_context>
chip_gen: v7x
topology: tpu7x:2x2x1
jax: 0.10.0
libtpu: 0.0.40
codegen_flags: <defaults>
</compile_context>

<pallas_src>
import functools

import jax
import jax.numpy as jnp
from jax.experimental import pallas as pl
from jax.experimental.pallas import tpu as pltpu


# ----------------------------- kernel helpers ------------------------------

def _lin_relu(h, w_ref, b_ref, act_dtype):
    """bf16-operand MXU matmul (f32 accumulation) -> f32 bias + ReLU -> act_dtype."""
    y = jnp.dot(h.astype(jnp.bfloat16), w_ref[...],
                preferred_element_type=jnp.float32) + b_ref[...]
    return jnp.maximum(y, 0.0).astype(act_dtype)


def _mlp1_feat(x, w1_ref, b1_ref, w2_ref, b2_ref, w3_ref, b3_ref,
               w4_ref, b4_ref, w5_ref, b5_ref, act_dtype):
    """mlp1: 3 -> 64 -> 64 -> 64 -> 128 -> 1024 (all ReLU).  x is (tn, 3) f32.

    Layer 1 (Cin=3) is three VPU broadcast-FMAs instead of an almost-empty MXU
    pass; the remaining layers are bf16 MXU matmuls with f32 accumulation."""
    h = (x[:, 0:1] * w1_ref[0:1, :]
         + x[:, 1:2] * w1_ref[1:2, :]
         + x[:, 2:3] * w1_ref[2:3, :]
         + b1_ref[...])
    h = jnp.maximum(h, 0.0).astype(act_dtype)          # (tn, 64)
    h = _lin_relu(h, w2_ref, b2_ref, act_dtype)        # (tn, 64)
    h = _lin_relu(h, w3_ref, b3_ref, act_dtype)        # (tn, 64)
    h = _lin_relu(h, w4_ref, b4_ref, act_dtype)        # (tn, 128)
    return _lin_relu(h, w5_ref, b5_ref, act_dtype)     # (tn, 1024)


def _mlp2_logits(feat, gbias, w6a_ref, w7_ref, b7_ref, w8_ref, b8_ref,
                 act_dtype, out_dtype):
    """mlp2 on the decomposed concat: concat([feat, gmax]) @ W6 == feat @ W6[:1024] + gbias."""
    h = (jnp.dot(feat.astype(jnp.bfloat16), w6a_ref[...],
                 preferred_element_type=jnp.float32) + gbias)
    h = jnp.maximum(h, 0.0).astype(act_dtype)          # (tn, 512)
    h = _lin_relu(h, w7_ref, b7_ref, act_dtype)        # (tn, 256)
    y = (jnp.dot(h.astype(jnp.bfloat16), w8_ref[...],
                 preferred_element_type=jnp.float32) + b8_ref[...])
    return y.astype(out_dtype)                         # (tn, cpad) lane-dense


# ----------------------------- fused single-pass kernel --------------------

def _fused_kernel(x_ref, w1_ref, b1_ref, w2_ref, b2_ref, w3_ref, b3_ref,
                  w4_ref, b4_ref, w5_ref, b5_ref, w6a_ref, w6b_ref, b6_ref,
                  w7_ref, b7_ref, w8_ref, b8_ref, out_ref, *, act_dtype):
    feat = _mlp1_feat(x_ref[0], w1_ref, b1_ref, w2_ref, b2_ref, w3_ref, b3_ref,
                      w4_ref, b4_ref, w5_ref, b5_ref, act_dtype)       # (N, 1024)
    gmax = jnp.max(feat, axis=0, keepdims=True)                        # (1, 1024)
    gbias = (jnp.dot(gmax.astype(jnp.bfloat16), w6b_ref[...],
                     preferred_element_type=jnp.float32) + b6_ref[...])  # (1, 512)
    out_ref[0] = _mlp2_logits(feat, gbias, w6a_ref, w7_ref, b7_ref,
                              w8_ref, b8_ref, act_dtype, out_ref.dtype)


# ----------------------------- pass 1: partial global max ------------------

def _gmax_kernel(x_ref, w1_ref, b1_ref, w2_ref, b2_ref, w3_ref, b3_ref,
                 w4_ref, b4_ref, w5_ref, b5_ref, gmax_ref, mmax_ref, *, act_dtype):
    t = pl.program_id(2)

    @pl.when(t == 0)
    def _():
        mmax_ref[...] = jnp.full(mmax_ref.shape, -jnp.inf, mmax_ref.dtype)

    feat = _mlp1_feat(x_ref[0], w1_ref, b1_ref, w2_ref, b2_ref, w3_ref, b3_ref,
                      w4_ref, b4_ref, w5_ref, b5_ref, act_dtype)       # (tn, 1024)
    mmax_ref[...] = jnp.maximum(mmax_ref[...],
                                jnp.max(feat, axis=0, keepdims=True))

    @pl.when(t == pl.num_programs(2) - 1)
    def _():
        gmax_ref[0, 0] = mmax_ref[...]       # partial max for this (batch, chunk)


# ----------------------------- pass 2: segmentation head -------------------

def _seg_kernel(x_ref, w1_ref, b1_ref, w2_ref, b2_ref, w3_ref, b3_ref,
                w4_ref, b4_ref, w5_ref, b5_ref, w6a_ref, gbias_ref,
                w7_ref, b7_ref, w8_ref, b8_ref, out_ref, *, act_dtype):
    feat = _mlp1_feat(x_ref[0], w1_ref, b1_ref, w2_ref, b2_ref, w3_ref, b3_ref,
                      w4_ref, b4_ref, w5_ref, b5_ref, act_dtype)       # (tn, 1024)
    out_ref[0] = _mlp2_logits(feat, gbias_ref[0], w6a_ref, w7_ref, b7_ref,
                              w8_ref, b8_ref, act_dtype, out_ref.dtype)


# ----------------------------- wrapper --------------------------------------

def _default_act_dtype():
    """bf16 inter-layer activations on chips with a bf16 VPU (v6e/v7x), f32 on v5e/older."""
    try:
        kind = jax.devices()[0].device_kind.lower()
    except Exception:
        return jnp.bfloat16
    if any(v in kind for v in ("v2", "v3", "v4", "v5")):
        return jnp.float32
    return jnp.bfloat16


def _plan_tiles(n, max_tile):
    """Pick (tn, nt, n_padded): tn * nt == n_padded >= n, tn a multiple of 8 (or == n)."""
    if n <= max_tile:
        return n, 1, n                       # fused single-tile path
    max_tile = max(8, (max_tile // 8) * 8)
    nt = -(-n // max_tile)                   # number of tiles
    tn = -(-n // nt)
    tn = -(-tn // 8) * 8                     # sublane-align the tile
    return tn, nt, tn * nt


def _const_spec(a):
    """Full-block spec with a constant index map (DMA elided after first grid step)."""
    zeros = (0,) * a.ndim
    return pl.BlockSpec(a.shape, lambda *_, z=zeros: z)


def init_params(key, num_classes):
    """Deterministic synthetic parameters (f32). Conv1d(k=1) weight (out,in,1) is
    stored as (in, out) so the kernel does x @ W; biases are stored as (1, out)."""
    dims1 = [(3, 64), (64, 64), (64, 64), (64, 128), (128, 1024)]
    dims2 = [(2048, 512), (512, 256), (256, num_classes)]
    params = []
    for (cin, cout) in dims1 + dims2:
        key, kw, kb = jax.random.split(key, 3)
        scale = 1.0 / jnp.sqrt(jnp.float32(cin))
        w = jax.random.normal(kw, (cin, cout), jnp.float32) * scale
        b = jax.random.normal(kb, (1, cout), jnp.float32) * 0.01
        params.append((w, b))
    return params


def pointnet_seg_forward(x, params, num_classes, *, max_tile=2048,
                         out_dtype=jnp.bfloat16, act_dtype=None,
                         return_padded_classes=False):
    """PointNetSeg forward.  x: (B, N, 3) f32 -> (B, N, num_classes) logits.

    out_dtype: dtype the kernel writes (bf16 default halves the HBM writeback and
      the class-slice read; pass jnp.float32 for full-precision logits).
    return_padded_classes: return the lane-dense (B, N, 128*k) slab, skipping the
      wrapper-side class slice (consumer masks/argmaxes the first num_classes cols).
    """
    B, N, _ = x.shape
    (w1, b1), (w2, b2), (w3, b3), (w4, b4), (w5, b5), \
        (w6, b6), (w7, b7), (w8, b8) = params
    if act_dtype is None:
        act_dtype = _default_act_dtype()

    # bf16 MXU operands; biases (and the K=3 first layer, done on the VPU) stay f32.
    bf = lambda a: a.astype(jnp.bfloat16)
    w2b, w3b, w4b, w5b, w7b = map(bf, (w2, w3, w4, w5, w7))
    w6a, w6b = bf(w6[:1024, :]), bf(w6[1024:, :])

    # Lane-dense output: pad the class dim to a multiple of 128 (zero columns).
    cpad = max(128, ((num_classes + 127) // 128) * 128)
    w8p = bf(jnp.zeros((w8.shape[0], cpad), jnp.float32).at[:, :num_classes].set(w8))
    b8p = jnp.zeros((1, cpad), jnp.float32).at[:, :num_classes].set(b8)

    mlp1_args = (w1, b1, w2b, b2, w3b, b3, w4b, b4, w5b, b5)
    mlp1_specs = [_const_spec(a) for a in mlp1_args]

    tn, nt, n_pad = _plan_tiles(N, max_tile)
    cparams = lambda sem: pltpu.CompilerParams(
        dimension_semantics=sem,
        vmem_limit_bytes=48 << 20,   # < 64 MiB physical VMEM on v7x
    )

    if nt == 1:
        # ---- fused single-pass path: whole point cloud in one tile ----
        out = pl.pallas_call(
            functools.partial(_fused_kernel, act_dtype=act_dtype),
            out_shape=jax.ShapeDtypeStruct((B, N, cpad), out_dtype),
            grid_spec=pltpu.PrefetchScalarGridSpec(
                num_scalar_prefetch=0,
                grid=(B,),
                in_specs=[pl.BlockSpec((1, N, 3), lambda b: (b, 0, 0))]
                         + mlp1_specs
                         + [_const_spec(a) for a in (w6a, w6b, b6, w7b, b7, w8p, b8p)],
                out_specs=pl.BlockSpec((1, N, cpad), lambda b: (b, 0, 0)),
            ),
            compiler_params=cparams(("parallel",)),
        )(x, *mlp1_args, w6a, w6b, b6, w7b, b7, w8p, b8p)
    else:
        # ---- two-pass path over N tiles ----
        xp = x
        if n_pad > N:
            # Pad with duplicated real points: identical features -> global max unchanged.
            pad = jnp.broadcast_to(x[:, -1:, :], (B, n_pad - N, 3))
            xp = jnp.concatenate([x, pad], axis=1)

        # Split the reduction axis into C chunks so both v7x TensorCores get work
        # even when B == 1 (harmless extra loop split on single-TC v5e/v6e).
        C = 2 if nt % 2 == 0 else 1
        ntc = nt // C

        # Pass 1: partial per-(batch, chunk) maxima of the 1024-dim features.
        gmax_part = pl.pallas_call(
            functools.partial(_gmax_kernel, act_dtype=act_dtype),
            out_shape=jax.ShapeDtypeStruct((B, C, 1, 1024), jnp.float32),
            grid_spec=pltpu.PrefetchScalarGridSpec(
                num_scalar_prefetch=0,
                grid=(B, C, ntc),
                in_specs=[pl.BlockSpec(
                              (1, tn, 3),
                              lambda b, c, t, ntc=ntc: (b, c * ntc + t, 0))]
                         + mlp1_specs,
                out_specs=pl.BlockSpec((1, 1, 1, 1024), lambda b, c, t: (b, c, 0, 0)),
                scratch_shapes=[pltpu.VMEM((1, 1024), jnp.float32)],
            ),
            compiler_params=cparams(("parallel", "parallel", "arbitrary")),
        )(xp, *mlp1_args)

        # Hoisted global-feature term, once per batch element (tiny XLA follow-up):
        # gbias = gmax @ W6[1024:] + b6.
        gmax = jnp.max(gmax_part, axis=1)                              # (B, 1, 1024)
        gbias = (jnp.matmul(gmax.astype(jnp.bfloat16), w6b,
                            preferred_element_type=jnp.float32) + b6)  # (B, 1, 512)

        # Pass 2: recompute mlp1 per tile (cheaper than spilling feat to HBM), run mlp2.
        out = pl.pallas_call(
            functools.partial(_seg_kernel, act_dtype=act_dtype),
            out_shape=jax.ShapeDtypeStruct((B, n_pad, cpad), out_dtype),
            grid_spec=pltpu.PrefetchScalarGridSpec(
                num_scalar_prefetch=0,
                grid=(B, nt),
                in_specs=[pl.BlockSpec((1, tn, 3), lambda b, t: (b, t, 0))]
                         + mlp1_specs
                         + [_const_spec(w6a),
                            pl.BlockSpec((1, 1, 512), lambda b, t: (b, 0, 0)),
                            _const_spec(w7b), _const_spec(b7),
                            _const_spec(w8p), _const_spec(b8p)],
                out_specs=pl.BlockSpec((1, tn, cpad), lambda b, t: (b, t, 0)),
            ),
            compiler_params=cparams(("parallel", "parallel")),
        )(xp, *mlp1_args, w6a, gbias, w7b, b7, w8p, b8p)

        if n_pad > N:
            out = out[:, :N, :]

    if return_padded_classes:
        return out
    return out[..., :num_classes]


# ----------------------------- pure-JAX reference ---------------------------

def pointnet_seg_reference(x, params):
    """Pure-JAX f32 reference mirroring the PyTorch forward."""
    (w1, b1), (w2, b2), (w3, b3), (w4, b4), (w5, b5), \
        (w6, b6), (w7, b7), (w8, b8) = params
    relu = lambda v: jnp.maximum(v, 0.0)
    h = relu(x @ w1 + b1)
    h = relu(h @ w2 + b2)
    h = relu(h @ w3 + b3)
    h = relu(h @ w4 + b4)
    feat = relu(h @ w5 + b5)                              # (B, N, 1024)
    gmax = jnp.max(feat, axis=1, keepdims=True)           # (B, 1, 1024)
    gmax = jnp.broadcast_to(gmax, feat.shape)             # repeat over N
    concat = jnp.concatenate([feat, gmax], axis=-1)       # (B, N, 2048)
    h = relu(concat @ w6 + b6)
    h = relu(h @ w7 + b7)
    return h @ w8 + b8                                    # (B, N, num_classes)


if __name__ == "__main__":
    key = jax.random.PRNGKey(0)
    key, kx, kp, kx2 = jax.random.split(key, 4)

    B, N, num_classes = 2, 16, 4
    x = jax.random.normal(kx, (B, N, 3), jnp.float32)
    params = init_params(kp, num_classes)

    # Case 1: fused single-pass path (whole cloud fits one tile).
    out = pointnet_seg_forward(x, params, num_classes)
    out = jax.block_until_ready(out)
    ref = pointnet_seg_reference(x, params)
    assert out.shape == (B, N, num_classes)
    # bf16 matmul operands / bf16 logits (f32 accumulation) -> loosened tolerance.
    assert jnp.allclose(out.astype(jnp.float32), ref, atol=3e-2, rtol=3e-2), \
        float(jnp.max(jnp.abs(out.astype(jnp.float32) - ref)))

    # Case 2: two-pass path with tiny tiles — exercises the indivisible-N padding
    # (29 -> 32 points, duplicated real point) and the core-split pass-1 reduction.
    x2 = jax.random.normal(kx2, (1, 29, 3), jnp.float32)
    out2 = pointnet_seg_forward(x2, params, num_classes, max_tile=8)
    out2 = jax.block_until_ready(out2)
    ref2 = pointnet_seg_reference(x2, params)
    assert out2.shape == (1, 29, num_classes)
    assert jnp.allclose(out2.astype(jnp.float32), ref2, atol=3e-2, rtol=3e-2), \
        float(jnp.max(jnp.abs(out2.astype(jnp.float32) - ref2)))

    print("KERNEL_OK")
</pallas_src>

<mosaic_0001>
module attributes {stable_mosaic.version = 11 : i64} {
  func.func @_fused_kernel(%arg0: i32, %arg1: memref<1x16x3xf32, #tpu.memory_space<vmem>>, %arg2: memref<3x64xf32, #tpu.memory_space<vmem>>, %arg3: memref<1x64xf32, #tpu.memory_space<vmem>>, %arg4: memref<64x64xbf16, #tpu.memory_space<vmem>>, %arg5: memref<1x64xf32, #tpu.memory_space<vmem>>, %arg6: memref<64x64xbf16, #tpu.memory_space<vmem>>, %arg7: memref<1x64xf32, #tpu.memory_space<vmem>>, %arg8: memref<64x128xbf16, #tpu.memory_space<vmem>>, %arg9: memref<1x128xf32, #tpu.memory_space<vmem>>, %arg10: memref<128x1024xbf16, #tpu.memory_space<vmem>>, %arg11: memref<1x1024xf32, #tpu.memory_space<vmem>>, %arg12: memref<1024x512xbf16, #tpu.memory_space<vmem>>, %arg13: memref<1024x512xbf16, #tpu.memory_space<vmem>>, %arg14: memref<1x512xf32, #tpu.memory_space<vmem>>, %arg15: memref<512x256xbf16, #tpu.memory_space<vmem>>, %arg16: memref<1x256xf32, #tpu.memory_space<vmem>>, %arg17: memref<256x128xbf16, #tpu.memory_space<vmem>>, %arg18: memref<1x128xf32, #tpu.memory_space<vmem>>, %arg19: memref<1x16x128xbf16, #tpu.memory_space<vmem>>) attributes {dimension_semantics = [#tpu.dimension_semantics<parallel>], iteration_bounds = array<i64: 2>, scalar_prefetch = 0 : i64, scratch_operands = 0 : i64, tpu.core_type = #tpu.core_type<tc>, window_params = [{transform_indices = @transform_0, window_bounds = array<i64: 1, 16, 3>}, {pipeline_mode = #tpu.pipeline_mode<synchronous>, transform_indices = @transform_1, window_bounds = array<i64: 3, 64>}, {pipeline_mode = #tpu.pipeline_mode<synchronous>, transform_indices = @transform_2, window_bounds = array<i64: 1, 64>}, {pipeline_mode = #tpu.pipeline_mode<synchronous>, transform_indices = @transform_3, window_bounds = array<i64: 64, 64>}, {pipeline_mode = #tpu.pipeline_mode<synchronous>, transform_indices = @transform_4, window_bounds = array<i64: 1, 64>}, {pipeline_mode = #tpu.pipeline_mode<synchronous>, transform_indices = @transform_5, window_bounds = array<i64: 64, 64>}, {pipeline_mode = #tpu.pipeline_mode<synchronous>, transform_indices = @transform_6, window_bounds = array<i64: 1, 64>}, {pipeline_mode = #tpu.pipeline_mode<synchronous>, transform_indices = @transform_7, window_bounds = array<i64: 64, 128>}, {pipeline_mode = #tpu.pipeline_mode<synchronous>, transform_indices = @transform_8, window_bounds = array<i64: 1, 128>}, {pipeline_mode = #tpu.pipeline_mode<synchronous>, transform_indices = @transform_9, window_bounds = array<i64: 128, 1024>}, {pipeline_mode = #tpu.pipeline_mode<synchronous>, transform_indices = @transform_10, window_bounds = array<i64: 1, 1024>}, {pipeline_mode = #tpu.pipeline_mode<synchronous>, transform_indices = @transform_11, window_bounds = array<i64: 1024, 512>}, {pipeline_mode = #tpu.pipeline_mode<synchronous>, transform_indices = @transform_12, window_bounds = array<i64: 1024, 512>}, {pipeline_mode = #tpu.pipeline_mode<synchronous>, transform_indices = @transform_13, window_bounds = array<i64: 1, 512>}, {pipeline_mode = #tpu.pipeline_mode<synchronous>, transform_indices = @transform_14, window_bounds = array<i64: 512, 256>}, {pipeline_mode = #tpu.pipeline_mode<synchronous>, transform_indices = @transform_15, window_bounds = array<i64: 1, 256>}, {pipeline_mode = #tpu.pipeline_mode<synchronous>, transform_indices = @transform_16, window_bounds = array<i64: 256, 128>}, {pipeline_mode = #tpu.pipeline_mode<synchronous>, transform_indices = @transform_17, window_bounds = array<i64: 1, 128>}, {transform_indices = @transform_18, window_bounds = array<i64: 1, 16, 128>}]} {
    %c0 = arith.constant 0 : index
    %c0_0 = arith.constant 0 : index
    %c0_1 = arith.constant 0 : index
    %0 = vector.load %arg1[%c0, %c0_0, %c0_1] : memref<1x16x3xf32, #tpu.memory_space<vmem>>, vector<1x16x3xf32>
    %1 = vector.shape_cast %0 : vector<1x16x3xf32> to vector<16x3xf32>
    %2 = vector.extract_strided_slice %1 {offsets = [0, 0], sizes = [16, 1], strides = [1, 1]} : vector<16x3xf32> to vector<16x1xf32>
    %c0_2 = arith.constant 0 : index
    %c0_3 = arith.constant 0 : index
    %3 = vector.load %arg2[%c0_2, %c0_3] : memref<3x64xf32, #tpu.memory_space<vmem>>, vector<1x64xf32>
    %4 = vector.broadcast %2 : vector<16x1xf32> to vector<16x64xf32>
    %5 = vector.broadcast %3 : vector<1x64xf32> to vector<16x64xf32>
    %6 = arith.mulf %4, %5 : vector<16x64xf32>
    %7 = vector.extract_strided_slice %1 {offsets = [0, 1], sizes = [16, 1], strides = [1, 1]} : vector<16x3xf32> to vector<16x1xf32>
    %c1 = arith.constant 1 : index
    %c0_4 = arith.constant 0 : index
    %8 = vector.load %arg2[%c1, %c0_4] : memref<3x64xf32, #tpu.memory_space<vmem>>, vector<1x64xf32>
    %9 = vector.broadcast %7 : vector<16x1xf32> to vector<16x64xf32>
    %10 = vector.broadcast %8 : vector<1x64xf32> to vector<16x64xf32>
    %11 = arith.mulf %9, %10 : vector<16x64xf32>
    %12 = arith.addf %6, %11 : vector<16x64xf32>
    %13 = vector.extract_strided_slice %1 {offsets = [0, 2], sizes = [16, 1], strides = [1, 1]} : vector<16x3xf32> to vector<16x1xf32>
    %c2 = arith.constant 2 : index
    %c0_5 = arith.constant 0 : index
    %14 = vector.load %arg2[%c2, %c0_5] : memref<3x64xf32, #tpu.memory_space<vmem>>, vector<1x64xf32>
    %15 = vector.broadcast %13 : vector<16x1xf32> to vector<16x64xf32>
    %16 = vector.broadcast %14 : vector<1x64xf32> to vector<16x64xf32>
    %17 = arith.mulf %15, %16 : vector<16x64xf32>
    %18 = arith.addf %12, %17 : vector<16x64xf32>
    %c0_6 = arith.constant 0 : index
    %c0_7 = arith.constant 0 : index
    %19 = vector.load %arg3[%c0_6, %c0_7] : memref<1x64xf32, #tpu.memory_space<vmem>>, vector<1x64xf32>
    %20 = vector.broadcast %19 : vector<1x64xf32> to vector<16x64xf32>
    %21 = arith.addf %18, %20 : vector<16x64xf32>
    %cst = arith.constant 0.000000e+00 : f32
    %22 = vector.broadcast %cst : f32 to vector<16x64xf32>
    %23 = arith.maximumf %21, %22 : vector<16x64xf32>
    %24 = arith.truncf %23 : vector<16x64xf32> to vector<16x64xbf16>
    %c0_8 = arith.constant 0 : index
    %c0_9 = arith.constant 0 : index
    %25 = vector.load %arg4[%c0_8, %c0_9] : memref<64x64xbf16, #tpu.memory_space<vmem>>, vector<64x64xbf16>
    %cst_10 = arith.constant dense<0.000000e+00> : vector<16x64xf32>
    %26 = tpu.matmul %24, %25, %cst_10 {dimension_numbers = #tpu.dot_dimension_numbers<[1], [0], [0], [1], [0, 0, 1, 1], [], []>} : vector<16x64xbf16>, vector<64x64xbf16>, vector<16x64xf32> -> vector<16x64xf32>
    %c0_11 = arith.constant 0 : index
    %c0_12 = arith.constant 0 : index
    %27 = vector.load %arg5[%c0_11, %c0_12] : memref<1x64xf32, #tpu.memory_space<vmem>>, vector<1x64xf32>
    %28 = vector.broadcast %27 : vector<1x64xf32> to vector<16x64xf32>
    %29 = arith.addf %26, %28 : vector<16x64xf32>
    %cst_13 = arith.constant 0.000000e+00 : f32
    %30 = vector.broadcast %cst_13 : f32 to vector<16x64xf32>
    %31 = arith.maximumf %29, %30 : vector<16x64xf32>
    %32 = arith.truncf %31 : vector<16x64xf32> to vector<16x64xbf16>
    %c0_14 = arith.constant 0 : index
    %c0_15 = arith.constant 0 : index
    %33 = vector.load %arg6[%c0_14, %c0_15] : memref<64x64xbf16, #tpu.memory_space<vmem>>, vector<64x64xbf16>
    %cst_16 = arith.constant dense<0.000000e+00> : vector<16x64xf32>
    %34 = tpu.matmul %32, %33, %cst_16 {dimension_numbers = #tpu.dot_dimension_numbers<[1], [0], [0], [1], [0, 0, 1, 1], [], []>} : vector<16x64xbf16>, vector<64x64xbf16>, vector<16x64xf32> -> vector<16x64xf32>
    %c0_17 = arith.constant 0 : index
    %c0_18 = arith.constant 0 : index
    %35 = vector.load %arg7[%c0_17, %c0_18] : memref<1x64xf32, #tpu.memory_space<vmem>>, vector<1x64xf32>
    %36 = vector.broadcast %35 : vector<1x64xf32> to vector<16x64xf32>
    %37 = arith.addf %34, %36 : vector<16x64xf32>
    %cst_19 = arith.constant 0.000000e+00 : f32
    %38 = vector.broadcast %cst_19 : f32 to vector<16x64xf32>
    %39 = arith.maximumf %37, %38 : vector<16x64xf32>
    %40 = arith.truncf %39 : vector<16x64xf32> to vector<16x64xbf16>
    %c0_20 = arith.constant 0 : index
    %c0_21 = arith.constant 0 : index
    %41 = vector.load %arg8[%c0_20, %c0_21] : memref<64x128xbf16, #tpu.memory_space<vmem>>, vector<64x128xbf16>
    %cst_22 = arith.constant dense<0.000000e+00> : vector<16x128xf32>
    %42 = tpu.matmul %40, %41, %cst_22 {dimension_numbers = #tpu.dot_dimension_numbers<[1], [0], [0], [1], [0, 0, 1, 1], [], []>} : vector<16x64xbf16>, vector<64x128xbf16>, vector<16x128xf32> -> vector<16x128xf32>
    %c0_23 = arith.constant 0 : index
    %c0_24 = arith.constant 0 : index
    %43 = vector.load %arg9[%c0_23, %c0_24] : memref<1x128xf32, #tpu.memory_space<vmem>>, vector<1x128xf32>
    %44 = vector.broadcast %43 : vector<1x128xf32> to vector<16x128xf32>
    %45 = arith.addf %42, %44 : vector<16x128xf32>
    %cst_25 = arith.constant 0.000000e+00 : f32
    %46 = vector.broadcast %cst_25 : f32 to vector<16x128xf32>
    %47 = arith.maximumf %45, %46 : vector<16x128xf32>
    %48 = arith.truncf %47 : vector<16x128xf32> to vector<16x128xbf16>
    %c0_26 = arith.constant 0 : index
    %c0_27 = arith.constant 0 : index
    %49 = vector.load %arg10[%c0_26, %c0_27] : memref<128x1024xbf16, #tpu.memory_space<vmem>>, vector<128x1024xbf16>
    %cst_28 = arith.constant dense<0.000000e+00> : vector<16x1024xf32>
    %50 = tpu.matmul %48, %49, %cst_28 {dimension_numbers = #tpu.dot_dimension_numbers<[1], [0], [0], [1], [0, 0, 1, 1], [], []>} : vector<16x128xbf16>, vector<128x1024xbf16>, vector<16x1024xf32> -> vector<16x1024xf32>
    %c0_29 = arith.constant 0 : index
    %c0_30 = arith.constant 0 : index
    %51 = vector.load %arg11[%c0_29, %c0_30] : memref<1x1024xf32, #tpu.memory_space<vmem>>, vector<1x1024xf32>
    %52 = vector.broadcast %51 : vector<1x1024xf32> to vector<16x1024xf32>
    %53 = arith.addf %50, %52 : vector<16x1024xf32>
    %cst_31 = arith.constant 0.000000e+00 : f32
    %54 = vector.broadcast %cst_31 : f32 to vector<16x1024xf32>
    %55 = arith.maximumf %53, %54 : vector<16x1024xf32>
    %56 = arith.truncf %55 : vector<16x1024xf32> to vector<16x1024xbf16>
    %cst_32 = arith.constant dense<0xFF80> : vector<1024xbf16>
    %57 = vector.multi_reduction <maximumf>, %56, %cst_32 [0] : vector<16x1024xbf16> to vector<1024xbf16>
    %58 = vector.shape_cast %57 : vector<1024xbf16> to vector<1x1024xbf16>
    %c0_33 = arith.constant 0 : index
    %c0_34 = arith.constant 0 : index
    %59 = vector.load %arg13[%c0_33, %c0_34] : memref<1024x512xbf16, #tpu.memory_space<vmem>>, vector<1024x512xbf16>
    %cst_35 = arith.constant dense<0.000000e+00> : vector<1x512xf32>
    %60 = tpu.matmul %58, %59, %cst_35 {dimension_numbers = #tpu.dot_dimension_numbers<[1], [0], [0], [1], [0, 0, 1, 1], [], []>} : vector<1x1024xbf16>, vector<1024x512xbf16>, vector<1x512xf32> -> vector<1x512xf32>
    %c0_36 = arith.constant 0 : index
    %c0_37 = arith.constant 0 : index
    %61 = vector.load %arg14[%c0_36, %c0_37] : memref<1x512xf32, #tpu.memory_space<vmem>>, vector<1x512xf32>
    %62 = arith.addf %60, %61 : vector<1x512xf32>
    %c0_38 = arith.constant 0 : index
    %c0_39 = arith.constant 0 : index
    %63 = vector.load %arg12[%c0_38, %c0_39] : memref<1024x512xbf16, #tpu.memory_space<vmem>>, vector<1024x512xbf16>
    %cst_40 = arith.constant dense<0.000000e+00> : vector<16x512xf32>
    %64 = tpu.matmul %56, %63, %cst_40 {dimension_numbers = #tpu.dot_dimension_numbers<[1], [0], [0], [1], [0, 0, 1, 1], [], []>} : vector<16x1024xbf16>, vector<1024x512xbf16>, vector<16x512xf32> -> vector<16x512xf32>
    %65 = vector.broadcast %62 : vector<1x512xf32> to vector<16x512xf32>
    %66 = arith.addf %64, %65 : vector<16x512xf32>
    %cst_41 = arith.constant 0.000000e+00 : f32
    %67 = vector.broadcast %cst_41 : f32 to vector<16x512xf32>
    %68 = arith.maximumf %66, %67 : vector<16x512xf32>
    %69 = arith.truncf %68 : vector<16x512xf32> to vector<16x512xbf16>
    %c0_42 = arith.constant 0 : index
    %c0_43 = arith.constant 0 : index
    %70 = vector.load %arg15[%c0_42, %c0_43] : memref<512x256xbf16, #tpu.memory_space<vmem>>, vector<512x256xbf16>
    %cst_44 = arith.constant dense<0.000000e+00> : vector<16x256xf32>
    %71 = tpu.matmul %69, %70, %cst_44 {dimension_numbers = #tpu.dot_dimension_numbers<[1], [0], [0], [1], [0, 0, 1, 1], [], []>} : vector<16x512xbf16>, vector<512x256xbf16>, vector<16x256xf32> -> vector<16x256xf32>
    %c0_45 = arith.constant 0 : index
    %c0_46 = arith.constant 0 : index
    %72 = vector.load %arg16[%c0_45, %c0_46] : memref<1x256xf32, #tpu.memory_space<vmem>>, vector<1x256xf32>
    %73 = vector.broadcast %72 : vector<1x256xf32> to vector<16x256xf32>
    %74 = arith.addf %71, %73 : vector<16x256xf32>
    %cst_47 = arith.constant 0.000000e+00 : f32
    %75 = vector.broadcast %cst_47 : f32 to vector<16x256xf32>
    %76 = arith.maximumf %74, %75 : vector<16x256xf32>
    %77 = arith.truncf %76 : vector<16x256xf32> to vector<16x256xbf16>
    %c0_48 = arith.constant 0 : index
    %c0_49 = arith.constant 0 : index
    %78 = vector.load %arg17[%c0_48, %c0_49] : memref<256x128xbf16, #tpu.memory_space<vmem>>, vector<256x128xbf16>
    %cst_50 = arith.constant dense<0.000000e+00> : vector<16x128xf32>
    %79 = tpu.matmul %77, %78, %cst_50 {dimension_numbers = #tpu.dot_dimension_numbers<[1], [0], [0], [1], [0, 0, 1, 1], [], []>} : vector<16x256xbf16>, vector<256x128xbf16>, vector<16x128xf32> -> vector<16x128xf32>
    %c0_51 = arith.constant 0 : index
    %c0_52 = arith.constant 0 : index
    %80 = vector.load %arg18[%c0_51, %c0_52] : memref<1x128xf32, #tpu.memory_space<vmem>>, vector<1x128xf32>
    %81 = vector.broadcast %80 : vector<1x128xf32> to vector<16x128xf32>
    %82 = arith.addf %79, %81 : vector<16x128xf32>
    %83 = arith.truncf %82 : vector<16x128xf32> to vector<16x128xbf16>
    %c0_53 = arith.constant 0 : index
    %c0_54 = arith.constant 0 : index
    %c0_55 = arith.constant 0 : index
    %84 = vector.load %arg19[%c0_53, %c0_54, %c0_55] : memref<1x16x128xbf16, #tpu.memory_space<vmem>>, vector<1x16x128xbf16>
    %85 = vector.shape_cast %84 : vector<1x16x128xbf16> to vector<16x128xbf16>
    %86 = vector.shape_cast %83 : vector<16x128xbf16> to vector<1x16x128xbf16>
    tpu.vector_store %arg19[%c0_53, %c0_54, %c0_55], %86 {strides = array<i32>} : memref<1x16x128xbf16, #tpu.memory_space<vmem>>, vector<1x16x128xbf16>,
    return
  }
  func.func @transform_0(%arg0: i32) -> (i32, i32, i32) {
    %c0_i32 = arith.constant 0 : i32
    %c0_i32_0 = arith.constant 0 : i32
    %c0_i32_1 = arith.constant 0 : i32
    return %arg0, %c0_i32, %c0_i32_0 : i32, i32, i32
  }
  func.func @transform_1(%arg0: i32) -> (i32, i32) {
    %c0_i32 = arith.constant 0 : i32
    %c0_i32_0 = arith.constant 0 : i32
    %c0_i32_1 = arith.constant 0 : i32
    return %c0_i32, %c0_i32_0 : i32, i32
  }
  func.func @transform_2(%arg0: i32) -> (i32, i32) {
    %c0_i32 = arith.constant 0 : i32
    %c0_i32_0 = arith.constant 0 : i32
    %c0_i32_1 = arith.constant 0 : i32
    return %c0_i32, %c0_i32_0 : i32, i32
  }
  func.func @transform_3(%arg0: i32) -> (i32, i32) {
    %c0_i32 = arith.constant 0 : i32
    %c0_i32_0 = arith.constant 0 : i32
    %c0_i32_1 = arith.constant 0 : i32
    return %c0_i32, %c0_i32_0 : i32, i32
  }
  func.func @transform_4(%arg0: i32) -> (i32, i32) {
    %c0_i32 = arith.constant 0 : i32
    %c0_i32_0 = arith.constant 0 : i32
    %c0_i32_1 = arith.constant 0 : i32
    return %c0_i32, %c0_i32_0 : i32, i32
  }
  func.func @transform_5(%arg0: i32) -> (i32, i32) {
    %c0_i32 = arith.constant 0 : i32
    %c0_i32_0 = arith.constant 0 : i32
    %c0_i32_1 = arith.constant 0 : i32
    return %c0_i32, %c0_i32_0 : i32, i32
  }
  func.func @transform_6(%arg0: i32) -> (i32, i32) {
    %c0_i32 = arith.constant 0 : i32
    %c0_i32_0 = arith.constant 0 : i32
    %c0_i32_1 = arith.constant 0 : i32
    return %c0_i32, %c0_i32_0 : i32, i32
  }
  func.func @transform_7(%arg0: i32) -> (i32, i32) {
    %c0_i32 = arith.constant 0 : i32
    %c0_i32_0 = arith.constant 0 : i32
    %c0_i32_1 = arith.constant 0 : i32
    return %c0_i32, %c0_i32_0 : i32, i32
  }
  func.func @transform_8(%arg0: i32) -> (i32, i32) {
    %c0_i32 = arith.constant 0 : i32
    %c0_i32_0 = arith.constant 0 : i32
    %c0_i32_1 = arith.constant 0 : i32
    return %c0_i32, %c0_i32_0 : i32, i32
  }
  func.func @transform_9(%arg0: i32) -> (i32, i32) {
    %c0_i32 = arith.constant 0 : i32
    %c0_i32_0 = arith.constant 0 : i32
    %c0_i32_1 = arith.constant 0 : i32
    return %c0_i32, %c0_i32_0 : i32, i32
  }
  func.func @transform_10(%arg0: i32) -> (i32, i32) {
    %c0_i32 = arith.constant 0 : i32
    %c0_i32_0 = arith.constant 0 : i32
    %c0_i32_1 = arith.constant 0 : i32
    return %c0_i32, %c0_i32_0 : i32, i32
  }
  func.func @transform_11(%arg0: i32) -> (i32, i32) {
    %c0_i32 = arith.constant 0 : i32
    %c0_i32_0 = arith.constant 0 : i32
    %c0_i32_1 = arith.constant 0 : i32
    return %c0_i32, %c0_i32_0 : i32, i32
  }
  func.func @transform_12(%arg0: i32) -> (i32, i32) {
    %c0_i32 = arith.constant 0 : i32
    %c0_i32_0 = arith.constant 0 : i32
    %c0_i32_1 = arith.constant 0 : i32
    return %c0_i32, %c0_i32_0 : i32, i32
  }
  func.func @transform_13(%arg0: i32) -> (i32, i32) {
    %c0_i32 = arith.constant 0 : i32
    %c0_i32_0 = arith.constant 0 : i32
    %c0_i32_1 = arith.constant 0 : i32
    return %c0_i32, %c0_i32_0 : i32, i32
  }
  func.func @transform_14(%arg0: i32) -> (i32, i32) {
    %c0_i32 = arith.constant 0 : i32
    %c0_i32_0 = arith.constant 0 : i32
    %c0_i32_1 = arith.constant 0 : i32
    return %c0_i32, %c0_i32_0 : i32, i32
  }
  func.func @transform_15(%arg0: i32) -> (i32, i32) {
    %c0_i32 = arith.constant 0 : i32
    %c0_i32_0 = arith.constant 0 : i32
    %c0_i32_1 = arith.constant 0 : i32
    return %c0_i32, %c0_i32_0 : i32, i32
  }
  func.func @transform_16(%arg0: i32) -> (i32, i32) {
    %c0_i32 = arith.constant 0 : i32
    %c0_i32_0 = arith.constant 0 : i32
    %c0_i32_1 = arith.constant 0 : i32
    return %c0_i32, %c0_i32_0 : i32, i32
  }
  func.func @transform_17(%arg0: i32) -> (i32, i32) {
    %c0_i32 = arith.constant 0 : i32
    %c0_i32_0 = arith.constant 0 : i32
    %c0_i32_1 = arith.constant 0 : i32
    return %c0_i32, %c0_i32_0 : i32, i32
  }
  func.func @transform_18(%arg0: i32) -> (i32, i32, i32) {
    %c0_i32 = arith.constant 0 : i32
    %c0_i32_0 = arith.constant 0 : i32
    %c0_i32_1 = arith.constant 0 : i32
    return %arg0, %c0_i32, %c0_i32_0 : i32, i32, i32
  }
}

</mosaic_0001>

<llo_original>
// kernel: tpu_custom_call.1
$region0: #{tpu_custom_call.1}
  #allocation0 [shape = 'u32[]', space=smem, size = 0x4, offset = 0x4, fixed_abs, tag = 'smem constant byte address 0x4 - core index']
  #allocation1 [shape = 'u32[144,128]{1,0:T(1,128)}', space=vmem, size = 0x12000, scoped, tag = 'internal scratch']
  %s0 = inlined_call_operand.vmem [shape: f32[2,16,3], index: 0, kind: input, shape index: {}]
  %s1 = inlined_call_operand.hbm [shape: f32[3,64], index: 1, kind: input, shape index: {}]
  %s2 = inlined_call_operand.hbm [shape: f32[1,64], index: 2, kind: input, shape index: {}]
  %s3 = inlined_call_operand.vmem [shape: bf16[64,64], index: 3, kind: input, shape index: {}]
  %s4 = inlined_call_operand.hbm [shape: f32[1,64], index: 4, kind: input, shape index: {}]
  %s5 = inlined_call_operand.hbm [shape: bf16[64,64], index: 5, kind: input, shape index: {}]
  %s6 = inlined_call_operand.hbm [shape: f32[1,64], index: 6, kind: input, shape index: {}]
  %s7 = inlined_call_operand.vmem [shape: bf16[64,128], index: 7, kind: input, shape index: {}]
  %s8 = inlined_call_operand.hbm [shape: f32[1,128], index: 8, kind: input, shape index: {}]
  %s9 = inlined_call_operand.hbm [shape: bf16[128,1024], index: 9, kind: input, shape index: {}]
  %s10 = inlined_call_operand.vmem [shape: f32[1,1024], index: 10, kind: input, shape index: {}]
  %s11 = inlined_call_operand.hbm [shape: bf16[1024,512], index: 11, kind: input, shape index: {}]
  %s12 = inlined_call_operand.hbm [shape: bf16[1024,512], index: 12, kind: input, shape index: {}]
  %s13 = inlined_call_operand.vmem [shape: f32[1,512], index: 13, kind: input, shape index: {}]
  %s14 = inlined_call_operand.hbm [shape: bf16[512,256], index: 14, kind: input, shape index: {}]
  %s15 = inlined_call_operand.vmem [shape: f32[1,256], index: 15, kind: input, shape index: {}]
  %s16 = inlined_call_operand.hbm [shape: bf16[256,128], index: 16, kind: input, shape index: {}]
  %s17 = inlined_call_operand.vmem [shape: f32[1,128], index: 17, kind: input, shape index: {}]
  %s18 = inlined_call_operand.hbm [shape: bf16[2,16,128], index: 18, kind: output, shape index: {}]
  %s19 = sld [smem:[#allocation0]]
  $region149: #{tpu_custom_call.1} parent=0
    _
  %s21 = ssub.s32 1, %s19
  %s22 = scalar_select 0, %s21, %s19
  $region1: #{tpu_custom_call.1} parent=0
    #allocation2 [shape = 'u8[2048]{0}', space=vmem, size = 0x800, scoped, tag = 'input window, operand 1, single buffered']
    #allocation3 [shape = 's32[2]{0}', space=sflag, size = 0x8, scoped, tag = 'scoped memory for tpu_custom_call.1']
    #allocation4 [shape = 's32[2]{0}', space=sflag, size = 0x8, scoped, tag = 'scoped memory for tpu_custom_call.1']
    #allocation5 [shape = 'u8[512]{0}', space=vmem, size = 0x400, scoped, tag = 'input window, operand 2, single buffered']
    #allocation6 [shape = 's32[1]{0}', space=sflag, size = 0x4, scoped, tag = 'scoped memory for tpu_custom_call.1']
    #allocation7 [shape = 'u8[512]{0}', space=vmem, size = 0x400, scoped, tag = 'input window, operand 4, single buffered']
    #allocation8 [shape = 'u8[16384]{0}', space=vmem, size = 0x4000, scoped, tag = 'input window, operand 5, single buffered']
    #allocation9 [shape = 's32[1]{0}', space=sflag, size = 0x4, scoped, tag = 'scoped memory for tpu_custom_call.1']
    #allocation10 [shape = 'u8[512]{0}', space=vmem, size = 0x400, scoped, tag = 'input window, operand 6, single buffered']
    #allocation11 [shape = 'u8[512]{0}', space=vmem, size = 0x400, scoped, tag = 'input window, operand 8, single buffered']
    #allocation12 [shape = 's32[1]{0}', space=sflag, size = 0x4, scoped, tag = 'scoped memory for tpu_custom_call.1']
    #allocation13 [shape = 'u8[262144]{0}', space=vmem, size = 0x40000, scoped, tag = 'input window, operand 9, single buffered']
    #allocation14 [shape = 'u8[1048576]{0}', space=vmem, size = 0x100000, scoped, tag = 'input window, operand 11, single buffered']
    #allocation15 [shape = 's32[1]{0}', space=sflag, size = 0x4, scoped, tag = 'scoped memory for tpu_custom_call.1']
    #allocation16 [shape = 'u8[1048576]{0}', space=vmem, size = 0x100000, scoped, tag = 'input window, operand 12, single buffered']
    #allocation17 [shape = 'u8[262144]{0}', space=vmem, size = 0x40000, scoped, tag = 'input window, operand 14, single buffered']
    #allocation18 [shape = 's32[1]{0}', space=sflag, size = 0x4, scoped, tag = 'scoped memory for tpu_custom_call.1']
    #allocation19 [shape = 'u8[65536]{0}', space=vmem, size = 0x10000, scoped, tag = 'input window, operand 16, single buffered']
    #allocation20 [shape = 'u8[8192]{0}', space=vmem, size = 0x2000, scoped, tag = 'output window, operand 0']
    %23 = vsyncpa [#allocation3], 0
    %24 = vsyncpa [#allocation6], 0
    %25 = vsyncpa [#allocation9], 0
    %26 = vsyncpa [#allocation12], 0
    %27 = vsyncpa [#allocation15], 0
    %28 = vsyncpa [#allocation18], 0
    %29 = vsyncpa [#allocation4], 0
    %s30 = scalar_lea.sflag [#allocation4], 1
    %31 = vsyncpa %s30, 0
    loop: start=0, step=1, limit=4
    $region2: #{tpu_custom_call.1} parent=1 // loop_pre_header
      _
    $region3: #{tpu_custom_call.1} parent=1 // loop_header
      %s33 = sphi 0, %s37
      %p34 = scmp.ge.s32.totalorder %s33, 4
      %s43 = sphi 0, %s45
      %s46 = sphi 0, %s43
      %s47 = sphi 0, %s46
      %s63 = sphi 0, %s47
      %s67 = sphi 0, %s67
      %s69 = sphi 0, %s67
      %s70 = sphi 0, %s69
      %s84 = sphi 0, %s70
      %s88 = sphi 0, %s88
      %s90 = sphi 0, %s88
      %s91 = sphi 0, %s90
      %s105 = sphi 0, %s91
      %s109 = sphi 0, %s109
      %s111 = sphi 0, %s109
      %s112 = sphi 0, %s111
      %s126 = sphi 0, %s112
      %s130 = sphi 0, %s130
      %s132 = sphi 0, %s130
      %s133 = sphi 0, %s132
      %s147 = sphi 0, %s133
      %s151 = sphi 0, %s151
      %s153 = sphi 0, %s151
      %s154 = sphi 0, %s153
      %s168 = sphi 0, %s154
      %s172 = sphi 0, %s172
      %s174 = sphi 0, %s172
      %s175 = sphi 0, %s174
      %s189 = sphi 0, %s175
      %s193 = sphi 0, %s193
      %s195 = sphi 0, %s193
      %s196 = sphi 0, %s195
      %s210 = sphi 0, %s196
      %s214 = sphi 0, %s214
      %s216 = sphi 0, %s214
      %s217 = sphi 0, %s216
      %s231 = sphi 0, %s217
      %s235 = sphi 0, %s235
      %s237 = sphi 0, %s235
      %s238 = sphi 0, %s237
      %s252 = sphi 0, %s238
      %s256 = sphi 0, %s256
      %s258 = sphi 0, %s256
      %s259 = sphi 0, %s258
      %s273 = sphi 0, %s259
      %s277 = sphi 0, %s277
      %s279 = sphi 0, %s277
      %s280 = sphi 0, %s279
      %s294 = sphi 0, %s280
      %s298 = sphi 0, %s298
      %s300 = sphi 0, %s298
      %s301 = sphi 0, %s300
      %s315 = sphi 0, %s301
      %s319 = sphi 0, %s319
      %s321 = sphi 0, %s319
      %s322 = sphi 0, %s321
      %s336 = sphi 0, %s322
      %s340 = sphi 0, %s340
      %s342 = sphi 0, %s340
      %s343 = sphi 0, %s342
      %s357 = sphi 0, %s343
      %s361 = sphi 0, %s361
      %s363 = sphi 0, %s361
      %s364 = sphi 0, %s363
      %s378 = sphi 0, %s364
      %s382 = sphi 0, %s382
      %s384 = sphi 0, %s382
      %s385 = sphi 0, %s384
      %s399 = sphi 0, %s385
      %s403 = sphi 0, %s403
      %s405 = sphi 0, %s403
      %s406 = sphi 0, %s405
      %s420 = sphi 0, %s406
      %s426 = sphi 0, %s428
      %s429 = sphi 0, %s426
      %s430 = sphi 0, %s429
      %s446 = sphi 0, %s430
    $region4: #{tpu_custom_call.1} parent=1 // loop_header_branch
      %36 = sbr.rel (%p34) target = $region8
    $region5: #{tpu_custom_call.1} parent=1 // loop_body
      %s38 = ssub.s32 %s33, 1
      %s39 = ssub.s32 %s33, 2
      %s40 = sadd.s32 %s33, 1
      %s41 = ssub.s32 %s33, %s40
      %p42 = scmp.eq.s32.totalorder %s41, 0
      %s44 = sadd.s32 %s43, 1
      %s45 = scalar_select %p42, %s43, %s44
      %p48 = pneg %p42
      %p49 = scmp.eq.s32.totalorder %s33, 1
      %p50 = por %p48, %p49
      %p51 = scmp.ne.s32.totalorder %s43, %s46
      %p52 = scmp.eq.s32.totalorder %s33, 0
      %p53 = por %p51, %p52
      %p54 = scmp.ne.s32.totalorder %s43, %s46
      %p55 = scmp.eq.s32.totalorder %s38, 1
      %p56 = por %p54, %p55
      %p57 = scmp.ne.s32.totalorder %s46, %s47
      %p58 = scmp.eq.s32.totalorder %s38, 0
      %p59 = por %p57, %p58
      %p60 = scmp.ne.s32.totalorder %s46, %s47
      %p61 = scmp.eq.s32.totalorder %s39, 1
      %p62 = por %p60, %p61
      %p64 = scmp.ne.s32.totalorder %s47, %s63
      %p65 = scmp.eq.s32.totalorder %s39, 0
      %p66 = por %p64, %p65
      %s68 = sadd.s32 %s67, 1
      %p71 = scmp.eq.s32.totalorder %s33, 1
      %p72 = scmp.ne.s32.totalorder %s67, %s69
      %p73 = scmp.eq.s32.totalorder %s33, 0
      %p74 = por %p72, %p73
      %p75 = scmp.ne.s32.totalorder %s67, %s69
      %p76 = scmp.eq.s32.totalorder %s38, 1
      %p77 = por %p75, %p76
      %p78 = scmp.ne.s32.totalorder %s69, %s70
      %p79 = scmp.eq.s32.totalorder %s38, 0
      %p80 = por %p78, %p79
      %p81 = scmp.ne.s32.totalorder %s69, %s70
      %p82 = scmp.eq.s32.totalorder %s39, 1
      %p83 = por %p81, %p82
      %p85 = scmp.ne.s32.totalorder %s70, %s84
      %p86 = scmp.eq.s32.totalorder %s39, 0
      %p87 = por %p85, %p86
      %s89 = sadd.s32 %s88, 1
      %p92 = scmp.eq.s32.totalorder %s33, 1
      %p93 = scmp.ne.s32.totalorder %s88, %s90
      %p94 = scmp.eq.s32.totalorder %s33, 0
      %p95 = por %p93, %p94
      %p96 = scmp.ne.s32.totalorder %s88, %s90
      %p97 = scmp.eq.s32.totalorder %s38, 1
      %p98 = por %p96, %p97
      %p99 = scmp.ne.s32.totalorder %s90, %s91
      %p100 = scmp.eq.s32.totalorder %s38, 0
      %p101 = por %p99, %p100
      %p102 = scmp.ne.s32.totalorder %s90, %s91
      %p103 = scmp.eq.s32.totalorder %s39, 1
      %p104 = por %p102, %p103
      %p106 = scmp.ne.s32.totalorder %s91, %s105
      %p107 = scmp.eq.s32.totalorder %s39, 0
      %p108 = por %p106, %p107
      %s110 = sadd.s32 %s109, 1
      %p113 = scmp.eq.s32.totalorder %s33, 1
      %p114 = scmp.ne.s32.totalorder %s109, %s111
      %p115 = scmp.eq.s32.totalorder %s33, 0
      %p116 = por %p114, %p115
      %p117 = scmp.ne.s32.totalorder %s109, %s111
      %p118 = scmp.eq.s32.totalorder %s38, 1
      %p119 = por %p117, %p118
      %p120 = scmp.ne.s32.totalorder %s111, %s112
      %p121 = scmp.eq.s32.totalorder %s38, 0
      %p122 = por %p120, %p121
      %p123 = scmp.ne.s32.totalorder %s111, %s112
      %p124 = scmp.eq.s32.totalorder %s39, 1
      %p125 = por %p123, %p124
      %p127 = scmp.ne.s32.totalorder %s112, %s126
      %p128 = scmp.eq.s32.totalorder %s39, 0
      %p129 = por %p127, %p128
      %s131 = sadd.s32 %s130, 1
      %p134 = scmp.eq.s32.totalorder %s33, 1
      %p135 = scmp.ne.s32.totalorder %s130, %s132
      %p136 = scmp.eq.s32.totalorder %s33, 0
      %p137 = por %p135, %p136
      %p138 = scmp.ne.s32.totalorder %s130, %s132
      %p139 = scmp.eq.s32.totalorder %s38, 1
      %p140 = por %p138, %p139
      %p141 = scmp.ne.s32.totalorder %s132, %s133
      %p142 = scmp.eq.s32.totalorder %s38, 0
      %p143 = por %p141, %p142
      %p144 = scmp.ne.s32.totalorder %s132, %s133
      %p145 = scmp.eq.s32.totalorder %s39, 1
      %p146 = por %p144, %p145
      %p148 = scmp.ne.s32.totalorder %s133, %s147
      %p149 = scmp.eq.s32.totalorder %s39, 0
      %p150 = por %p148, %p149
      %s152 = sadd.s32 %s151, 1
      %p155 = scmp.eq.s32.totalorder %s33, 1
      %p156 = scmp.ne.s32.totalorder %s151, %s153
      %p157 = scmp.eq.s32.totalorder %s33, 0
      %p158 = por %p156, %p157
      %p159 = scmp.ne.s32.totalorder %s151, %s153
      %p160 = scmp.eq.s32.totalorder %s38, 1
      %p161 = por %p159, %p160
      %p162 = scmp.ne.s32.totalorder %s153, %s154
      %p163 = scmp.eq.s32.totalorder %s38, 0
      %p164 = por %p162, %p163
      %p165 = scmp.ne.s32.totalorder %s153, %s154
      %p166 = scmp.eq.s32.totalorder %s39, 1
      %p167 = por %p165, %p166
      %p169 = scmp.ne.s32.totalorder %s154, %s168
      %p170 = scmp.eq.s32.totalorder %s39, 0
      %p171 = por %p169, %p170
      %s173 = sadd.s32 %s172, 1
      %p176 = scmp.eq.s32.totalorder %s33, 1
      %p177 = scmp.ne.s32.totalorder %s172, %s174
      %p178 = scmp.eq.s32.totalorder %s33, 0
      %p179 = por %p177, %p178
      %p180 = scmp.ne.s32.totalorder %s172, %s174
      %p181 = scmp.eq.s32.totalorder %s38, 1
      %p182 = por %p180, %p181
      %p183 = scmp.ne.s32.totalorder %s174, %s175
      %p184 = scmp.eq.s32.totalorder %s38, 0
      %p185 = por %p183, %p184
      %p186 = scmp.ne.s32.totalorder %s174, %s175
      %p187 = scmp.eq.s32.totalorder %s39, 1
      %p188 = por %p186, %p187
      %p190 = scmp.ne.s32.totalorder %s175, %s189
      %p191 = scmp.eq.s32.totalorder %s39, 0
      %p192 = por %p190, %p191
      %s194 = sadd.s32 %s193, 1
      %p197 = scmp.eq.s32.totalorder %s33, 1
      %p198 = scmp.ne.s32.totalorder %s193, %s195
      %p199 = scmp.eq.s32.totalorder %s33, 0
      %p200 = por %p198, %p199
      %p201 = scmp.ne.s32.totalorder %s193, %s195
      %p202 = scmp.eq.s32.totalorder %s38, 1
      %p203 = por %p201, %p202
      %p204 = scmp.ne.s32.totalorder %s195, %s196
      %p205 = scmp.eq.s32.totalorder %s38, 0
      %p206 = por %p204, %p205
      %p207 = scmp.ne.s32.totalorder %s195, %s196
      %p208 = scmp.eq.s32.totalorder %s39, 1
      %p209 = por %p207, %p208
      %p211 = scmp.ne.s32.totalorder %s196, %s210
      %p212 = scmp.eq.s32.totalorder %s39, 0
      %p213 = por %p211, %p212
      %s215 = sadd.s32 %s214, 1
      %p218 = scmp.eq.s32.totalorder %s33, 1
      %p219 = scmp.ne.s32.totalorder %s214, %s216
      %p220 = scmp.eq.s32.totalorder %s33, 0
      %p221 = por %p219, %p220
      %p222 = scmp.ne.s32.totalorder %s214, %s216
      %p223 = scmp.eq.s32.totalorder %s38, 1
      %p224 = por %p222, %p223
      %p225 = scmp.ne.s32.totalorder %s216, %s217
      %p226 = scmp.eq.s32.totalorder %s38, 0
      %p227 = por %p225, %p226
      %p228 = scmp.ne.s32.totalorder %s216, %s217
      %p229 = scmp.eq.s32.totalorder %s39, 1
      %p230 = por %p228, %p229
      %p232 = scmp.ne.s32.totalorder %s217, %s231
      %p233 = scmp.eq.s32.totalorder %s39, 0
      %p234 = por %p232, %p233
      %s236 = sadd.s32 %s235, 1
      %p239 = scmp.eq.s32.totalorder %s33, 1
      %p240 = scmp.ne.s32.totalorder %s235, %s237
      %p241 = scmp.eq.s32.totalorder %s33, 0
      %p242 = por %p240, %p241
      %p243 = scmp.ne.s32.totalorder %s235, %s237
      %p244 = scmp.eq.s32.totalorder %s38, 1
      %p245 = por %p243, %p244
      %p246 = scmp.ne.s32.totalorder %s237, %s238
      %p247 = scmp.eq.s32.totalorder %s38, 0
      %p248 = por %p246, %p247
      %p249 = scmp.ne.s32.totalorder %s237, %s238
      %p250 = scmp.eq.s32.totalorder %s39, 1
      %p251 = por %p249, %p250
      %p253 = scmp.ne.s32.totalorder %s238, %s252
      %p254 = scmp.eq.s32.totalorder %s39, 0
      %p255 = por %p253, %p254
      %s257 = sadd.s32 %s256, 1
      %p260 = scmp.eq.s32.totalorder %s33, 1
      %p261 = scmp.ne.s32.totalorder %s256, %s258
      %p262 = scmp.eq.s32.totalorder %s33, 0
      %p263 = por %p261, %p262
      %p264 = scmp.ne.s32.totalorder %s256, %s258
      %p265 = scmp.eq.s32.totalorder %s38, 1
      %p266 = por %p264, %p265
      %p267 = scmp.ne.s32.totalorder %s258, %s259
      %p268 = scmp.eq.s32.totalorder %s38, 0
      %p269 = por %p267, %p268
      %p270 = scmp.ne.s32.totalorder %s258, %s259
      %p271 = scmp.eq.s32.totalorder %s39, 1
      %p272 = por %p270, %p271
      %p274 = scmp.ne.s32.totalorder %s259, %s273
      %p275 = scmp.eq.s32.totalorder %s39, 0
      %p276 = por %p274, %p275
      %s278 = sadd.s32 %s277, 1
      %p281 = scmp.eq.s32.totalorder %s33, 1
      %p282 = scmp.ne.s32.totalorder %s277, %s279
      %p283 = scmp.eq.s32.totalorder %s33, 0
      %p284 = por %p282, %p283
      %p285 = scmp.ne.s32.totalorder %s277, %s279
      %p286 = scmp.eq.s32.totalorder %s38, 1
      %p287 = por %p285, %p286
      %p288 = scmp.ne.s32.totalorder %s279, %s280
      %p289 = scmp.eq.s32.totalorder %s38, 0
      %p290 = por %p288, %p289
      %p291 = scmp.ne.s32.totalorder %s279, %s280
      %p292 = scmp.eq.s32.totalorder %s39, 1
      %p293 = por %p291, %p292
      %p295 = scmp.ne.s32.totalorder %s280, %s294
      %p296 = scmp.eq.s32.totalorder %s39, 0
      %p297 = por %p295, %p296
      %s299 = sadd.s32 %s298, 1
      %p302 = scmp.eq.s32.totalorder %s33, 1
      %p303 = scmp.ne.s32.totalorder %s298, %s300
      %p304 = scmp.eq.s32.totalorder %s33, 0
      %p305 = por %p303, %p304
      %p306 = scmp.ne.s32.totalorder %s298, %s300
      %p307 = scmp.eq.s32.totalorder %s38, 1
      %p308 = por %p306, %p307
      %p309 = scmp.ne.s32.totalorder %s300, %s301
      %p310 = scmp.eq.s32.totalorder %s38, 0
      %p311 = por %p309, %p310
      %p312 = scmp.ne.s32.totalorder %s300, %s301
      %p313 = scmp.eq.s32.totalorder %s39, 1
      %p314 = por %p312, %p313
      %p316 = scmp.ne.s32.totalorder %s301, %s315
      %p317 = scmp.eq.s32.totalorder %s39, 0
      %p318 = por %p316, %p317
      %s320 = sadd.s32 %s319, 1
      %p323 = scmp.eq.s32.totalorder %s33, 1
      %p324 = scmp.ne.s32.totalorder %s319, %s321
      %p325 = scmp.eq.s32.totalorder %s33, 0
      %p326 = por %p324, %p325
      %p327 = scmp.ne.s32.totalorder %s319, %s321
      %p328 = scmp.eq.s32.totalorder %s38, 1
      %p329 = por %p327, %p328
      %p330 = scmp.ne.s32.totalorder %s321, %s322
      %p331 = scmp.eq.s32.totalorder %s38, 0
      %p332 = por %p330, %p331
      %p333 = scmp.ne.s32.totalorder %s321, %s322
      %p334 = scmp.eq.s32.totalorder %s39, 1
      %p335 = por %p333, %p334
      %p337 = scmp.ne.s32.totalorder %s322, %s336
      %p338 = scmp.eq.s32.totalorder %s39, 0
      %p339 = por %p337, %p338
      %s341 = sadd.s32 %s340, 1
      %p344 = scmp.eq.s32.totalorder %s33, 1
      %p345 = scmp.ne.s32.totalorder %s340, %s342
      %p346 = scmp.eq.s32.totalorder %s33, 0
      %p347 = por %p345, %p346
      %p348 = scmp.ne.s32.totalorder %s340, %s342
      %p349 = scmp.eq.s32.totalorder %s38, 1
      %p350 = por %p348, %p349
      %p351 = scmp.ne.s32.totalorder %s342, %s343
      %p352 = scmp.eq.s32.totalorder %s38, 0
      %p353 = por %p351, %p352
      %p354 = scmp.ne.s32.totalorder %s342, %s343
      %p355 = scmp.eq.s32.totalorder %s39, 1
      %p356 = por %p354, %p355
      %p358 = scmp.ne.s32.totalorder %s343, %s357
      %p359 = scmp.eq.s32.totalorder %s39, 0
      %p360 = por %p358, %p359
      %s362 = sadd.s32 %s361, 1
      %p365 = scmp.eq.s32.totalorder %s33, 1
      %p366 = scmp.ne.s32.totalorder %s361, %s363
      %p367 = scmp.eq.s32.totalorder %s33, 0
      %p368 = por %p366, %p367
      %p369 = scmp.ne.s32.totalorder %s361, %s363
      %p370 = scmp.eq.s32.totalorder %s38, 1
      %p371 = por %p369, %p370
      %p372 = scmp.ne.s32.totalorder %s363, %s364
      %p373 = scmp.eq.s32.totalorder %s38, 0
      %p374 = por %p372, %p373
      %p375 = scmp.ne.s32.totalorder %s363, %s364
      %p376 = scmp.eq.s32.totalorder %s39, 1
      %p377 = por %p375, %p376
      %p379 = scmp.ne.s32.totalorder %s364, %s378
      %p380 = scmp.eq.s32.totalorder %s39, 0
      %p381 = por %p379, %p380
      %s383 = sadd.s32 %s382, 1
      %p386 = scmp.eq.s32.totalorder %s33, 1
      %p387 = scmp.ne.s32.totalorder %s382, %s384
      %p388 = scmp.eq.s32.totalorder %s33, 0
      %p389 = por %p387, %p388
      %p390 = scmp.ne.s32.totalorder %s382, %s384
      %p391 = scmp.eq.s32.totalorder %s38, 1
      %p392 = por %p390, %p391
      %p393 = scmp.ne.s32.totalorder %s384, %s385
      %p394 = scmp.eq.s32.totalorder %s38, 0
      %p395 = por %p393, %p394
      %p396 = scmp.ne.s32.totalorder %s384, %s385
      %p397 = scmp.eq.s32.totalorder %s39, 1
      %p398 = por %p396, %p397
      %p400 = scmp.ne.s32.totalorder %s385, %s399
      %p401 = scmp.eq.s32.totalorder %s39, 0
      %p402 = por %p400, %p401
      %s404 = sadd.s32 %s403, 1
      %p407 = scmp.eq.s32.totalorder %s33, 1
      %p408 = scmp.ne.s32.totalorder %s403, %s405
      %p409 = scmp.eq.s32.totalorder %s33, 0
      %p410 = por %p408, %p409
      %p411 = scmp.ne.s32.totalorder %s403, %s405
      %p412 = scmp.eq.s32.totalorder %s38, 1
      %p413 = por %p411, %p412
      %p414 = scmp.ne.s32.totalorder %s405, %s406
      %p415 = scmp.eq.s32.totalorder %s38, 0
      %p416 = por %p414, %p415
      %p417 = scmp.ne.s32.totalorder %s405, %s406
      %p418 = scmp.eq.s32.totalorder %s39, 1
      %p419 = por %p417, %p418
      %p421 = scmp.ne.s32.totalorder %s406, %s420
      %p422 = scmp.eq.s32.totalorder %s39, 0
      %p423 = por %p421, %p422
      %s424 = ssub.s32 %s33, %s40
      %p425 = scmp.eq.s32.totalorder %s424, 0
      %s427 = sadd.s32 %s426, 1
      %s428 = scalar_select %p425, %s426, %s427
      %p431 = pneg %p425
      %p432 = scmp.eq.s32.totalorder %s33, 1
      %p433 = por %p431, %p432
      %p434 = scmp.ne.s32.totalorder %s426, %s429
      %p435 = scmp.eq.s32.totalorder %s33, 0
      %p436 = por %p434, %p435
      %p437 = scmp.ne.s32.totalorder %s426, %s429
      %p438 = scmp.eq.s32.totalorder %s38, 1
      %p439 = por %p437, %p438
      %p440 = scmp.ne.s32.totalorder %s429, %s430
      %p441 = scmp.eq.s32.totalorder %s38, 0
      %p442 = por %p440, %p441
      %p443 = scmp.ne.s32.totalorder %s429, %s430
      %p444 = scmp.eq.s32.totalorder %s39, 1
      %p445 = por %p443, %p444
      %p447 = scmp.ne.s32.totalorder %s430, %s446
      %p448 = scmp.eq.s32.totalorder %s39, 0
      %p449 = por %p447, %p448
      %p450 = scmp.le.s32.totalorder 1, %s33
      %p451 = scmp.lt.s32.totalorder %s33, 3
      %p452 = pnand %p450, %p451
      %p453 = pneg %p452
      // Predicated region
      $region9: #{tpu_custom_call.1} parent=5 // pred_check
        _
      $region10: #{tpu_custom_call.1} parent=5 // pred_check_branch
        %455 = sbr.rel (%p452) target = $region12
      $region11: #{tpu_custom_call.1} parent=5 // pred_region
        %s456 = ssub.s32 %s33, 1
        // Predicated region
        $region13: #{tpu_custom_call.1} parent=11 // pred_check
          %p457 = pneg %p80
        $region14: #{tpu_custom_call.1} parent=11 // pred_check_branch
          %459 = sbr.rel (%p457) target = $region16
        $region15: #{tpu_custom_call.1} parent=11 // pred_region
          %s461 = ssub.s32 64, 64
          %462 = vsyncadd [#allocation3], %s461
          %s464 = sshll.u32 [#allocation2], 4
          %s465 = int_to_ptr.vmem [resolvable:$true] %s464
          %467 = dma.hbm_to_vmem [thread:$0]  %s1, 64, %s465, [#allocation3]
        $region16: #{tpu_custom_call.1} parent=11 // pred_fallthru
          _
        // Predicated region
        $region17: #{tpu_custom_call.1} parent=11 // pred_check
          %p468 = pneg %p101
        $region18: #{tpu_custom_call.1} parent=11 // pred_check_branch
          %470 = sbr.rel (%p468) target = $region20
        $region19: #{tpu_custom_call.1} parent=11 // pred_region
          %s472 = ssub.s32 16, 16
          %473 = vsyncadd [#allocation6], %s472
          %s475 = sshll.u32 [#allocation5], 4
          %s476 = int_to_ptr.vmem [resolvable:$true] %s475
          %478 = dma.hbm_to_vmem [thread:$0]  %s2, 16, %s476, [#allocation6]
        $region20: #{tpu_custom_call.1} parent=11 // pred_fallthru
          _
        // Predicated region
        $region21: #{tpu_custom_call.1} parent=11 // pred_check
          %p479 = pneg %p122
        $region22: #{tpu_custom_call.1} parent=11 // pred_check_branch
          %481 = sbr.rel (%p479) target = $region24
        $region23: #{tpu_custom_call.1} parent=11 // pred_region
          _
        $region24: #{tpu_custom_call.1} parent=11 // pred_fallthru
          _
        // Predicated region
        $region25: #{tpu_custom_call.1} parent=11 // pred_check
          %p482 = pneg %p143
        $region26: #{tpu_custom_call.1} parent=11 // pred_check_branch
          %484 = sbr.rel (%p482) target = $region28
        $region27: #{tpu_custom_call.1} parent=11 // pred_region
          %s486 = ssub.s32 16, 16
          %487 = vsyncadd [#allocation6], %s486
          %s489 = sshll.u32 [#allocation7], 4
          %s490 = int_to_ptr.vmem [resolvable:$true] %s489
          %492 = dma.hbm_to_vmem [thread:$0]  %s4, 16, %s490, [#allocation6]
        $region28: #{tpu_custom_call.1} parent=11 // pred_fallthru
          _
        // Predicated region
        $region29: #{tpu_custom_call.1} parent=11 // pred_check
          %p493 = pneg %p164
        $region30: #{tpu_custom_call.1} parent=11 // pred_check_branch
          %495 = sbr.rel (%p493) target = $region32
        $region31: #{tpu_custom_call.1} parent=11 // pred_region
          %s497 = ssub.s32 512, 512
          %498 = vsyncadd [#allocation9], %s497
          %s499 = sshll.u32 [#allocation8], 4
          %s500 = int_to_ptr.vmem [resolvable:$true] %s499
          %505 = dma.hbm_to_vmem [thread:$0]  %s5, 512, %s500, [#allocation9], 64, 64, 4
        $region32: #{tpu_custom_call.1} parent=11 // pred_fallthru
          _
        // Predicated region
        $region33: #{tpu_custom_call.1} parent=11 // pred_check
          %p506 = pneg %p185
        $region34: #{tpu_custom_call.1} parent=11 // pred_check_branch
          %508 = sbr.rel (%p506) target = $region36
        $region35: #{tpu_custom_call.1} parent=11 // pred_region
          %s510 = ssub.s32 16, 16
          %511 = vsyncadd [#allocation9], %s510
          %s513 = sshll.u32 [#allocation10], 4
          %s514 = int_to_ptr.vmem [resolvable:$true] %s513
          %516 = dma.hbm_to_vmem [thread:$0]  %s6, 16, %s514, [#allocation9]
        $region36: #{tpu_custom_call.1} parent=11 // pred_fallthru
          _
        // Predicated region
        $region37: #{tpu_custom_call.1} parent=11 // pred_check
          %p517 = pneg %p206
        $region38: #{tpu_custom_call.1} parent=11 // pred_check_branch
          %519 = sbr.rel (%p517) target = $region40
        $region39: #{tpu_custom_call.1} parent=11 // pred_region
          _
        $region40: #{tpu_custom_call.1} parent=11 // pred_fallthru
          _
        // Predicated region
        $region41: #{tpu_custom_call.1} parent=11 // pred_check
          %p520 = pneg %p227
        $region42: #{tpu_custom_call.1} parent=11 // pred_check_branch
          %522 = sbr.rel (%p520) target = $region44
        $region43: #{tpu_custom_call.1} parent=11 // pred_region
          %s524 = ssub.s32 16, 16
          %525 = vsyncadd [#allocation12], %s524
          %s527 = sshll.u32 [#allocation11], 4
          %s528 = int_to_ptr.vmem [resolvable:$true] %s527
          %530 = dma.hbm_to_vmem [thread:$0]  %s8, 16, %s528, [#allocation12]
        $region44: #{tpu_custom_call.1} parent=11 // pred_fallthru
          _
        // Predicated region
        $region45: #{tpu_custom_call.1} parent=11 // pred_check
          %p531 = pneg %p248
        $region46: #{tpu_custom_call.1} parent=11 // pred_check_branch
          %533 = sbr.rel (%p531) target = $region48
        $region47: #{tpu_custom_call.1} parent=11 // pred_region
          %s535 = ssub.s32 8192, 8192
          %536 = vsyncadd [#allocation12], %s535
          %s537 = sshll.u32 [#allocation13], 4
          %s538 = int_to_ptr.vmem [resolvable:$true] %s537
          %543 = dma.hbm_to_vmem [thread:$0]  %s9, 8192, %s538, [#allocation12], 512, 512, 32
        $region48: #{tpu_custom_call.1} parent=11 // pred_fallthru
          _
        // Predicated region
        $region49: #{tpu_custom_call.1} parent=11 // pred_check
          %p544 = pneg %p269
        $region50: #{tpu_custom_call.1} parent=11 // pred_check_branch
          %546 = sbr.rel (%p544) target = $region52
        $region51: #{tpu_custom_call.1} parent=11 // pred_region
          _
        $region52: #{tpu_custom_call.1} parent=11 // pred_fallthru
          _
        // Predicated region
        $region53: #{tpu_custom_call.1} parent=11 // pred_check
          %p547 = pneg %p290
        $region54: #{tpu_custom_call.1} parent=11 // pred_check_branch
          %549 = sbr.rel (%p547) target = $region56
        $region55: #{tpu_custom_call.1} parent=11 // pred_region
          %s551 = ssub.s32 32768, 32768
          %552 = vsyncadd [#allocation15], %s551
          %s553 = sshll.u32 [#allocation14], 4
          %s554 = int_to_ptr.vmem [resolvable:$true] %s553
          %559 = dma.hbm_to_vmem [thread:$0]  %s11, 32768, %s554, [#allocation15], 256, 256, 16
        $region56: #{tpu_custom_call.1} parent=11 // pred_fallthru
          _
        // Predicated region
        $region57: #{tpu_custom_call.1} parent=11 // pred_check
          %p560 = pneg %p311
        $region58: #{tpu_custom_call.1} parent=11 // pred_check_branch
          %562 = sbr.rel (%p560) target = $region60
        $region59: #{tpu_custom_call.1} parent=11 // pred_region
          %s564 = ssub.s32 32768, 32768
          %565 = vsyncadd [#allocation15], %s564
          %s566 = sshll.u32 [#allocation16], 4
          %s567 = int_to_ptr.vmem [resolvable:$true] %s566
          %572 = dma.hbm_to_vmem [thread:$0]  %s12, 32768, %s567, [#allocation15], 256, 256, 16
        $region60: #{tpu_custom_call.1} parent=11 // pred_fallthru
          _
        // Predicated region
        $region61: #{tpu_custom_call.1} parent=11 // pred_check
          %p573 = pneg %p332
        $region62: #{tpu_custom_call.1} parent=11 // pred_check_branch
          %575 = sbr.rel (%p573) target = $region64
        $region63: #{tpu_custom_call.1} parent=11 // pred_region
          _
        $region64: #{tpu_custom_call.1} parent=11 // pred_fallthru
          _
        // Predicated region
        $region65: #{tpu_custom_call.1} parent=11 // pred_check
          %p576 = pneg %p353
        $region66: #{tpu_custom_call.1} parent=11 // pred_check_branch
          %578 = sbr.rel (%p576) target = $region68
        $region67: #{tpu_custom_call.1} parent=11 // pred_region
          %s580 = ssub.s32 8192, 8192
          %581 = vsyncadd [#allocation18], %s580
          %s582 = sshll.u32 [#allocation17], 4
          %s583 = int_to_ptr.vmem [resolvable:$true] %s582
          %588 = dma.hbm_to_vmem [thread:$0]  %s14, 8192, %s583, [#allocation18], 128, 128, 8
        $region68: #{tpu_custom_call.1} parent=11 // pred_fallthru
          _
        // Predicated region
        $region69: #{tpu_custom_call.1} parent=11 // pred_check
          %p589 = pneg %p374
        $region70: #{tpu_custom_call.1} parent=11 // pred_check_branch
          %591 = sbr.rel (%p589) target = $region72
        $region71: #{tpu_custom_call.1} parent=11 // pred_region
          _
        $region72: #{tpu_custom_call.1} parent=11 // pred_fallthru
          _
        // Predicated region
        $region73: #{tpu_custom_call.1} parent=11 // pred_check
          %p592 = pneg %p395
        $region74: #{tpu_custom_call.1} parent=11 // pred_check_branch
          %594 = sbr.rel (%p592) target = $region76
        $region75: #{tpu_custom_call.1} parent=11 // pred_region
          %s596 = ssub.s32 2048, 2048
          %597 = vsyncadd [#allocation18], %s596
          %s598 = sshll.u32 [#allocation19], 4
          %s599 = int_to_ptr.vmem [resolvable:$true] %s598
          %604 = dma.hbm_to_vmem [thread:$0]  %s16, 2048, %s599, [#allocation18], 64, 64, 4
        $region76: #{tpu_custom_call.1} parent=11 // pred_fallthru
          _
        // Predicated region
        $region77: #{tpu_custom_call.1} parent=11 // pred_check
          %p605 = pneg %p416
        $region78: #{tpu_custom_call.1} parent=11 // pred_check_branch
          %607 = sbr.rel (%p605) target = $region80
        $region79: #{tpu_custom_call.1} parent=11 // pred_region
          _
        $region80: #{tpu_custom_call.1} parent=11 // pred_fallthru
          _
      $region12: #{tpu_custom_call.1} parent=5 // pred_fallthru
        _
      %p608 = scmp.lt.s32.totalorder %s33, 2
      // Predicated region
      $region81: #{tpu_custom_call.1} parent=5 // pred_check
        %p609 = pneg %p608
      $region82: #{tpu_custom_call.1} parent=5 // pred_check_branch
        %611 = sbr.rel (%p609) target = $region84
      $region83: #{tpu_custom_call.1} parent=5 // pred_region
        // Predicated region
        $region85: #{tpu_custom_call.1} parent=83 // pred_check
          %p612 = pneg %p53
        $region86: #{tpu_custom_call.1} parent=83 // pred_check_branch
          %614 = sbr.rel (%p612) target = $region88
        $region87: #{tpu_custom_call.1} parent=83 // pred_region
          %p615 = scmp.lt.s32.totalorder %s33, 1
          %s616 = scalar_select %p615, %s33, 1
          %s617 = smul.addr %s616, 2
          %s618 = smul.addr %s617, 8
          %s619 = scalar_lea.vmem %s0, %s618
        $region88: #{tpu_custom_call.1} parent=83 // pred_fallthru
          _
      $region84: #{tpu_custom_call.1} parent=5 // pred_fallthru
        _
      %p620 = scmp.le.s32.totalorder 1, %s33
      %p621 = scmp.lt.s32.totalorder %s33, 3
      %p622 = pnand %p620, %p621
      %p623 = pneg %p622
      // Predicated region
      $region89: #{tpu_custom_call.1} parent=5 // pred_check
        _
      $region90: #{tpu_custom_call.1} parent=5 // pred_check_branch
        %625 = sbr.rel (%p622) target = $region92
      $region91: #{tpu_custom_call.1} parent=5 // pred_region
        %s626 = ssub.s32 %s33, 1
        // Predicated region
        $region93: #{tpu_custom_call.1} parent=91 // pred_check
          %p627 = pneg %p80
        $region94: #{tpu_custom_call.1} parent=91 // pred_check_branch
          %629 = sbr.rel (%p627) target = $region96
        $region95: #{tpu_custom_call.1} parent=91 // pred_region
          %630 = dma.done [#allocation3], 64
        $region96: #{tpu_custom_call.1} parent=91 // pred_fallthru
          _
        // Predicated region
        $region97: #{tpu_custom_call.1} parent=91 // pred_check
          %p631 = pneg %p101
        $region98: #{tpu_custom_call.1} parent=91 // pred_check_branch
          %633 = sbr.rel (%p631) target = $region100
        $region99: #{tpu_custom_call.1} parent=91 // pred_region
          %634 = dma.done [#allocation6], 16
        $region100: #{tpu_custom_call.1} parent=91 // pred_fallthru
          _
        // Predicated region
        $region101: #{tpu_custom_call.1} parent=91 // pred_check
          %p635 = pneg %p143
        $region102: #{tpu_custom_call.1} parent=91 // pred_check_branch
          %637 = sbr.rel (%p635) target = $region104
        $region103: #{tpu_custom_call.1} parent=91 // pred_region
          %638 = dma.done [#allocation6], 16
        $region104: #{tpu_custom_call.1} parent=91 // pred_fallthru
          _
        // Predicated region
        $region105: #{tpu_custom_call.1} parent=91 // pred_check
          %p639 = pneg %p164
        $region106: #{tpu_custom_call.1} parent=91 // pred_check_branch
          %641 = sbr.rel (%p639) target = $region108
        $region107: #{tpu_custom_call.1} parent=91 // pred_region
          %642 = dma.done [#allocation9], 512
        $region108: #{tpu_custom_call.1} parent=91 // pred_fallthru
          _
        // Predicated region
        $region109: #{tpu_custom_call.1} parent=91 // pred_check
          %p643 = pneg %p185
        $region110: #{tpu_custom_call.1} parent=91 // pred_check_branch
          %645 = sbr.rel (%p643) target = $region112
        $region111: #{tpu_custom_call.1} parent=91 // pred_region
          %646 = dma.done [#allocation9], 16
        $region112: #{tpu_custom_call.1} parent=91 // pred_fallthru
          _
        // Predicated region
        $region113: #{tpu_custom_call.1} parent=91 // pred_check
          %p647 = pneg %p227
        $region114: #{tpu_custom_call.1} parent=91 // pred_check_branch
          %649 = sbr.rel (%p647) target = $region116
        $region115: #{tpu_custom_call.1} parent=91 // pred_region
          %650 = dma.done [#allocation12], 16
        $region116: #{tpu_custom_call.1} parent=91 // pred_fallthru
          _
        // Predicated region
        $region117: #{tpu_custom_call.1} parent=91 // pred_check
          %p651 = pneg %p248
        $region118: #{tpu_custom_call.1} parent=91 // pred_check_branch
          %653 = sbr.rel (%p651) target = $region120
        $region119: #{tpu_custom_call.1} parent=91 // pred_region
          %654 = dma.done [#allocation12], 8192
        $region120: #{tpu_custom_call.1} parent=91 // pred_fallthru
          _
        // Predicated region
        $region121: #{tpu_custom_call.1} parent=91 // pred_check
          %p655 = pneg %p290
        $region122: #{tpu_custom_call.1} parent=91 // pred_check_branch
          %657 = sbr.rel (%p655) target = $region124
        $region123: #{tpu_custom_call.1} parent=91 // pred_region
          %658 = dma.done [#allocation15], 32768
        $region124: #{tpu_custom_call.1} parent=91 // pred_fallthru
          _
        // Predicated region
        $region125: #{tpu_custom_call.1} parent=91 // pred_check
          %p659 = pneg %p311
        $region126: #{tpu_custom_call.1} parent=91 // pred_check_branch
          %661 = sbr.rel (%p659) target = $region128
        $region127: #{tpu_custom_call.1} parent=91 // pred_region
          %662 = dma.done [#allocation15], 32768
        $region128: #{tpu_custom_call.1} parent=91 // pred_fallthru
          _
        // Predicated region
        $region129: #{tpu_custom_call.1} parent=91 // pred_check
          %p663 = pneg %p353
        $region130: #{tpu_custom_call.1} parent=91 // pred_check_branch
          %665 = sbr.rel (%p663) target = $region132
        $region131: #{tpu_custom_call.1} parent=91 // pred_region
          %666 = dma.done [#allocation18], 8192
        $region132: #{tpu_custom_call.1} parent=91 // pred_fallthru
          _
        // Predicated region
        $region133: #{tpu_custom_call.1} parent=91 // pred_check
          %p667 = pneg %p395
        $region134: #{tpu_custom_call.1} parent=91 // pred_check_branch
          %669 = sbr.rel (%p667) target = $region136
        $region135: #{tpu_custom_call.1} parent=91 // pred_region
          %670 = dma.done [#allocation18], 2048
        $region136: #{tpu_custom_call.1} parent=91 // pred_fallthru
          _
        %p671 = scmp.lt.s32.totalorder %s38, 1
        %s672 = scalar_select %p671, %s38, 1
        %s673 = smul.addr %s672, 2
        %s674 = smul.addr %s673, 8
        %s675 = scalar_lea.vmem %s0, %s674
        %p676 = pneg %p59
        %p677 = pneg %p56
        %p678 = pneg %p80
        %p679 = pneg %p77
        %p680 = pneg %p101
        %p681 = pneg %p98
        %p682 = pneg %p122
        %p683 = pneg %p119
        %p684 = pneg %p143
        %p685 = pneg %p140
        %p686 = pneg %p164
        %p687 = pneg %p161
        %p688 = pneg %p185
        %p689 = pneg %p182
        %p690 = pneg %p206
        %p691 = pneg %p203
        %p692 = pneg %p227
        %p693 = pneg %p224
        %p694 = pneg %p248
        %p695 = pneg %p245
        %p696 = pneg %p269
        %p697 = pneg %p266
        %p698 = pneg %p290
        %p699 = pneg %p287
        %p700 = pneg %p311
        %p701 = pneg %p308
        %p702 = pneg %p332
        %p703 = pneg %p329
        %p704 = pneg %p353
        %p705 = pneg %p350
        %p706 = pneg %p374
        %p707 = pneg %p371
        %p708 = pneg %p395
        %p709 = pneg %p392
        %p710 = pneg %p416
        %p711 = pneg %p413
        %p712 = pneg %p442
        %p713 = pneg %p439
        %s714 = sand.u32 %s429, 1
        %s715 = scalar_lea.sflag [#allocation4], %s714
        %s716 = sand.u32 %s429, 1
        %s717 = smul.addr %s716, 8
        %s718 = scalar_lea.vmem [#allocation20], %s717
        %p719 = scmp.lt.s32.totalorder %s38, 1
        %s720 = scalar_select %p719, %s38, 1
        %s721 = smul.addr %s720, 2
        %s722 = smul.addr %s721, 8
        %s723 = scalar_lea.vmem %s0, %s722
        %v725 = vld [vmem:[%s723] sm:$0xff]
        %v726 = vld [vmem:[%s723 + $0x8] sm:$0xff]
        %v727 = vld [vmem:[#allocation2] sm:$0x1]
        %729 = vset.pattern.permute.xlu0 0
        %730 = vperm.xlu0 %729, %v725
        %v731 = vpop.permute.xlu0 %730
        %734 = vset.pattern.permute.xlu0 0
        %735 = vperm.xlu0 %734, %v726
        %v736 = vpop.permute.xlu0 %735
        %v738 = vlaneseq
        %v739 = vshrl.u32 %v738, 7
        %v740 = vsub.s32 0, %v739
        %v741 = vrot.slane %v727, %v740
        %v742 = vmul.f32 %v731, %v741
        %v743 = vmul.f32 %v736, %v741
        %v744 = vld [vmem:[#allocation2 + $0x1] sm:$0x1]
        %745 = vset.pattern.permute.xlu0 1
        %746 = vperm.xlu0 %745, %v725
        %v747 = vpop.permute.xlu0 %746
        %749 = vset.pattern.permute.xlu0 1
        %750 = vperm.xlu0 %749, %v726
        %v751 = vpop.permute.xlu0 %750
        %v753 = vlaneseq
        %v754 = vshrl.u32 %v753, 7
        %v755 = vsub.s32 0, %v754
        %v756 = vrot.slane %v744, %v755
        %v757 = vmul.f32 %v747, %v756
        %v758 = vmul.f32 %v751, %v756
        %v759 = vadd.f32 %v742, %v757
        %v760 = vadd.f32 %v743, %v758
        %v761 = vld [vmem:[#allocation2 + $0x2] sm:$0x1]
        %762 = vset.pattern.permute.xlu0 2
        %763 = vperm.xlu0 %762, %v725
        %v764 = vpop.permute.xlu0 %763
        %766 = vset.pattern.permute.xlu0 2
        %767 = vperm.xlu0 %766, %v726
        %v768 = vpop.permute.xlu0 %767
        %v770 = vlaneseq
        %v771 = vshrl.u32 %v770, 7
        %v772 = vsub.s32 0, %v771
        %v773 = vrot.slane %v761, %v772
        %v774 = vmul.f32 %v764, %v773
        %v775 = vmul.f32 %v768, %v773
        %v776 = vadd.f32 %v759, %v774
        %v777 = vadd.f32 %v760, %v775
        %v778 = vld [vmem:[#allocation5] sm:$0x1]
        %v780 = vlaneseq
        %v781 = vshrl.u32 %v780, 7
        %v782 = vsub.s32 0, %v781
        %v783 = vrot.slane %v778, %v782
        %v785 = vadd.f32 %v776, %v783
        %v786 = vadd.f32 %v777, %v783
        %v787 = vmax.f32 %v785, 0.0
        %v788 = vmax.f32 %v786, 0.0
        %v789 = vpack.c.bf16 %v788, %v787
        %v790 = vld [vmem:[%s3] sm:$0xf]
        %v791 = vld [vmem:[%s3 + $0x4] sm:$0xf]
        %v792 = vld [vmem:[%s3 + $0x8] sm:$0xf]
        %v793 = vld [vmem:[%s3 + $0xc] sm:$0xf]
        %v794 = vld [vmem:[%s3 + $0x10] sm:$0xf]
        %v795 = vld [vmem:[%s3 + $0x14] sm:$0xf]
        %v796 = vld [vmem:[%s3 + $0x18] sm:$0xf]
        %v797 = vld [vmem:[%s3 + $0x1c] sm:$0xf]
        %v798 = vld [vmem:[#allocation7] sm:$0x1]
        %v800 = vlaneseq
        %v801 = vshrl.u32 %v800, 7
        %v802 = vsub.s32 0, %v801
        %v803 = vrot.slane %v798, %v802
        %v813 = vunpack.c.l.b16 %v790
        %v814 = vunpack.c.l.b16 %v791
        %v815 = vunpack.c.l.b16 %v792
        %v816 = vunpack.c.l.b16 %v793
        %v817 = vunpack.c.l.b16 %v794
        %v818 = vunpack.c.l.b16 %v795
        %v819 = vunpack.c.l.b16 %v796
        %v820 = vunpack.c.l.b16 %v797
        %v821 = vpack.c.b16 %v814, %v813
        %v822 = vpack.c.b16 %v816, %v815
        %v823 = vpack.c.b16 %v818, %v817
        %v824 = vpack.c.b16 %v820, %v819
        %vm829 = vcmask 523264
        %v831 = vsel %vm829, %v789, 0
        %833 = vmatprep.subr.bf16.mxu0 0
        %834 = vmatpush1.bf16.msra.mxu0 %v821
        %835 = vmatprep.subr.bf16.mxu0 0
        %836 = vmatpush1.bf16.msra.mxu0 %v822
        %837 = vmatprep.subr.bf16.mxu0 0
        %838 = vmatpush1.bf16.msra.mxu0 %v823
        %839 = vmatprep.subr.bf16.mxu0 0
        %840 = vmatpush1.bf16.msra.mxu0 %v824
        %841 = vmatprep.subr.bf16.mxu0 0
        %842 = vmatpush1.bf16.msra.mxu0 0
        %843 = vmatprep.subr.bf16.mxu0 0
        %844 = vmatpush1.bf16.msra.mxu0 0
        %845 = vmatprep.subr.bf16.mxu0 0
        %846 = vmatpush1.bf16.msra.mxu0 0
        %847 = vmatprep.subr.bf16.mxu0 0
        %848 = vmatpush1.bf16.msra.mxu0 0
        %849 = vmatprep.subr.bf16.mxu0 0
        %850 = vmatpush1.bf16.msra.mxu0 0
        %851 = vmatprep.subr.bf16.mxu0 0
        %852 = vmatpush1.bf16.msra.mxu0 0
        %853 = vmatprep.subr.bf16.mxu0 0
        %854 = vmatpush1.bf16.msra.mxu0 0
        %855 = vmatprep.subr.bf16.mxu0 0
        %856 = vmatpush1.bf16.msra.mxu0 0
        %857 = vmatprep.subr.bf16.mxu0 0
        %858 = vmatpush1.bf16.msra.mxu0 0
        %859 = vmatprep.subr.bf16.mxu0 0
        %860 = vmatpush1.bf16.msra.mxu0 0
        %861 = vmatprep.subr.bf16.mxu0 0
        %862 = vmatpush1.bf16.msra.mxu0 0
        %863 = vmatprep.subr.bf16.mxu0 0
        %864 = vmatpush1.bf16.msra.mxu0 0
        %865 = vmatprep.mubr.bf16.mxu0 0
        %866 = vmatmul.mubr.bf16.gmra.mrb[0].mxu0 %v831
        %v867 = vpop.f32.mrb[0].mxu0
        %v868 = vadd.f32 %v803, %v867
        %v869 = vpop.f32.mrb[0].mxu0
        %v870 = vpop.f32.mrb[0].mxu0
        %v871 = vadd.f32 %v803, %v870
        %v872 = vpop.f32.mrb[0].mxu0
        %873 = vdwg.mxu0
        %v874 = vmax.f32 %v868, 0.0
        %v875 = vmax.f32 %v871, 0.0
        %v876 = vpack.c.bf16 %v875, %v874
        %v877 = vld [vmem:[#allocation8] sm:$0xf]
        %v878 = vld [vmem:[#allocation8 + $0x4] sm:$0xf]
        %v879 = vld [vmem:[#allocation8 + $0x8] sm:$0xf]
        %v880 = vld [vmem:[#allocation8 + $0xc] sm:$0xf]
        %v881 = vld [vmem:[#allocation8 + $0x10] sm:$0xf]
        %v882 = vld [vmem:[#allocation8 + $0x14] sm:$0xf]
        %v883 = vld [vmem:[#allocation8 + $0x18] sm:$0xf]
        %v884 = vld [vmem:[#allocation8 + $0x1c] sm:$0xf]
        %v885 = vld [vmem:[#allocation10] sm:$0x1]
        %v887 = vlaneseq
        %v888 = vshrl.u32 %v887, 7
        %v889 = vsub.s32 0, %v888
        %v890 = vrot.slane %v885, %v889
        %v900 = vunpack.c.l.b16 %v877
        %v901 = vunpack.c.l.b16 %v878
        %v902 = vunpack.c.l.b16 %v879
        %v903 = vunpack.c.l.b16 %v880
        %v904 = vunpack.c.l.b16 %v881
        %v905 = vunpack.c.l.b16 %v882
        %v906 = vunpack.c.l.b16 %v883
        %v907 = vunpack.c.l.b16 %v884
        %v908 = vpack.c.b16 %v901, %v900
        %v909 = vpack.c.b16 %v903, %v902
        %v910 = vpack.c.b16 %v905, %v904
        %v911 = vpack.c.b16 %v907, %v906
        %v917 = vsel %vm829, %v876, 0
        %919 = vmatprep.subr.bf16.mxu0 0
        %920 = vmatpush1.bf16.msra.mxu0 %v908
        %921 = vmatprep.subr.bf16.mxu0 0
        %922 = vmatpush1.bf16.msra.mxu0 %v909
        %923 = vmatprep.subr.bf16.mxu0 0
        %924 = vmatpush1.bf16.msra.mxu0 %v910
        %925 = vmatprep.subr.bf16.mxu0 0
        %926 = vmatpush1.bf16.msra.mxu0 %v911
        %927 = vmatprep.subr.bf16.mxu0 0
        %928 = vmatpush1.bf16.msra.mxu0 0
        %929 = vmatprep.subr.bf16.mxu0 0
        %930 = vmatpush1.bf16.msra.mxu0 0
        %931 = vmatprep.subr.bf16.mxu0 0
        %932 = vmatpush1.bf16.msra.mxu0 0
        %933 = vmatprep.subr.bf16.mxu0 0
        %934 = vmatpush1.bf16.msra.mxu0 0
        %935 = vmatprep.subr.bf16.mxu0 0
        %936 = vmatpush1.bf16.msra.mxu0 0
        %937 = vmatprep.subr.bf16.mxu0 0
        %938 = vmatpush1.bf16.msra.mxu0 0
        %939 = vmatprep.subr.bf16.mxu0 0
        %940 = vmatpush1.bf16.msra.mxu0 0
        %941 = vmatprep.subr.bf16.mxu0 0
        %942 = vmatpush1.bf16.msra.mxu0 0
        %943 = vmatprep.subr.bf16.mxu0 0
        %944 = vmatpush1.bf16.msra.mxu0 0
        %945 = vmatprep.subr.bf16.mxu0 0
        %946 = vmatpush1.bf16.msra.mxu0 0
        %947 = vmatprep.subr.bf16.mxu0 0
        %948 = vmatpush1.bf16.msra.mxu0 0
        %949 = vmatprep.subr.bf16.mxu0 0
        %950 = vmatpush1.bf16.msra.mxu0 0
        %951 = vmatprep.mubr.bf16.mxu0 0
        %952 = vmatmul.mubr.bf16.gmra.mrb[0].mxu0 %v917
        %v953 = vpop.f32.mrb[0].mxu0
        %v954 = vadd.f32 %v890, %v953
        %v955 = vpop.f32.mrb[0].mxu0
        %v956 = vpop.f32.mrb[0].mxu0
        %v957 = vadd.f32 %v890, %v956
        %v958 = vpop.f32.mrb[0].mxu0
        %959 = vdwg.mxu0
        %v960 = vmax.f32 %v954, 0.0
        %v961 = vmax.f32 %v957, 0.0
        %v962 = vpack.c.bf16 %v961, %v960
        %v963 = vld [vmem:[%s7] sm:$0xf]
        %v964 = vld [vmem:[%s7 + $0x4] sm:$0xf]
        %v965 = vld [vmem:[%s7 + $0x8] sm:$0xf]
        %v966 = vld [vmem:[%s7 + $0xc] sm:$0xf]
        %v967 = vld [vmem:[%s7 + $0x10] sm:$0xf]
        %v968 = vld [vmem:[%s7 + $0x14] sm:$0xf]
        %v969 = vld [vmem:[%s7 + $0x18] sm:$0xf]
        %v970 = vld [vmem:[%s7 + $0x1c] sm:$0xf]
        %v971 = vld [vmem:[#allocation11] sm:$0x1]
        %v973 = vlaneseq
        %v974 = vshrl.u32 %v973, 7
        %v975 = vsub.s32 0, %v974
        %v976 = vrot.slane %v971, %v975
        %v986 = vunpack.c.l.b16 %v963
        %v987 = vunpack.c.l.b16 %v964
        %v988 = vunpack.c.l.b16 %v965
        %v989 = vunpack.c.l.b16 %v966
        %v990 = vunpack.c.l.b16 %v967
        %v991 = vunpack.c.l.b16 %v968
        %v992 = vunpack.c.l.b16 %v969
        %v993 = vunpack.c.l.b16 %v970
        %v994 = vpack.c.b16 %v987, %v986
        %v995 = vpack.c.b16 %v989, %v988
        %v996 = vpack.c.b16 %v991, %v990
        %v997 = vpack.c.b16 %v993, %v992
        %v1003 = vsel %vm829, %v962, 0
        %1005 = vmatprep.subr.bf16.mxu0 0
        %1006 = vmatpush1.bf16.msra.mxu0 %v994
        %1007 = vmatprep.subr.bf16.mxu0 0
        %1008 = vmatpush1.bf16.msra.mxu0 %v995
        %1009 = vmatprep.subr.bf16.mxu0 0
        %1010 = vmatpush1.bf16.msra.mxu0 %v996
        %1011 = vmatprep.subr.bf16.mxu0 0
        %1012 = vmatpush1.bf16.msra.mxu0 %v997
        %1013 = vmatprep.subr.bf16.mxu0 0
        %1014 = vmatpush1.bf16.msra.mxu0 0
        %1015 = vmatprep.subr.bf16.mxu0 0
        %1016 = vmatpush1.bf16.msra.mxu0 0
        %1017 = vmatprep.subr.bf16.mxu0 0
        %1018 = vmatpush1.bf16.msra.mxu0 0
        %1019 = vmatprep.subr.bf16.mxu0 0
        %1020 = vmatpush1.bf16.msra.mxu0 0
        %1021 = vmatprep.subr.bf16.mxu0 0
        %1022 = vmatpush1.bf16.msra.mxu0 0
        %1023 = vmatprep.subr.bf16.mxu0 0
        %1024 = vmatpush1.bf16.msra.mxu0 0
        %1025 = vmatprep.subr.bf16.mxu0 0
        %1026 = vmatpush1.bf16.msra.mxu0 0
        %1027 = vmatprep.subr.bf16.mxu0 0
        %1028 = vmatpush1.bf16.msra.mxu0 0
        %1029 = vmatprep.subr.bf16.mxu0 0
        %1030 = vmatpush1.bf16.msra.mxu0 0
        %1031 = vmatprep.subr.bf16.mxu0 0
        %1032 = vmatpush1.bf16.msra.mxu0 0
        %1033 = vmatprep.subr.bf16.mxu0 0
        %1034 = vmatpush1.bf16.msra.mxu0 0
        %1035 = vmatprep.subr.bf16.mxu0 0
        %1036 = vmatpush1.bf16.msra.mxu0 0
        %1037 = vmatprep.mubr.bf16.mxu0 0
        %1038 = vmatmul.mubr.bf16.gmra.mrb[0].mxu0 %v1003
        %v1039 = vpop.f32.mrb[0].mxu0
        %v1040 = vadd.f32 %v976, %v1039
        %v1041 = vpop.f32.mrb[0].mxu0
        %v1042 = vpop.f32.mrb[0].mxu0
        %v1043 = vadd.f32 %v976, %v1042
        %v1044 = vpop.f32.mrb[0].mxu0
        %1045 = vdwg.mxu0
        %v1046 = vmax.f32 %v1040, 0.0
        %v1047 = vmax.f32 %v1043, 0.0
        %v1048 = vpack.c.bf16 %v1047, %v1046
        %v1049 = vld [vmem:[#allocation13] sm:$0xff]
        %v1050 = vld [vmem:[#allocation13 + $0x8] sm:$0xff]
        %v1051 = vld [vmem:[#allocation13 + $0x10] sm:$0xff]
        %v1052 = vld [vmem:[#allocation13 + $0x18] sm:$0xff]
        %v1053 = vld [vmem:[#allocation13 + $0x20] sm:$0xff]
        %v1054 = vld [vmem:[#allocation13 + $0x28] sm:$0xff]
        %v1055 = vld [vmem:[#allocation13 + $0x30] sm:$0xff]
        %v1056 = vld [vmem:[#allocation13 + $0x38] sm:$0xff]
        %v1057 = vld [vmem:[#allocation13 + $0x40] sm:$0xff]
        %v1058 = vld [vmem:[#allocation13 + $0x48] sm:$0xff]
        %v1059 = vld [vmem:[#allocation13 + $0x50] sm:$0xff]
        %v1060 = vld [vmem:[#allocation13 + $0x58] sm:$0xff]
        %v1061 = vld [vmem:[#allocation13 + $0x60] sm:$0xff]
        %v1062 = vld [vmem:[#allocation13 + $0x68] sm:$0xff]
        %v1063 = vld [vmem:[#allocation13 + $0x70] sm:$0xff]
        %v1064 = vld [vmem:[#allocation13 + $0x78] sm:$0xff]
        %v1065 = vld [vmem:[#allocation13 + $0x80] sm:$0xff]
        %v1066 = vld [vmem:[#allocation13 + $0x88] sm:$0xff]
        %v1067 = vld [vmem:[#allocation13 + $0x90] sm:$0xff]
        %v1068 = vld [vmem:[#allocation13 + $0x98] sm:$0xff]
        %v1069 = vld [vmem:[#allocation13 + $0xa0] sm:$0xff]
        %v1070 = vld [vmem:[#allocation13 + $0xa8] sm:$0xff]
        %v1071 = vld [vmem:[#allocation13 + $0xb0] sm:$0xff]
        %v1072 = vld [vmem:[#allocation13 + $0xb8] sm:$0xff]
        %v1073 = vld [vmem:[#allocation13 + $0xc0] sm:$0xff]
        %v1074 = vld [vmem:[#allocation13 + $0xc8] sm:$0xff]
        %v1075 = vld [vmem:[#allocation13 + $0xd0] sm:$0xff]
        %v1076 = vld [vmem:[#allocation13 + $0xd8] sm:$0xff]
        %v1077 = vld [vmem:[#allocation13 + $0xe0] sm:$0xff]
        %v1078 = vld [vmem:[#allocation13 + $0xe8] sm:$0xff]
        %v1079 = vld [vmem:[#allocation13 + $0xf0] sm:$0xff]
        %v1080 = vld [vmem:[#allocation13 + $0xf8] sm:$0xff]
        %v1081 = vld [vmem:[#allocation13 + $0x100] sm:$0xff]
        %v1082 = vld [vmem:[#allocation13 + $0x108] sm:$0xff]
        %v1083 = vld [vmem:[#allocation13 + $0x110] sm:$0xff]
        %v1084 = vld [vmem:[#allocation13 + $0x118] sm:$0xff]
        %v1085 = vld [vmem:[#allocation13 + $0x120] sm:$0xff]
        %v1086 = vld [vmem:[#allocation13 + $0x128] sm:$0xff]
        %v1087 = vld [vmem:[#allocation13 + $0x130] sm:$0xff]
        %v1088 = vld [vmem:[#allocation13 + $0x138] sm:$0xff]
        %v1089 = vld [vmem:[#allocation13 + $0x140] sm:$0xff]
        %v1090 = vld [vmem:[#allocation13 + $0x148] sm:$0xff]
        %v1091 = vld [vmem:[#allocation13 + $0x150] sm:$0xff]
        %v1092 = vld [vmem:[#allocation13 + $0x158] sm:$0xff]
        %v1093 = vld [vmem:[#allocation13 + $0x160] sm:$0xff]
        %v1094 = vld [vmem:[#allocation13 + $0x168] sm:$0xff]
        %v1095 = vld [vmem:[#allocation13 + $0x170] sm:$0xff]
        %v1096 = vld [vmem:[#allocation13 + $0x178] sm:$0xff]
        %v1097 = vld [vmem:[#allocation13 + $0x180] sm:$0xff]
        %v1098 = vld [vmem:[#allocation13 + $0x188] sm:$0xff]
        %v1099 = vld [vmem:[#allocation13 + $0x190] sm:$0xff]
        %v1100 = vld [vmem:[#allocation13 + $0x198] sm:$0xff]
        %v1101 = vld [vmem:[#allocation13 + $0x1a0] sm:$0xff]
        %v1102 = vld [vmem:[#allocation13 + $0x1a8] sm:$0xff]
        %v1103 = vld [vmem:[#allocation13 + $0x1b0] sm:$0xff]
        %v1104 = vld [vmem:[#allocation13 + $0x1b8] sm:$0xff]
        %v1105 = vld [vmem:[#allocation13 + $0x1c0] sm:$0xff]
        %v1106 = vld [vmem:[#allocation13 + $0x1c8] sm:$0xff]
        %v1107 = vld [vmem:[#allocation13 + $0x1d0] sm:$0xff]
        %v1108 = vld [vmem:[#allocation13 + $0x1d8] sm:$0xff]
        %v1109 = vld [vmem:[#allocation13 + $0x1e0] sm:$0xff]
        %v1110 = vld [vmem:[#allocation13 + $0x1e8] sm:$0xff]
        %v1111 = vld [vmem:[#allocation13 + $0x1f0] sm:$0xff]
        %v1112 = vld [vmem:[#allocation13 + $0x1f8] sm:$0xff]
        %v1113 = vld [vmem:[%s10] sm:$0xff]
        %v1115 = vlaneseq
        %v1116 = vshrl.u32 %v1115, 7
        %v1117 = vsub.s32 0, %v1116
        %v1118 = vrot.slane %v1113, %v1117
        %v1119 = vlaneseq
        %v1120 = vshrl.u32 %v1119, 7
        %v1121 = vsub.s32 1, %v1120
        %v1122 = vrot.slane %v1113, %v1121
        %v1123 = vlaneseq
        %v1124 = vshrl.u32 %v1123, 7
        %v1125 = vsub.s32 2, %v1124
        %v1126 = vrot.slane %v1113, %v1125
        %v1127 = vlaneseq
        %v1128 = vshrl.u32 %v1127, 7
        %v1129 = vsub.s32 3, %v1128
        %v1130 = vrot.slane %v1113, %v1129
        %v1131 = vlaneseq
        %v1132 = vshrl.u32 %v1131, 7
        %v1133 = vsub.s32 4, %v1132
        %v1134 = vrot.slane %v1113, %v1133
        %v1135 = vlaneseq
        %v1136 = vshrl.u32 %v1135, 7
        %v1137 = vsub.s32 5, %v1136
        %v1138 = vrot.slane %v1113, %v1137
        %v1139 = vlaneseq
        %v1140 = vshrl.u32 %v1139, 7
        %v1141 = vsub.s32 6, %v1140
        %v1142 = vrot.slane %v1113, %v1141
        %v1143 = vlaneseq
        %v1144 = vshrl.u32 %v1143, 7
        %v1145 = vsub.s32 7, %v1144
        %v1146 = vrot.slane %v1113, %v1145
        %v1219 = vunpack.c.l.b16 %v1049
        %v1220 = vunpack.c.h.b16 %v1049
        %v1221 = vunpack.c.l.b16 %v1050
        %v1222 = vunpack.c.h.b16 %v1050
        %v1223 = vunpack.c.l.b16 %v1051
        %v1224 = vunpack.c.h.b16 %v1051
        %v1225 = vunpack.c.l.b16 %v1052
        %v1226 = vunpack.c.h.b16 %v1052
        %v1227 = vunpack.c.l.b16 %v1053
        %v1228 = vunpack.c.h.b16 %v1053
        %v1229 = vunpack.c.l.b16 %v1054
        %v1230 = vunpack.c.h.b16 %v1054
        %v1231 = vunpack.c.l.b16 %v1055
        %v1232 = vunpack.c.h.b16 %v1055
        %v1233 = vunpack.c.l.b16 %v1056
        %v1234 = vunpack.c.h.b16 %v1056
        %v1235 = vunpack.c.l.b16 %v1057
        %v1236 = vunpack.c.h.b16 %v1057
        %v1237 = vunpack.c.l.b16 %v1058
        %v1238 = vunpack.c.h.b16 %v1058
        %v1239 = vunpack.c.l.b16 %v1059
        %v1240 = vunpack.c.h.b16 %v1059
        %v1241 = vunpack.c.l.b16 %v1060
        %v1242 = vunpack.c.h.b16 %v1060
        %v1243 = vunpack.c.l.b16 %v1061
        %v1244 = vunpack.c.h.b16 %v1061
        %v1245 = vunpack.c.l.b16 %v1062
        %v1246 = vunpack.c.h.b16 %v1062
        %v1247 = vunpack.c.l.b16 %v1063
        %v1248 = vunpack.c.h.b16 %v1063
        %v1249 = vunpack.c.l.b16 %v1064
        %v1250 = vunpack.c.h.b16 %v1064
        %v1251 = vunpack.c.l.b16 %v1065
        %v1252 = vunpack.c.h.b16 %v1065
        %v1253 = vunpack.c.l.b16 %v1066
        %v1254 = vunpack.c.h.b16 %v1066
        %v1255 = vunpack.c.l.b16 %v1067
        %v1256 = vunpack.c.h.b16 %v1067
        %v1257 = vunpack.c.l.b16 %v1068
        %v1258 = vunpack.c.h.b16 %v1068
        %v1259 = vunpack.c.l.b16 %v1069
        %v1260 = vunpack.c.h.b16 %v1069
        %v1261 = vunpack.c.l.b16 %v1070
        %v1262 = vunpack.c.h.b16 %v1070
        %v1263 = vunpack.c.l.b16 %v1071
        %v1264 = vunpack.c.h.b16 %v1071
        %v1265 = vunpack.c.l.b16 %v1072
        %v1266 = vunpack.c.h.b16 %v1072
        %v1267 = vunpack.c.l.b16 %v1073
        %v1268 = vunpack.c.h.b16 %v1073
        %v1269 = vunpack.c.l.b16 %v1074
        %v1270 = vunpack.c.h.b16 %v1074
        %v1271 = vunpack.c.l.b16 %v1075
        %v1272 = vunpack.c.h.b16 %v1075
        %v1273 = vunpack.c.l.b16 %v1076
        %v1274 = vunpack.c.h.b16 %v1076
        %v1275 = vunpack.c.l.b16 %v1077
        %v1276 = vunpack.c.h.b16 %v1077
        %v1277 = vunpack.c.l.b16 %v1078
        %v1278 = vunpack.c.h.b16 %v1078
        %v1279 = vunpack.c.l.b16 %v1079
        %v1280 = vunpack.c.h.b16 %v1079
        %v1281 = vunpack.c.l.b16 %v1080
        %v1282 = vunpack.c.h.b16 %v1080
        %v1283 = vunpack.c.l.b16 %v1081
        %v1284 = vunpack.c.h.b16 %v1081
        %v1285 = vunpack.c.l.b16 %v1082
        %v1286 = vunpack.c.h.b16 %v1082
        %v1287 = vunpack.c.l.b16 %v1083
        %v1288 = vunpack.c.h.b16 %v1083
        %v1289 = vunpack.c.l.b16 %v1084
        %v1290 = vunpack.c.h.b16 %v1084
        %v1291 = vunpack.c.l.b16 %v1085
        %v1292 = vunpack.c.h.b16 %v1085
        %v1293 = vunpack.c.l.b16 %v1086
        %v1294 = vunpack.c.h.b16 %v1086
        %v1295 = vunpack.c.l.b16 %v1087
        %v1296 = vunpack.c.h.b16 %v1087
        %v1297 = vunpack.c.l.b16 %v1088
        %v1298 = vunpack.c.h.b16 %v1088
        %v1299 = vunpack.c.l.b16 %v1089
        %v1300 = vunpack.c.h.b16 %v1089
        %v1301 = vunpack.c.l.b16 %v1090
        %v1302 = vunpack.c.h.b16 %v1090
        %v1303 = vunpack.c.l.b16 %v1091
        %v1304 = vunpack.c.h.b16 %v1091
        %v1305 = vunpack.c.l.b16 %v1092
        %v1306 = vunpack.c.h.b16 %v1092
        %v1307 = vunpack.c.l.b16 %v1093
        %v1308 = vunpack.c.h.b16 %v1093
        %v1309 = vunpack.c.l.b16 %v1094
        %v1310 = vunpack.c.h.b16 %v1094
        %v1311 = vunpack.c.l.b16 %v1095
        %v1312 = vunpack.c.h.b16 %v1095
        %v1313 = vunpack.c.l.b16 %v1096
        %v1314 = vunpack.c.h.b16 %v1096
        %v1315 = vunpack.c.l.b16 %v1097
        %v1316 = vunpack.c.h.b16 %v1097
        %v1317 = vunpack.c.l.b16 %v1098
        %v1318 = vunpack.c.h.b16 %v1098
        %v1319 = vunpack.c.l.b16 %v1099
        %v1320 = vunpack.c.h.b16 %v1099
        %v1321 = vunpack.c.l.b16 %v1100
        %v1322 = vunpack.c.h.b16 %v1100
        %v1323 = vunpack.c.l.b16 %v1101
        %v1324 = vunpack.c.h.b16 %v1101
        %v1325 = vunpack.c.l.b16 %v1102
        %v1326 = vunpack.c.h.b16 %v1102
        %v1327 = vunpack.c.l.b16 %v1103
        %v1328 = vunpack.c.h.b16 %v1103
        %v1329 = vunpack.c.l.b16 %v1104
        %v1330 = vunpack.c.h.b16 %v1104
        %v1331 = vunpack.c.l.b16 %v1105
        %v1332 = vunpack.c.h.b16 %v1105
        %v1333 = vunpack.c.l.b16 %v1106
        %v1334 = vunpack.c.h.b16 %v1106
        %v1335 = vunpack.c.l.b16 %v1107
        %v1336 = vunpack.c.h.b16 %v1107
        %v1337 = vunpack.c.l.b16 %v1108
        %v1338 = vunpack.c.h.b16 %v1108
        %v1339 = vunpack.c.l.b16 %v1109
        %v1340 = vunpack.c.h.b16 %v1109
        %v1341 = vunpack.c.l.b16 %v1110
        %v1342 = vunpack.c.h.b16 %v1110
        %v1343 = vunpack.c.l.b16 %v1111
        %v1344 = vunpack.c.h.b16 %v1111
        %v1345 = vunpack.c.l.b16 %v1112
        %v1346 = vunpack.c.h.b16 %v1112
        %v1347 = vpack.c.b16 %v1227, %v1219
        %v1348 = vpack.c.b16 %v1228, %v1220
        %v1349 = vpack.c.b16 %v1229, %v1221
        %v1350 = vpack.c.b16 %v1230, %v1222
        %v1351 = vpack.c.b16 %v1231, %v1223
        %v1352 = vpack.c.b16 %v1232, %v1224
        %v1353 = vpack.c.b16 %v1233, %v1225
        %v1354 = vpack.c.b16 %v1234, %v1226
        %v1355 = vpack.c.b16 %v1243, %v1235
        %v1356 = vpack.c.b16 %v1244, %v1236
        %v1357 = vpack.c.b16 %v1245, %v1237
        %v1358 = vpack.c.b16 %v1246, %v1238
        %v1359 = vpack.c.b16 %v1247, %v1239
        %v1360 = vpack.c.b16 %v1248, %v1240
        %v1361 = vpack.c.b16 %v1249, %v1241
        %v1362 = vpack.c.b16 %v1250, %v1242
        %v1363 = vpack.c.b16 %v1259, %v1251
        %v1364 = vpack.c.b16 %v1260, %v1252
        %v1365 = vpack.c.b16 %v1261, %v1253
        %v1366 = vpack.c.b16 %v1262, %v1254
        %v1367 = vpack.c.b16 %v1263, %v1255
        %v1368 = vpack.c.b16 %v1264, %v1256
        %v1369 = vpack.c.b16 %v1265, %v1257
        %v1370 = vpack.c.b16 %v1266, %v1258
        %v1371 = vpack.c.b16 %v1275, %v1267
        %v1372 = vpack.c.b16 %v1276, %v1268
        %v1373 = vpack.c.b16 %v1277, %v1269
        %v1374 = vpack.c.b16 %v1278, %v1270
        %v1375 = vpack.c.b16 %v1279, %v1271
        %v1376 = vpack.c.b16 %v1280, %v1272
        %v1377 = vpack.c.b16 %v1281, %v1273
        %v1378 = vpack.c.b16 %v1282, %v1274
        %v1379 = vpack.c.b16 %v1291, %v1283
        %v1380 = vpack.c.b16 %v1292, %v1284
        %v1381 = vpack.c.b16 %v1293, %v1285
        %v1382 = vpack.c.b16 %v1294, %v1286
        %v1383 = vpack.c.b16 %v1295, %v1287
        %v1384 = vpack.c.b16 %v1296, %v1288
        %v1385 = vpack.c.b16 %v1297, %v1289
        %v1386 = vpack.c.b16 %v1298, %v1290
        %v1387 = vpack.c.b16 %v1307, %v1299
        %v1388 = vpack.c.b16 %v1308, %v1300
        %v1389 = vpack.c.b16 %v1309, %v1301
        %v1390 = vpack.c.b16 %v1310, %v1302
        %v1391 = vpack.c.b16 %v1311, %v1303
        %v1392 = vpack.c.b16 %v1312, %v1304
        %v1393 = vpack.c.b16 %v1313, %v1305
        %v1394 = vpack.c.b16 %v1314, %v1306
        %v1395 = vpack.c.b16 %v1323, %v1315
        %v1396 = vpack.c.b16 %v1324, %v1316
        %v1397 = vpack.c.b16 %v1325, %v1317
        %v1398 = vpack.c.b16 %v1326, %v1318
        %v1399 = vpack.c.b16 %v1327, %v1319
        %v1400 = vpack.c.b16 %v1328, %v1320
        %v1401 = vpack.c.b16 %v1329, %v1321
        %v1402 = vpack.c.b16 %v1330, %v1322
        %v1403 = vpack.c.b16 %v1339, %v1331
        %v1404 = vpack.c.b16 %v1340, %v1332
        %v1405 = vpack.c.b16 %v1341, %v1333
        %v1406 = vpack.c.b16 %v1342, %v1334
        %v1407 = vpack.c.b16 %v1343, %v1335
        %v1408 = vpack.c.b16 %v1344, %v1336
        %v1409 = vpack.c.b16 %v1345, %v1337
        %v1410 = vpack.c.b16 %v1346, %v1338
        %1475 = vmatprep.subr.bf16.mxu0 %v1348
        %1476 = vmatpush1.bf16.msra.mxu0 %v1347
        %1477 = vmatprep.subr.bf16.mxu0 %v1356
        %1478 = vmatpush1.bf16.msra.mxu0 %v1355
        %1479 = vmatprep.subr.bf16.mxu0 %v1364
        %1480 = vmatpush1.bf16.msra.mxu0 %v1363
        %1481 = vmatprep.subr.bf16.mxu0 %v1372
        %1482 = vmatpush1.bf16.msra.mxu0 %v1371
        %1483 = vmatprep.subr.bf16.mxu0 %v1380
        %1484 = vmatpush1.bf16.msra.mxu0 %v1379
        %1485 = vmatprep.subr.bf16.mxu0 %v1388
        %1486 = vmatpush1.bf16.msra.mxu0 %v1387
        %1487 = vmatprep.subr.bf16.mxu0 %v1396
        %1488 = vmatpush1.bf16.msra.mxu0 %v1395
        %1489 = vmatprep.subr.bf16.mxu0 %v1404
        %1490 = vmatpush1.bf16.msra.mxu0 %v1403
        %1491 = vmatprep.subr.bf16.mxu0 0
        %1492 = vmatpush1.bf16.msra.mxu0 0
        %1493 = vmatprep.subr.bf16.mxu0 0
        %1494 = vmatpush1.bf16.msra.mxu0 0
        %1495 = vmatprep.subr.bf16.mxu0 0
        %1496 = vmatpush1.bf16.msra.mxu0 0
        %1497 = vmatprep.subr.bf16.mxu0 0
        %1498 = vmatpush1.bf16.msra.mxu0 0
        %1499 = vmatprep.subr.bf16.mxu0 0
        %1500 = vmatpush1.bf16.msra.mxu0 0
        %1501 = vmatprep.subr.bf16.mxu0 0
        %1502 = vmatpush1.bf16.msra.mxu0 0
        %1503 = vmatprep.subr.bf16.mxu0 0
        %1504 = vmatpush1.bf16.msra.mxu0 0
        %1505 = vmatprep.subr.bf16.mxu0 0
        %1506 = vmatpush1.bf16.msra.mxu0 0
        %1507 = vmatprep.mubr.bf16.mxu0 0
        %1508 = vmatmul.mubr.bf16.gmra.mrb[0].mxu0 %v1048
        %v1509 = vpop.f32.mrb[0].mxu0
        %v1510 = vadd.f32 %v1118, %v1509
        %v1511 = vpop.f32.mrb[0].mxu0
        %v1512 = vadd.f32 %v1122, %v1511
        %v1513 = vpop.f32.mrb[0].mxu0
        %v1514 = vadd.f32 %v1118, %v1513
        %v1515 = vpop.f32.mrb[0].mxu0
        %v1516 = vadd.f32 %v1122, %v1515
        %1517 = vdwg.mxu0
        %1518 = vmatprep.subr.bf16.mxu0 %v1350
        %1519 = vmatpush1.bf16.msra.mxu0 %v1349
        %1520 = vmatprep.subr.bf16.mxu0 %v1358
        %1521 = vmatpush1.bf16.msra.mxu0 %v1357
        %1522 = vmatprep.subr.bf16.mxu0 %v1366
        %1523 = vmatpush1.bf16.msra.mxu0 %v1365
        %1524 = vmatprep.subr.bf16.mxu0 %v1374
        %1525 = vmatpush1.bf16.msra.mxu0 %v1373
        %1526 = vmatprep.subr.bf16.mxu0 %v1382
        %1527 = vmatpush1.bf16.msra.mxu0 %v1381
        %1528 = vmatprep.subr.bf16.mxu0 %v1390
        %1529 = vmatpush1.bf16.msra.mxu0 %v1389
        %1530 = vmatprep.subr.bf16.mxu0 %v1398
        %1531 = vmatpush1.bf16.msra.mxu0 %v1397
        %1532 = vmatprep.subr.bf16.mxu0 %v1406
        %1533 = vmatpush1.bf16.msra.mxu0 %v1405
        %1534 = vmatprep.subr.bf16.mxu0 0
        %1535 = vmatpush1.bf16.msra.mxu0 0
        %1536 = vmatprep.subr.bf16.mxu0 0
        %1537 = vmatpush1.bf16.msra.mxu0 0
        %1538 = vmatprep.subr.bf16.mxu0 0
        %1539 = vmatpush1.bf16.msra.mxu0 0
        %1540 = vmatprep.subr.bf16.mxu0 0
        %1541 = vmatpush1.bf16.msra.mxu0 0
        %1542 = vmatprep.subr.bf16.mxu0 0
        %1543 = vmatpush1.bf16.msra.mxu0 0
        %1544 = vmatprep.subr.bf16.mxu0 0
        %1545 = vmatpush1.bf16.msra.mxu0 0
        %1546 = vmatprep.subr.bf16.mxu0 0
        %1547 = vmatpush1.bf16.msra.mxu0 0
        %1548 = vmatprep.subr.bf16.mxu0 0
        %1549 = vmatpush1.bf16.msra.mxu0 0
        %1550 = vmatprep.mubr.bf16.mxu0 0
        %1551 = vmatmul.mubr.bf16.gmra.mrb[0].mxu0 %v1048
        %v1552 = vpop.f32.mrb[0].mxu0
        %v1553 = vadd.f32 %v1126, %v1552
        %v1554 = vpop.f32.mrb[0].mxu0
        %v1555 = vadd.f32 %v1130, %v1554
        %v1556 = vpop.f32.mrb[0].mxu0
        %v1557 = vadd.f32 %v1126, %v1556
        %v1558 = vpop.f32.mrb[0].mxu0
        %v1559 = vadd.f32 %v1130, %v1558
        %1560 = vdwg.mxu0
        %1561 = vmatprep.subr.bf16.mxu0 %v1352
        %1562 = vmatpush1.bf16.msra.mxu0 %v1351
        %1563 = vmatprep.subr.bf16.mxu0 %v1360
        %1564 = vmatpush1.bf16.msra.mxu0 %v1359
        %1565 = vmatprep.subr.bf16.mxu0 %v1368
        %1566 = vmatpush1.bf16.msra.mxu0 %v1367
        %1567 = vmatprep.subr.bf16.mxu0 %v1376
        %1568 = vmatpush1.bf16.msra.mxu0 %v1375
        %1569 = vmatprep.subr.bf16.mxu0 %v1384
        %1570 = vmatpush1.bf16.msra.mxu0 %v1383
        %1571 = vmatprep.subr.bf16.mxu0 %v1392
        %1572 = vmatpush1.bf16.msra.mxu0 %v1391
        %1573 = vmatprep.subr.bf16.mxu0 %v1400
        %1574 = vmatpush1.bf16.msra.mxu0 %v1399
        %1575 = vmatprep.subr.bf16.mxu0 %v1408
        %1576 = vmatpush1.bf16.msra.mxu0 %v1407
        %1577 = vmatprep.subr.bf16.mxu0 0
        %1578 = vmatpush1.bf16.msra.mxu0 0
        %1579 = vmatprep.subr.bf16.mxu0 0
        %1580 = vmatpush1.bf16.msra.mxu0 0
        %1581 = vmatprep.subr.bf16.mxu0 0
        %1582 = vmatpush1.bf16.msra.mxu0 0
        %1583 = vmatprep.subr.bf16.mxu0 0
        %1584 = vmatpush1.bf16.msra.mxu0 0
        %1585 = vmatprep.subr.bf16.mxu0 0
        %1586 = vmatpush1.bf16.msra.mxu0 0
        %1587 = vmatprep.subr.bf16.mxu0 0
        %1588 = vmatpush1.bf16.msra.mxu0 0
        %1589 = vmatprep.subr.bf16.mxu0 0
        %1590 = vmatpush1.bf16.msra.mxu0 0
        %1591 = vmatprep.subr.bf16.mxu0 0
        %1592 = vmatpush1.bf16.msra.mxu0 0
        %1593 = vmatprep.mubr.bf16.mxu0 0
        %1594 = vmatmul.mubr.bf16.gmra.mrb[0].mxu0 %v1048
        %v1595 = vpop.f32.mrb[0].mxu0
        %v1596 = vadd.f32 %v1134, %v1595
        %v1597 = vpop.f32.mrb[0].mxu0
        %v1598 = vadd.f32 %v1138, %v1597
        %v1599 = vpop.f32.mrb[0].mxu0
        %v1600 = vadd.f32 %v1134, %v1599
        %v1601 = vpop.f32.mrb[0].mxu0
        %v1602 = vadd.f32 %v1138, %v1601
        %1603 = vdwg.mxu0
        %1604 = vmatprep.subr.bf16.mxu0 %v1354
        %1605 = vmatpush1.bf16.msra.mxu0 %v1353
        %1606 = vmatprep.subr.bf16.mxu0 %v1362
        %1607 = vmatpush1.bf16.msra.mxu0 %v1361
        %1608 = vmatprep.subr.bf16.mxu0 %v1370
        %1609 = vmatpush1.bf16.msra.mxu0 %v1369
        %1610 = vmatprep.subr.bf16.mxu0 %v1378
        %1611 = vmatpush1.bf16.msra.mxu0 %v1377
        %1612 = vmatprep.subr.bf16.mxu0 %v1386
        %1613 = vmatpush1.bf16.msra.mxu0 %v1385
        %1614 = vmatprep.subr.bf16.mxu0 %v1394
        %1615 = vmatpush1.bf16.msra.mxu0 %v1393
        %1616 = vmatprep.subr.bf16.mxu0 %v1402
        %1617 = vmatpush1.bf16.msra.mxu0 %v1401
        %1618 = vmatprep.subr.bf16.mxu0 %v1410
        %1619 = vmatpush1.bf16.msra.mxu0 %v1409
        %1620 = vmatprep.subr.bf16.mxu0 0
        %1621 = vmatpush1.bf16.msra.mxu0 0
        %1622 = vmatprep.subr.bf16.mxu0 0
        %1623 = vmatpush1.bf16.msra.mxu0 0
        %1624 = vmatprep.subr.bf16.mxu0 0
        %1625 = vmatpush1.bf16.msra.mxu0 0
        %1626 = vmatprep.subr.bf16.mxu0 0
        %1627 = vmatpush1.bf16.msra.mxu0 0
        %1628 = vmatprep.subr.bf16.mxu0 0
        %1629 = vmatpush1.bf16.msra.mxu0 0
        %1630 = vmatprep.subr.bf16.mxu0 0
        %1631 = vmatpush1.bf16.msra.mxu0 0
        %1632 = vmatprep.subr.bf16.mxu0 0
        %1633 = vmatpush1.bf16.msra.mxu0 0
        %1634 = vmatprep.subr.bf16.mxu0 0
        %1635 = vmatpush1.bf16.msra.mxu0 0
        %1636 = vmatprep.mubr.bf16.mxu0 0
        %1637 = vmatmul.mubr.bf16.gmra.mrb[0].mxu0 %v1048
        %v1638 = vpop.f32.mrb[0].mxu0
        %v1639 = vadd.f32 %v1142, %v1638
        %v1640 = vpop.f32.mrb[0].mxu0
        %v1641 = vadd.f32 %v1146, %v1640
        %v1642 = vpop.f32.mrb[0].mxu0
        %v1643 = vadd.f32 %v1142, %v1642
        %v1644 = vpop.f32.mrb[0].mxu0
        %v1645 = vadd.f32 %v1146, %v1644
        %1646 = vdwg.mxu0
        %v1647 = vmax.f32 %v1510, 0.0
        %v1648 = vmax.f32 %v1512, 0.0
        %v1649 = vmax.f32 %v1553, 0.0
        %v1650 = vmax.f32 %v1555, 0.0
        %v1651 = vmax.f32 %v1596, 0.0
        %v1652 = vmax.f32 %v1598, 0.0
        %v1653 = vmax.f32 %v1639, 0.0
        %v1654 = vmax.f32 %v1641, 0.0
        %v1655 = vmax.f32 %v1514, 0.0
        %v1656 = vmax.f32 %v1516, 0.0
        %v1657 = vmax.f32 %v1557, 0.0
        %v1658 = vmax.f32 %v1559, 0.0
        %v1659 = vmax.f32 %v1600, 0.0
        %v1660 = vmax.f32 %v1602, 0.0
        %v1661 = vmax.f32 %v1643, 0.0
        %v1662 = vmax.f32 %v1645, 0.0
        %v1663 = vpack.c.bf16 %v1655, %v1647
        %v1664 = vpack.c.bf16 %v1656, %v1648
        %v1665 = vpack.c.bf16 %v1657, %v1649
        %v1666 = vpack.c.bf16 %v1658, %v1650
        %v1667 = vpack.c.bf16 %v1659, %v1651
        %v1668 = vpack.c.bf16 %v1660, %v1652
        %v1669 = vpack.c.bf16 %v1661, %v1653
        %v1670 = vpack.c.bf16 %v1662, %v1654
        %v1671 = vunpack.i.l.bf16 %v1663
        %v1672 = vunpack.i.h.bf16 %v1663
        %v1673 = vmax.f32 %v1671, %v1672
        %v1674 = vrot.slane %v1673, 4
        %v1675 = vmax.f32 %v1673, %v1674
        %v1676 = vrot.slane %v1675, 2
        %v1677 = vmax.f32 %v1675, %v1676
        %v1678 = vrot.slane %v1677, 1
        %v1679 = vmax.f32 %v1677, %v1678
        %v1680 = vpack.i.bf16 %v1679, %v1679
        %v1681 = vunpack.i.l.bf16 %v1664
        %v1682 = vunpack.i.h.bf16 %v1664
        %v1683 = vmax.f32 %v1681, %v1682
        %v1684 = vrot.slane %v1683, 4
        %v1685 = vmax.f32 %v1683, %v1684
        %v1686 = vrot.slane %v1685, 2
        %v1687 = vmax.f32 %v1685, %v1686
        %v1688 = vrot.slane %v1687, 1
        %v1689 = vmax.f32 %v1687, %v1688
        %v1690 = vpack.i.bf16 %v1689, %v1689
        %v1691 = vunpack.i.l.bf16 %v1665
        %v1692 = vunpack.i.h.bf16 %v1665
        %v1693 = vmax.f32 %v1691, %v1692
        %v1694 = vrot.slane %v1693, 4
        %v1695 = vmax.f32 %v1693, %v1694
        %v1696 = vrot.slane %v1695, 2
        %v1697 = vmax.f32 %v1695, %v1696
        %v1698 = vrot.slane %v1697, 1
        %v1699 = vmax.f32 %v1697, %v1698
        %v1700 = vpack.i.bf16 %v1699, %v1699
        %v1701 = vunpack.i.l.bf16 %v1666
        %v1702 = vunpack.i.h.bf16 %v1666
        %v1703 = vmax.f32 %v1701, %v1702
        %v1704 = vrot.slane %v1703, 4
        %v1705 = vmax.f32 %v1703, %v1704
        %v1706 = vrot.slane %v1705, 2
        %v1707 = vmax.f32 %v1705, %v1706
        %v1708 = vrot.slane %v1707, 1
        %v1709 = vmax.f32 %v1707, %v1708
        %v1710 = vpack.i.bf16 %v1709, %v1709
        %v1711 = vunpack.i.l.bf16 %v1667
        %v1712 = vunpack.i.h.bf16 %v1667
        %v1713 = vmax.f32 %v1711, %v1712
        %v1714 = vrot.slane %v1713, 4
        %v1715 = vmax.f32 %v1713, %v1714
        %v1716 = vrot.slane %v1715, 2
        %v1717 = vmax.f32 %v1715, %v1716
        %v1718 = vrot.slane %v1717, 1
        %v1719 = vmax.f32 %v1717, %v1718
        %v1720 = vpack.i.bf16 %v1719, %v1719
        %v1721 = vunpack.i.l.bf16 %v1668
        %v1722 = vunpack.i.h.bf16 %v1668
        %v1723 = vmax.f32 %v1721, %v1722
        %v1724 = vrot.slane %v1723, 4
        %v1725 = vmax.f32 %v1723, %v1724
        %v1726 = vrot.slane %v1725, 2
        %v1727 = vmax.f32 %v1725, %v1726
        %v1728 = vrot.slane %v1727, 1
        %v1729 = vmax.f32 %v1727, %v1728
        %v1730 = vpack.i.bf16 %v1729, %v1729
        %v1731 = vunpack.i.l.bf16 %v1669
        %v1732 = vunpack.i.h.bf16 %v1669
        %v1733 = vmax.f32 %v1731, %v1732
        %v1734 = vrot.slane %v1733, 4
        %v1735 = vmax.f32 %v1733, %v1734
        %v1736 = vrot.slane %v1735, 2
        %v1737 = vmax.f32 %v1735, %v1736
        %v1738 = vrot.slane %v1737, 1
        %v1739 = vmax.f32 %v1737, %v1738
        %v1740 = vpack.i.bf16 %v1739, %v1739
        %v1741 = vunpack.i.l.bf16 %v1670
        %v1742 = vunpack.i.h.bf16 %v1670
        %v1743 = vmax.f32 %v1741, %v1742
        %v1744 = vrot.slane %v1743, 4
        %v1745 = vmax.f32 %v1743, %v1744
        %v1746 = vrot.slane %v1745, 2
        %v1747 = vmax.f32 %v1745, %v1746
        %v1748 = vrot.slane %v1747, 1
        %v1749 = vmax.f32 %v1747, %v1748
        %v1750 = vpack.i.bf16 %v1749, %v1749
        %v1751 = vld [vmem:[#allocation16] sm:$0xff]
        %v1752 = vld [vmem:[#allocation16 + $0x8] sm:$0xff]
        %v1753 = vld [vmem:[#allocation16 + $0x10] sm:$0xff]
        %v1754 = vld [vmem:[#allocation16 + $0x18] sm:$0xff]
        %v1755 = vld [vmem:[#allocation16 + $0x20] sm:$0xff]
        %v1756 = vld [vmem:[#allocation16 + $0x28] sm:$0xff]
        %v1757 = vld [vmem:[#allocation16 + $0x30] sm:$0xff]
        %v1758 = vld [vmem:[#allocation16 + $0x38] sm:$0xff]
        %v1759 = vld [vmem:[#allocation16 + $0x40] sm:$0xff]
        %v1760 = vld [vmem:[#allocation16 + $0x48] sm:$0xff]
        %v1761 = vld [vmem:[#allocation16 + $0x50] sm:$0xff]
        %v1762 = vld [vmem:[#allocation16 + $0x58] sm:$0xff]
        %v1763 = vld [vmem:[#allocation16 + $0x60] sm:$0xff]
        %v1764 = vld [vmem:[#allocation16 + $0x68] sm:$0xff]
        %v1765 = vld [vmem:[#allocation16 + $0x70] sm:$0xff]
        %v1766 = vld [vmem:[#allocation16 + $0x78] sm:$0xff]
        %v1767 = vld [vmem:[#allocation16 + $0x80] sm:$0xff]
        %v1768 = vld [vmem:[#allocation16 + $0x88] sm:$0xff]
        %v1769 = vld [vmem:[#allocation16 + $0x90] sm:$0xff]
        %v1770 = vld [vmem:[#allocation16 + $0x98] sm:$0xff]
        %v1771 = vld [vmem:[#allocation16 + $0xa0] sm:$0xff]
        %v1772 = vld [vmem:[#allocation16 + $0xa8] sm:$0xff]
        %v1773 = vld [vmem:[#allocation16 + $0xb0] sm:$0xff]
        %v1774 = vld [vmem:[#allocation16 + $0xb8] sm:$0xff]
        %v1775 = vld [vmem:[#allocation16 + $0xc0] sm:$0xff]
        %v1776 = vld [vmem:[#allocation16 + $0xc8] sm:$0xff]
        %v1777 = vld [vmem:[#allocation16 + $0xd0] sm:$0xff]
        %v1778 = vld [vmem:[#allocation16 + $0xd8] sm:$0xff]
        %v1779 = vld [vmem:[#allocation16 + $0xe0] sm:$0xff]
        %v1780 = vld [vmem:[#allocation16 + $0xe8] sm:$0xff]
        %v1781 = vld [vmem:[#allocation16 + $0xf0] sm:$0xff]
        %v1782 = vld [vmem:[#allocation16 + $0xf8] sm:$0xff]
        %v1783 = vld [vmem:[#allocation16 + $0x100] sm:$0xff]
        %v1784 = vld [vmem:[#allocation16 + $0x108] sm:$0xff]
        %v1785 = vld [vmem:[#allocation16 + $0x110] sm:$0xff]
        %v1786 = vld [vmem:[#allocation16 + $0x118] sm:$0xff]
        %v1787 = vld [vmem:[#allocation16 + $0x120] sm:$0xff]
        %v1788 = vld [vmem:[#allocation16 + $0x128] sm:$0xff]
        %v1789 = vld [vmem:[#allocation16 + $0x130] sm:$0xff]
        %v1790 = vld [vmem:[#allocation16 + $0x138] sm:$0xff]
        %v1791 = vld [vmem:[#allocation16 + $0x140] sm:$0xff]
        %v1792 = vld [vmem:[#allocation16 + $0x148] sm:$0xff]
        %v1793 = vld [vmem:[#allocation16 + $0x150] sm:$0xff]
        %v1794 = vld [vmem:[#allocation16 + $0x158] sm:$0xff]
        %v1795 = vld [vmem:[#allocation16 + $0x160] sm:$0xff]
        %v1796 = vld [vmem:[#allocation16 + $0x168] sm:$0xff]
        %v1797 = vld [vmem:[#allocation16 + $0x170] sm:$0xff]
        %v1798 = vld [vmem:[#allocation16 + $0x178] sm:$0xff]
        %v1799 = vld [vmem:[#allocation16 + $0x180] sm:$0xff]
        %v1800 = vld [vmem:[#allocation16 + $0x188] sm:$0xff]
        %v1801 = vld [vmem:[#allocation16 + $0x190] sm:$0xff]
        %v1802 = vld [vmem:[#allocation16 + $0x198] sm:$0xff]
        %v1803 = vld [vmem:[#allocation16 + $0x1a0] sm:$0xff]
        %v1804 = vld [vmem:[#allocation16 + $0x1a8] sm:$0xff]
        %v1805 = vld [vmem:[#allocation16 + $0x1b0] sm:$0xff]
        %v1806 = vld [vmem:[#allocation16 + $0x1b8] sm:$0xff]
        %v1807 = vld [vmem:[#allocation16 + $0x1c0] sm:$0xff]
        %v1808 = vld [vmem:[#allocation16 + $0x1c8] sm:$0xff]
        %v1809 = vld [vmem:[#allocation16 + $0x1d0] sm:$0xff]
        %v1810 = vld [vmem:[#allocation16 + $0x1d8] sm:$0xff]
        %v1811 = vld [vmem:[#allocation16 + $0x1e0] sm:$0xff]
        %v1812 = vld [vmem:[#allocation16 + $0x1e8] sm:$0xff]
        %v1813 = vld [vmem:[#allocation16 + $0x1f0] sm:$0xff]
        %v1814 = vld [vmem:[#allocation16 + $0x1f8] sm:$0xff]
        %v1815 = vld [vmem:[#allocation16 + $0x200] sm:$0xff]
        %v1816 = vld [vmem:[#allocation16 + $0x208] sm:$0xff]
        %v1817 = vld [vmem:[#allocation16 + $0x210] sm:$0xff]
        %v1818 = vld [vmem:[#allocation16 + $0x218] sm:$0xff]
        %v1819 = vld [vmem:[#allocation16 + $0x220] sm:$0xff]
        %v1820 = vld [vmem:[#allocation16 + $0x228] sm:$0xff]
        %v1821 = vld [vmem:[#allocation16 + $0x230] sm:$0xff]
        %v1822 = vld [vmem:[#allocation16 + $0x238] sm:$0xff]
        %v1823 = vld [vmem:[#allocation16 + $0x240] sm:$0xff]
        %v1824 = vld [vmem:[#allocation16 + $0x248] sm:$0xff]
        %v1825 = vld [vmem:[#allocation16 + $0x250] sm:$0xff]
        %v1826 = vld [vmem:[#allocation16 + $0x258] sm:$0xff]
        %v1827 = vld [vmem:[#allocation16 + $0x260] sm:$0xff]
        %v1828 = vld [vmem:[#allocation16 + $0x268] sm:$0xff]
        %v1829 = vld [vmem:[#allocation16 + $0x270] sm:$0xff]
        %v1830 = vld [vmem:[#allocation16 + $0x278] sm:$0xff]
        %v1831 = vld [vmem:[#allocation16 + $0x280] sm:$0xff]
        %v1832 = vld [vmem:[#allocation16 + $0x288] sm:$0xff]
        %v1833 = vld [vmem:[#allocation16 + $0x290] sm:$0xff]
        %v1834 = vld [vmem:[#allocation16 + $0x298] sm:$0xff]
        %v1835 = vld [vmem:[#allocation16 + $0x2a0] sm:$0xff]
        %v1836 = vld [vmem:[#allocation16 + $0x2a8] sm:$0xff]
        %v1837 = vld [vmem:[#allocation16 + $0x2b0] sm:$0xff]
        %v1838 = vld [vmem:[#allocation16 + $0x2b8] sm:$0xff]
        %v1839 = vld [vmem:[#allocation16 + $0x2c0] sm:$0xff]
        %v1840 = vld [vmem:[#allocation16 + $0x2c8] sm:$0xff]
        %v1841 = vld [vmem:[#allocation16 + $0x2d0] sm:$0xff]
        %v1842 = vld [vmem:[#allocation16 + $0x2d8] sm:$0xff]
        %v1843 = vld [vmem:[#allocation16 + $0x2e0] sm:$0xff]
        %v1844 = vld [vmem:[#allocation16 + $0x2e8] sm:$0xff]
        %v1845 = vld [vmem:[#allocation16 + $0x2f0] sm:$0xff]
        %v1846 = vld [vmem:[#allocation16 + $0x2f8] sm:$0xff]
        %v1847 = vld [vmem:[#allocation16 + $0x300] sm:$0xff]
        %v1848 = vld [vmem:[#allocation16 + $0x308] sm:$0xff]
        %v1849 = vld [vmem:[#allocation16 + $0x310] sm:$0xff]
        %v1850 = vld [vmem:[#allocation16 + $0x318] sm:$0xff]
        %v1851 = vld [vmem:[#allocation16 + $0x320] sm:$0xff]
        %v1852 = vld [vmem:[#allocation16 + $0x328] sm:$0xff]
        %v1853 = vld [vmem:[#allocation16 + $0x330] sm:$0xff]
        %v1854 = vld [vmem:[#allocation16 + $0x338] sm:$0xff]
        %v1855 = vld [vmem:[#allocation16 + $0x340] sm:$0xff]
        %v1856 = vld [vmem:[#allocation16 + $0x348] sm:$0xff]
        %v1857 = vld [vmem:[#allocation16 + $0x350] sm:$0xff]
        %v1858 = vld [vmem:[#allocation16 + $0x358] sm:$0xff]
        %v1859 = vld [vmem:[#allocation16 + $0x360] sm:$0xff]
        %v1860 = vld [vmem:[#allocation16 + $0x368] sm:$0xff]
        %v1861 = vld [vmem:[#allocation16 + $0x370] sm:$0xff]
        %v1862 = vld [vmem:[#allocation16 + $0x378] sm:$0xff]
        %v1863 = vld [vmem:[#allocation16 + $0x380] sm:$0xff]
        %v1864 = vld [vmem:[#allocation16 + $0x388] sm:$0xff]
        %v1865 = vld [vmem:[#allocation16 + $0x390] sm:$0xff]
        %v1866 = vld [vmem:[#allocation16 + $0x398] sm:$0xff]
        %v1867 = vld [vmem:[#allocation16 + $0x3a0] sm:$0xff]
        %v1868 = vld [vmem:[#allocation16 + $0x3a8] sm:$0xff]
        %v1869 = vld [vmem:[#allocation16 + $0x3b0] sm:$0xff]
        %v1870 = vld [vmem:[#allocation16 + $0x3b8] sm:$0xff]
        %v1871 = vld [vmem:[#allocation16 + $0x3c0] sm:$0xff]
        %v1872 = vld [vmem:[#allocation16 + $0x3c8] sm:$0xff]
        %v1873 = vld [vmem:[#allocation16 + $0x3d0] sm:$0xff]
        %v1874 = vld [vmem:[#allocation16 + $0x3d8] sm:$0xff]
        %v1875 = vld [vmem:[#allocation16 + $0x3e0] sm:$0xff]
        %v1876 = vld [vmem:[#allocation16 + $0x3e8] sm:$0xff]
        %v1877 = vld [vmem:[#allocation16 + $0x3f0] sm:$0xff]
        %v1878 = vld [vmem:[#allocation16 + $0x3f8] sm:$0xff]
        %v1879 = vld [vmem:[#allocation16 + $0x400] sm:$0xff]
        %v1880 = vld [vmem:[#allocation16 + $0x408] sm:$0xff]
        %v1881 = vld [vmem:[#allocation16 + $0x410] sm:$0xff]
        %v1882 = vld [vmem:[#allocation16 + $0x418] sm:$0xff]
        %v1883 = vld [vmem:[#allocation16 + $0x420] sm:$0xff]
        %v1884 = vld [vmem:[#allocation16 + $0x428] sm:$0xff]
        %v1885 = vld [vmem:[#allocation16 + $0x430] sm:$0xff]
        %v1886 = vld [vmem:[#allocation16 + $0x438] sm:$0xff]
        %v1887 = vld [vmem:[#allocation16 + $0x440] sm:$0xff]
        %v1888 = vld [vmem:[#allocation16 + $0x448] sm:$0xff]
        %v1889 = vld [vmem:[#allocation16 + $0x450] sm:$0xff]
        %v1890 = vld [vmem:[#allocation16 + $0x458] sm:$0xff]
        %v1891 = vld [vmem:[#allocation16 + $0x460] sm:$0xff]
        %v1892 = vld [vmem:[#allocation16 + $0x468] sm:$0xff]
        %v1893 = vld [vmem:[#allocation16 + $0x470] sm:$0xff]
        %v1894 = vld [vmem:[#allocation16 + $0x478] sm:$0xff]
        %v1895 = vld [vmem:[#allocation16 + $0x480] sm:$0xff]
        %v1896 = vld [vmem:[#allocation16 + $0x488] sm:$0xff]
        %v1897 = vld [vmem:[#allocation16 + $0x490] sm:$0xff]
        %v1898 = vld [vmem:[#allocation16 + $0x498] sm:$0xff]
        %v1899 = vld [vmem:[#allocation16 + $0x4a0] sm:$0xff]
        %v1900 = vld [vmem:[#allocation16 + $0x4a8] sm:$0xff]
        %v1901 = vld [vmem:[#allocation16 + $0x4b0] sm:$0xff]
        %v1902 = vld [vmem:[#allocation16 + $0x4b8] sm:$0xff]
        %v1903 = vld [vmem:[#allocation16 + $0x4c0] sm:$0xff]
        %v1904 = vld [vmem:[#allocation16 + $0x4c8] sm:$0xff]
        %v1905 = vld [vmem:[#allocation16 + $0x4d0] sm:$0xff]
        %v1906 = vld [vmem:[#allocation16 + $0x4d8] sm:$0xff]
        %v1907 = vld [vmem:[#allocation16 + $0x4e0] sm:$0xff]
        %v1908 = vld [vmem:[#allocation16 + $0x4e8] sm:$0xff]
        %v1909 = vld [vmem:[#allocation16 + $0x4f0] sm:$0xff]
        %v1910 = vld [vmem:[#allocation16 + $0x4f8] sm:$0xff]
        %v1911 = vld [vmem:[#allocation16 + $0x500] sm:$0xff]
        %v1912 = vld [vmem:[#allocation16 + $0x508] sm:$0xff]
        %v1913 = vld [vmem:[#allocation16 + $0x510] sm:$0xff]
        %v1914 = vld [vmem:[#allocation16 + $0x518] sm:$0xff]
        %v1915 = vld [vmem:[#allocation16 + $0x520] sm:$0xff]
        %v1916 = vld [vmem:[#allocation16 + $0x528] sm:$0xff]
        %v1917 = vld [vmem:[#allocation16 + $0x530] sm:$0xff]
        %v1918 = vld [vmem:[#allocation16 + $0x538] sm:$0xff]
        %v1919 = vld [vmem:[#allocation16 + $0x540] sm:$0xff]
        %v1920 = vld [vmem:[#allocation16 + $0x548] sm:$0xff]
        %v1921 = vld [vmem:[#allocation16 + $0x550] sm:$0xff]
        %v1922 = vld [vmem:[#allocation16 + $0x558] sm:$0xff]
        %v1923 = vld [vmem:[#allocation16 + $0x560] sm:$0xff]
        %v1924 = vld [vmem:[#allocation16 + $0x568] sm:$0xff]
        %v1925 = vld [vmem:[#allocation16 + $0x570] sm:$0xff]
        %v1926 = vld [vmem:[#allocation16 + $0x578] sm:$0xff]
        %v1927 = vld [vmem:[#allocation16 + $0x580] sm:$0xff]
        %v1928 = vld [vmem:[#allocation16 + $0x588] sm:$0xff]
        %v1929 = vld [vmem:[#allocation16 + $0x590] sm:$0xff]
        %v1930 = vld [vmem:[#allocation16 + $0x598] sm:$0xff]
        %v1931 = vld [vmem:[#allocation16 + $0x5a0] sm:$0xff]
        %v1932 = vld [vmem:[#allocation16 + $0x5a8] sm:$0xff]
        %v1933 = vld [vmem:[#allocation16 + $0x5b0] sm:$0xff]
        %v1934 = vld [vmem:[#allocation16 + $0x5b8] sm:$0xff]
        %v1935 = vld [vmem:[#allocation16 + $0x5c0] sm:$0xff]
        %v1936 = vld [vmem:[#allocation16 + $0x5c8] sm:$0xff]
        %v1937 = vld [vmem:[#allocation16 + $0x5d0] sm:$0xff]
        %v1938 = vld [vmem:[#allocation16 + $0x5d8] sm:$0xff]
        %v1939 = vld [vmem:[#allocation16 + $0x5e0] sm:$0xff]
        %v1940 = vld [vmem:[#allocation16 + $0x5e8] sm:$0xff]
        %v1941 = vld [vmem:[#allocation16 + $0x5f0] sm:$0xff]
        %v1942 = vld [vmem:[#allocation16 + $0x5f8] sm:$0xff]
        %v1943 = vld [vmem:[#allocation16 + $0x600] sm:$0xff]
        %v1944 = vld [vmem:[#allocation16 + $0x608] sm:$0xff]
        %v1945 = vld [vmem:[#allocation16 + $0x610] sm:$0xff]
        %v1946 = vld [vmem:[#allocation16 + $0x618] sm:$0xff]
        %v1947 = vld [vmem:[#allocation16 + $0x620] sm:$0xff]
        %v1948 = vld [vmem:[#allocation16 + $0x628] sm:$0xff]
        %v1949 = vld [vmem:[#allocation16 + $0x630] sm:$0xff]
        %v1950 = vld [vmem:[#allocation16 + $0x638] sm:$0xff]
        %v1951 = vld [vmem:[#allocation16 + $0x640] sm:$0xff]
        %v1952 = vld [vmem:[#allocation16 + $0x648] sm:$0xff]
        %v1953 = vld [vmem:[#allocation16 + $0x650] sm:$0xff]
        %v1954 = vld [vmem:[#allocation16 + $0x658] sm:$0xff]
        %v1955 = vld [vmem:[#allocation16 + $0x660] sm:$0xff]
        %v1956 = vld [vmem:[#allocation16 + $0x668] sm:$0xff]
        %v1957 = vld [vmem:[#allocation16 + $0x670] sm:$0xff]
        %v1958 = vld [vmem:[#allocation16 + $0x678] sm:$0xff]
        %v1959 = vld [vmem:[#allocation16 + $0x680] sm:$0xff]
        %v1960 = vld [vmem:[#allocation16 + $0x688] sm:$0xff]
        %v1961 = vld [vmem:[#allocation16 + $0x690] sm:$0xff]
        %v1962 = vld [vmem:[#allocation16 + $0x698] sm:$0xff]
        %v1963 = vld [vmem:[#allocation16 + $0x6a0] sm:$0xff]
        %v1964 = vld [vmem:[#allocation16 + $0x6a8] sm:$0xff]
        %v1965 = vld [vmem:[#allocation16 + $0x6b0] sm:$0xff]
        %v1966 = vld [vmem:[#allocation16 + $0x6b8] sm:$0xff]
        %v1967 = vld [vmem:[#allocation16 + $0x6c0] sm:$0xff]
        %v1968 = vld [vmem:[#allocation16 + $0x6c8] sm:$0xff]
        %v1969 = vld [vmem:[#allocation16 + $0x6d0] sm:$0xff]
        %v1970 = vld [vmem:[#allocation16 + $0x6d8] sm:$0xff]
        %v1971 = vld [vmem:[#allocation16 + $0x6e0] sm:$0xff]
        %v1972 = vld [vmem:[#allocation16 + $0x6e8] sm:$0xff]
        %v1973 = vld [vmem:[#allocation16 + $0x6f0] sm:$0xff]
        %v1974 = vld [vmem:[#allocation16 + $0x6f8] sm:$0xff]
        %v1975 = vld [vmem:[#allocation16 + $0x700] sm:$0xff]
        %v1976 = vld [vmem:[#allocation16 + $0x708] sm:$0xff]
        %v1977 = vld [vmem:[#allocation16 + $0x710] sm:$0xff]
        %v1978 = vld [vmem:[#allocation16 + $0x718] sm:$0xff]
        %v1979 = vld [vmem:[#allocation16 + $0x720] sm:$0xff]
        %v1980 = vld [vmem:[#allocation16 + $0x728] sm:$0xff]
        %v1981 = vld [vmem:[#allocation16 + $0x730] sm:$0xff]
        %v1982 = vld [vmem:[#allocation16 + $0x738] sm:$0xff]
        %v1983 = vld [vmem:[#allocation16 + $0x740] sm:$0xff]
        %v1984 = vld [vmem:[#allocation16 + $0x748] sm:$0xff]
        %v1985 = vld [vmem:[#allocation16 + $0x750] sm:$0xff]
        %v1986 = vld [vmem:[#allocation16 + $0x758] sm:$0xff]
        %v1987 = vld [vmem:[#allocation16 + $0x760] sm:$0xff]
        %v1988 = vld [vmem:[#allocation16 + $0x768] sm:$0xff]
        %v1989 = vld [vmem:[#allocation16 + $0x770] sm:$0xff]
        %v1990 = vld [vmem:[#allocation16 + $0x778] sm:$0xff]
        %v1991 = vld [vmem:[#allocation16 + $0x780] sm:$0xff]
        %v1992 = vld [vmem:[#allocation16 + $0x788] sm:$0xff]
        %v1993 = vld [vmem:[#allocation16 + $0x790] sm:$0xff]
        %v1994 = vld [vmem:[#allocation16 + $0x798] sm:$0xff]
        %v1995 = vld [vmem:[#allocation16 + $0x7a0] sm:$0xff]
        %v1996 = vld [vmem:[#allocation16 + $0x7a8] sm:$0xff]
        %v1997 = vld [vmem:[#allocation16 + $0x7b0] sm:$0xff]
        %v1998 = vld [vmem:[#allocation16 + $0x7b8] sm:$0xff]
        %v1999 = vld [vmem:[#allocation16 + $0x7c0] sm:$0xff]
        %v2000 = vld [vmem:[#allocation16 + $0x7c8] sm:$0xff]
        %v2001 = vld [vmem:[#allocation16 + $0x7d0] sm:$0xff]
        %v2002 = vld [vmem:[#allocation16 + $0x7d8] sm:$0xff]
        %v2003 = vld [vmem:[#allocation16 + $0x7e0] sm:$0xff]
        %v2004 = vld [vmem:[#allocation16 + $0x7e8] sm:$0xff]
        %v2005 = vld [vmem:[#allocation16 + $0x7f0] sm:$0xff]
        %v2006 = vld [vmem:[#allocation16 + $0x7f8] sm:$0xff]
        %v2007 = vld [vmem:[%s13] sm:$0xf]
        %v2264 = vunpack.c.l.b16 %v1751
        %v2265 = vunpack.c.h.b16 %v1751
        %v2266 = vunpack.c.l.b16 %v1752
        %v2267 = vunpack.c.h.b16 %v1752
        %v2268 = vunpack.c.l.b16 %v1753
        %v2269 = vunpack.c.h.b16 %v1753
        %v2270 = vunpack.c.l.b16 %v1754
        %v2271 = vunpack.c.h.b16 %v1754
        %v2272 = vunpack.c.l.b16 %v1755
        %v2273 = vunpack.c.h.b16 %v1755
        %v2274 = vunpack.c.l.b16 %v1756
        %v2275 = vunpack.c.h.b16 %v1756
        %v2276 = vunpack.c.l.b16 %v1757
        %v2277 = vunpack.c.h.b16 %v1757
        %v2278 = vunpack.c.l.b16 %v1758
        %v2279 = vunpack.c.h.b16 %v1758
        %v2280 = vunpack.c.l.b16 %v1759
        %v2281 = vunpack.c.h.b16 %v1759
        %v2282 = vunpack.c.l.b16 %v1760
        %v2283 = vunpack.c.h.b16 %v1760
        %v2284 = vunpack.c.l.b16 %v1761
        %v2285 = vunpack.c.h.b16 %v1761
        %v2286 = vunpack.c.l.b16 %v1762
        %v2287 = vunpack.c.h.b16 %v1762
        %v2288 = vunpack.c.l.b16 %v1763
        %v2289 = vunpack.c.h.b16 %v1763
        %v2290 = vunpack.c.l.b16 %v1764
        %v2291 = vunpack.c.h.b16 %v1764
        %v2292 = vunpack.c.l.b16 %v1765
        %v2293 = vunpack.c.h.b16 %v1765
        %v2294 = vunpack.c.l.b16 %v1766
        %v2295 = vunpack.c.h.b16 %v1766
        %v2296 = vunpack.c.l.b16 %v1767
        %v2297 = vunpack.c.h.b16 %v1767
        %v2298 = vunpack.c.l.b16 %v1768
        %v2299 = vunpack.c.h.b16 %v1768
        %v2300 = vunpack.c.l.b16 %v1769
        %v2301 = vunpack.c.h.b16 %v1769
        %v2302 = vunpack.c.l.b16 %v1770
        %v2303 = vunpack.c.h.b16 %v1770
        %v2304 = vunpack.c.l.b16 %v1771
        %v2305 = vunpack.c.h.b16 %v1771
        %v2306 = vunpack.c.l.b16 %v1772
        %v2307 = vunpack.c.h.b16 %v1772
        %v2308 = vunpack.c.l.b16 %v1773
        %v2309 = vunpack.c.h.b16 %v1773
        %v2310 = vunpack.c.l.b16 %v1774
        %v2311 = vunpack.c.h.b16 %v1774
        %v2312 = vunpack.c.l.b16 %v1775
        %v2313 = vunpack.c.h.b16 %v1775
        %v2314 = vunpack.c.l.b16 %v1776
        %v2315 = vunpack.c.h.b16 %v1776
        %v2316 = vunpack.c.l.b16 %v1777
        %v2317 = vunpack.c.h.b16 %v1777
        %v2318 = vunpack.c.l.b16 %v1778
        %v2319 = vunpack.c.h.b16 %v1778
        %v2320 = vunpack.c.l.b16 %v1779
        %v2321 = vunpack.c.h.b16 %v1779
        %v2322 = vunpack.c.l.b16 %v1780
        %v2323 = vunpack.c.h.b16 %v1780
        %v2324 = vunpack.c.l.b16 %v1781
        %v2325 = vunpack.c.h.b16 %v1781
        %v2326 = vunpack.c.l.b16 %v1782
        %v2327 = vunpack.c.h.b16 %v1782
        %v2328 = vunpack.c.l.b16 %v1783
        %v2329 = vunpack.c.h.b16 %v1783
        %v2330 = vunpack.c.l.b16 %v1784
        %v2331 = vunpack.c.h.b16 %v1784
        %v2332 = vunpack.c.l.b16 %v1785
        %v2333 = vunpack.c.h.b16 %v1785
        %v2334 = vunpack.c.l.b16 %v1786
        %v2335 = vunpack.c.h.b16 %v1786
        %v2336 = vunpack.c.l.b16 %v1787
        %v2337 = vunpack.c.h.b16 %v1787
        %v2338 = vunpack.c.l.b16 %v1788
        %v2339 = vunpack.c.h.b16 %v1788
        %v2340 = vunpack.c.l.b16 %v1789
        %v2341 = vunpack.c.h.b16 %v1789
        %v2342 = vunpack.c.l.b16 %v1790
        %v2343 = vunpack.c.h.b16 %v1790
        %v2344 = vunpack.c.l.b16 %v1791
        %v2345 = vunpack.c.h.b16 %v1791
        %v2346 = vunpack.c.l.b16 %v1792
        %v2347 = vunpack.c.h.b16 %v1792
        %v2348 = vunpack.c.l.b16 %v1793
        %v2349 = vunpack.c.h.b16 %v1793
        %v2350 = vunpack.c.l.b16 %v1794
        %v2351 = vunpack.c.h.b16 %v1794
        %v2352 = vunpack.c.l.b16 %v1795
        %v2353 = vunpack.c.h.b16 %v1795
        %v2354 = vunpack.c.l.b16 %v1796
        %v2355 = vunpack.c.h.b16 %v1796
        %v2356 = vunpack.c.l.b16 %v1797
        %v2357 = vunpack.c.h.b16 %v1797
        %v2358 = vunpack.c.l.b16 %v1798
        %v2359 = vunpack.c.h.b16 %v1798
        %v2360 = vunpack.c.l.b16 %v1799
        %v2361 = vunpack.c.h.b16 %v1799
        %v2362 = vunpack.c.l.b16 %v1800
        %v2363 = vunpack.c.h.b16 %v1800
        %v2364 = vunpack.c.l.b16 %v1801
        %v2365 = vunpack.c.h.b16 %v1801
        %v2366 = vunpack.c.l.b16 %v1802
        %v2367 = vunpack.c.h.b16 %v1802
        %v2368 = vunpack.c.l.b16 %v1803
        %v2369 = vunpack.c.h.b16 %v1803
        %v2370 = vunpack.c.l.b16 %v1804
        %v2371 = vunpack.c.h.b16 %v1804
        %v2372 = vunpack.c.l.b16 %v1805
        %v2373 = vunpack.c.h.b16 %v1805
        %v2374 = vunpack.c.l.b16 %v1806
        %v2375 = vunpack.c.h.b16 %v1806
        %v2376 = vunpack.c.l.b16 %v1807
        %v2377 = vunpack.c.h.b16 %v1807
        %v2378 = vunpack.c.l.b16 %v1808
        %v2379 = vunpack.c.h.b16 %v1808
        %v2380 = vunpack.c.l.b16 %v1809
        %v2381 = vunpack.c.h.b16 %v1809
        %v2382 = vunpack.c.l.b16 %v1810
        %v2383 = vunpack.c.h.b16 %v1810
        %v2384 = vunpack.c.l.b16 %v1811
        %v2385 = vunpack.c.h.b16 %v1811
        %v2386 = vunpack.c.l.b16 %v1812
        %v2387 = vunpack.c.h.b16 %v1812
        %v2388 = vunpack.c.l.b16 %v1813
        %v2389 = vunpack.c.h.b16 %v1813
        %v2390 = vunpack.c.l.b16 %v1814
        %v2391 = vunpack.c.h.b16 %v1814
        %v2392 = vunpack.c.l.b16 %v1815
        %v2393 = vunpack.c.h.b16 %v1815
        %v2394 = vunpack.c.l.b16 %v1816
        %v2395 = vunpack.c.h.b16 %v1816
        %v2396 = vunpack.c.l.b16 %v1817
        %v2397 = vunpack.c.h.b16 %v1817
        %v2398 = vunpack.c.l.b16 %v1818
        %v2399 = vunpack.c.h.b16 %v1818
        %v2400 = vunpack.c.l.b16 %v1819
        %v2401 = vunpack.c.h.b16 %v1819
        %v2402 = vunpack.c.l.b16 %v1820
        %v2403 = vunpack.c.h.b16 %v1820
        %v2404 = vunpack.c.l.b16 %v1821
        %v2405 = vunpack.c.h.b16 %v1821
        %v2406 = vunpack.c.l.b16 %v1822
        %v2407 = vunpack.c.h.b16 %v1822
        %v2408 = vunpack.c.l.b16 %v1823
        %v2409 = vunpack.c.h.b16 %v1823
        %v2410 = vunpack.c.l.b16 %v1824
        %v2411 = vunpack.c.h.b16 %v1824
        %v2412 = vunpack.c.l.b16 %v1825
        %v2413 = vunpack.c.h.b16 %v1825
        %v2414 = vunpack.c.l.b16 %v1826
        %v2415 = vunpack.c.h.b16 %v1826
        %v2416 = vunpack.c.l.b16 %v1827
        %v2417 = vunpack.c.h.b16 %v1827
        %v2418 = vunpack.c.l.b16 %v1828
        %v2419 = vunpack.c.h.b16 %v1828
        %v2420 = vunpack.c.l.b16 %v1829
        %v2421 = vunpack.c.h.b16 %v1829
        %v2422 = vunpack.c.l.b16 %v1830
        %v2423 = vunpack.c.h.b16 %v1830
        %v2424 = vunpack.c.l.b16 %v1831
        %v2425 = vunpack.c.h.b16 %v1831
        %v2426 = vunpack.c.l.b16 %v1832
        %v2427 = vunpack.c.h.b16 %v1832
        %v2428 = vunpack.c.l.b16 %v1833
        %v2429 = vunpack.c.h.b16 %v1833
        %v2430 = vunpack.c.l.b16 %v1834
        %v2431 = vunpack.c.h.b16 %v1834
        %v2432 = vunpack.c.l.b16 %v1835
        %v2433 = vunpack.c.h.b16 %v1835
        %v2434 = vunpack.c.l.b16 %v1836
        %v2435 = vunpack.c.h.b16 %v1836
        %v2436 = vunpack.c.l.b16 %v1837
        %v2437 = vunpack.c.h.b16 %v1837
        %v2438 = vunpack.c.l.b16 %v1838
        %v2439 = vunpack.c.h.b16 %v1838
        %v2440 = vunpack.c.l.b16 %v1839
        %v2441 = vunpack.c.h.b16 %v1839
        %v2442 = vunpack.c.l.b16 %v1840
        %v2443 = vunpack.c.h.b16 %v1840
        %v2444 = vunpack.c.l.b16 %v1841
        %v2445 = vunpack.c.h.b16 %v1841
        %v2446 = vunpack.c.l.b16 %v1842
        %v2447 = vunpack.c.h.b16 %v1842
        %v2448 = vunpack.c.l.b16 %v1843
        %v2449 = vunpack.c.h.b16 %v1843
        %v2450 = vunpack.c.l.b16 %v1844
        %v2451 = vunpack.c.h.b16 %v1844
        %v2452 = vunpack.c.l.b16 %v1845
        %v2453 = vunpack.c.h.b16 %v1845
        %v2454 = vunpack.c.l.b16 %v1846
        %v2455 = vunpack.c.h.b16 %v1846
        %v2456 = vunpack.c.l.b16 %v1847
        %v2457 = vunpack.c.h.b16 %v1847
        %v2458 = vunpack.c.l.b16 %v1848
        %v2459 = vunpack.c.h.b16 %v1848
        %v2460 = vunpack.c.l.b16 %v1849
        %v2461 = vunpack.c.h.b16 %v1849
        %v2462 = vunpack.c.l.b16 %v1850
        %v2463 = vunpack.c.h.b16 %v1850
        %v2464 = vunpack.c.l.b16 %v1851
        %v2465 = vunpack.c.h.b16 %v1851
        %v2466 = vunpack.c.l.b16 %v1852
        %v2467 = vunpack.c.h.b16 %v1852
        %v2468 = vunpack.c.l.b16 %v1853
        %v2469 = vunpack.c.h.b16 %v1853
        %v2470 = vunpack.c.l.b16 %v1854
        %v2471 = vunpack.c.h.b16 %v1854
        %v2472 = vunpack.c.l.b16 %v1855
        %v2473 = vunpack.c.h.b16 %v1855
        %v2474 = vunpack.c.l.b16 %v1856
        %v2475 = vunpack.c.h.b16 %v1856
        %v2476 = vunpack.c.l.b16 %v1857
        %v2477 = vunpack.c.h.b16 %v1857
        %v2478 = vunpack.c.l.b16 %v1858
        %v2479 = vunpack.c.h.b16 %v1858
        %v2480 = vunpack.c.l.b16 %v1859
        %v2481 = vunpack.c.h.b16 %v1859
        %v2482 = vunpack.c.l.b16 %v1860
        %v2483 = vunpack.c.h.b16 %v1860
        %v2484 = vunpack.c.l.b16 %v1861
        %v2485 = vunpack.c.h.b16 %v1861
        %v2486 = vunpack.c.l.b16 %v1862
        %v2487 = vunpack.c.h.b16 %v1862
        %v2488 = vunpack.c.l.b16 %v1863
        %v2489 = vunpack.c.h.b16 %v1863
        %v2490 = vunpack.c.l.b16 %v1864
        %v2491 = vunpack.c.h.b16 %v1864
        %v2492 = vunpack.c.l.b16 %v1865
        %v2493 = vunpack.c.h.b16 %v1865
        %v2494 = vunpack.c.l.b16 %v1866
        %v2495 = vunpack.c.h.b16 %v1866
        %v2496 = vunpack.c.l.b16 %v1867
        %v2497 = vunpack.c.h.b16 %v1867
        %v2498 = vunpack.c.l.b16 %v1868
        %v2499 = vunpack.c.h.b16 %v1868
        %v2500 = vunpack.c.l.b16 %v1869
        %v2501 = vunpack.c.h.b16 %v1869
        %v2502 = vunpack.c.l.b16 %v1870
        %v2503 = vunpack.c.h.b16 %v1870
        %v2504 = vunpack.c.l.b16 %v1871
        %v2505 = vunpack.c.h.b16 %v1871
        %v2506 = vunpack.c.l.b16 %v1872
        %v2507 = vunpack.c.h.b16 %v1872
        %v2508 = vunpack.c.l.b16 %v1873
        %v2509 = vunpack.c.h.b16 %v1873
        %v2510 = vunpack.c.l.b16 %v1874
        %v2511 = vunpack.c.h.b16 %v1874
        %v2512 = vunpack.c.l.b16 %v1875
        %v2513 = vunpack.c.h.b16 %v1875
        %v2514 = vunpack.c.l.b16 %v1876
        %v2515 = vunpack.c.h.b16 %v1876
        %v2516 = vunpack.c.l.b16 %v1877
        %v2517 = vunpack.c.h.b16 %v1877
        %v2518 = vunpack.c.l.b16 %v1878
        %v2519 = vunpack.c.h.b16 %v1878
        %v2520 = vunpack.c.l.b16 %v1879
        %v2521 = vunpack.c.h.b16 %v1879
        %v2522 = vunpack.c.l.b16 %v1880
        %v2523 = vunpack.c.h.b16 %v1880
        %v2524 = vunpack.c.l.b16 %v1881
        %v2525 = vunpack.c.h.b16 %v1881
        %v2526 = vunpack.c.l.b16 %v1882
        %v2527 = vunpack.c.h.b16 %v1882
        %v2528 = vunpack.c.l.b16 %v1883
        %v2529 = vunpack.c.h.b16 %v1883
        %v2530 = vunpack.c.l.b16 %v1884
        %v2531 = vunpack.c.h.b16 %v1884
        %v2532 = vunpack.c.l.b16 %v1885
        %v2533 = vunpack.c.h.b16 %v1885
        %v2534 = vunpack.c.l.b16 %v1886
        %v2535 = vunpack.c.h.b16 %v1886
        %v2536 = vunpack.c.l.b16 %v1887
        %v2537 = vunpack.c.h.b16 %v1887
        %v2538 = vunpack.c.l.b16 %v1888
        %v2539 = vunpack.c.h.b16 %v1888
        %v2540 = vunpack.c.l.b16 %v1889
        %v2541 = vunpack.c.h.b16 %v1889
        %v2542 = vunpack.c.l.b16 %v1890
        %v2543 = vunpack.c.h.b16 %v1890
        %v2544 = vunpack.c.l.b16 %v1891
        %v2545 = vunpack.c.h.b16 %v1891
        %v2546 = vunpack.c.l.b16 %v1892
        %v2547 = vunpack.c.h.b16 %v1892
        %v2548 = vunpack.c.l.b16 %v1893
        %v2549 = vunpack.c.h.b16 %v1893
        %v2550 = vunpack.c.l.b16 %v1894
        %v2551 = vunpack.c.h.b16 %v1894
        %v2552 = vunpack.c.l.b16 %v1895
        %v2553 = vunpack.c.h.b16 %v1895
        %v2554 = vunpack.c.l.b16 %v1896
        %v2555 = vunpack.c.h.b16 %v1896
        %v2556 = vunpack.c.l.b16 %v1897
        %v2557 = vunpack.c.h.b16 %v1897
        %v2558 = vunpack.c.l.b16 %v1898
        %v2559 = vunpack.c.h.b16 %v1898
        %v2560 = vunpack.c.l.b16 %v1899
        %v2561 = vunpack.c.h.b16 %v1899
        %v2562 = vunpack.c.l.b16 %v1900
        %v2563 = vunpack.c.h.b16 %v1900
        %v2564 = vunpack.c.l.b16 %v1901
        %v2565 = vunpack.c.h.b16 %v1901
        %v2566 = vunpack.c.l.b16 %v1902
        %v2567 = vunpack.c.h.b16 %v1902
        %v2568 = vunpack.c.l.b16 %v1903
        %v2569 = vunpack.c.h.b16 %v1903
        %v2570 = vunpack.c.l.b16 %v1904
        %v2571 = vunpack.c.h.b16 %v1904
        %v2572 = vunpack.c.l.b16 %v1905
        %v2573 = vunpack.c.h.b16 %v1905
        %v2574 = vunpack.c.l.b16 %v1906
        %v2575 = vunpack.c.h.b16 %v1906
        %v2576 = vunpack.c.l.b16 %v1907
        %v2577 = vunpack.c.h.b16 %v1907
        %v2578 = vunpack.c.l.b16 %v1908
        %v2579 = vunpack.c.h.b16 %v1908
        %v2580 = vunpack.c.l.b16 %v1909
        %v2581 = vunpack.c.h.b16 %v1909
        %v2582 = vunpack.c.l.b16 %v1910
        %v2583 = vunpack.c.h.b16 %v1910
        %v2584 = vunpack.c.l.b16 %v1911
        %v2585 = vunpack.c.h.b16 %v1911
        %v2586 = vunpack.c.l.b16 %v1912
        %v2587 = vunpack.c.h.b16 %v1912
        %v2588 = vunpack.c.l.b16 %v1913
        %v2589 = vunpack.c.h.b16 %v1913
        %v2590 = vunpack.c.l.b16 %v1914
        %v2591 = vunpack.c.h.b16 %v1914
        %v2592 = vunpack.c.l.b16 %v1915
        %v2593 = vunpack.c.h.b16 %v1915
        %v2594 = vunpack.c.l.b16 %v1916
        %v2595 = vunpack.c.h.b16 %v1916
        %v2596 = vunpack.c.l.b16 %v1917
        %v2597 = vunpack.c.h.b16 %v1917
        %v2598 = vunpack.c.l.b16 %v1918
        %v2599 = vunpack.c.h.b16 %v1918
        %v2600 = vunpack.c.l.b16 %v1919
        %v2601 = vunpack.c.h.b16 %v1919
        %v2602 = vunpack.c.l.b16 %v1920
        %v2603 = vunpack.c.h.b16 %v1920
        %v2604 = vunpack.c.l.b16 %v1921
        %v2605 = vunpack.c.h.b16 %v1921
        %v2606 = vunpack.c.l.b16 %v1922
        %v2607 = vunpack.c.h.b16 %v1922
        %v2608 = vunpack.c.l.b16 %v1923
        %v2609 = vunpack.c.h.b16 %v1923
        %v2610 = vunpack.c.l.b16 %v1924
        %v2611 = vunpack.c.h.b16 %v1924
        %v2612 = vunpack.c.l.b16 %v1925
        %v2613 = vunpack.c.h.b16 %v1925
        %v2614 = vunpack.c.l.b16 %v1926
        %v2615 = vunpack.c.h.b16 %v1926
        %v2616 = vunpack.c.l.b16 %v1927
        %v2617 = vunpack.c.h.b16 %v1927
        %v2618 = vunpack.c.l.b16 %v1928
        %v2619 = vunpack.c.h.b16 %v1928
        %v2620 = vunpack.c.l.b16 %v1929
        %v2621 = vunpack.c.h.b16 %v1929
        %v2622 = vunpack.c.l.b16 %v1930
        %v2623 = vunpack.c.h.b16 %v1930
        %v2624 = vunpack.c.l.b16 %v1931
        %v2625 = vunpack.c.h.b16 %v1931
        %v2626 = vunpack.c.l.b16 %v1932
        %v2627 = vunpack.c.h.b16 %v1932
        %v2628 = vunpack.c.l.b16 %v1933
        %v2629 = vunpack.c.h.b16 %v1933
        %v2630 = vunpack.c.l.b16 %v1934
        %v2631 = vunpack.c.h.b16 %v1934
        %v2632 = vunpack.c.l.b16 %v1935
        %v2633 = vunpack.c.h.b16 %v1935
        %v2634 = vunpack.c.l.b16 %v1936
        %v2635 = vunpack.c.h.b16 %v1936
        %v2636 = vunpack.c.l.b16 %v1937
        %v2637 = vunpack.c.h.b16 %v1937
        %v2638 = vunpack.c.l.b16 %v1938
        %v2639 = vunpack.c.h.b16 %v1938
        %v2640 = vunpack.c.l.b16 %v1939
        %v2641 = vunpack.c.h.b16 %v1939
        %v2642 = vunpack.c.l.b16 %v1940
        %v2643 = vunpack.c.h.b16 %v1940
        %v2644 = vunpack.c.l.b16 %v1941
        %v2645 = vunpack.c.h.b16 %v1941
        %v2646 = vunpack.c.l.b16 %v1942
        %v2647 = vunpack.c.h.b16 %v1942
        %v2648 = vunpack.c.l.b16 %v1943
        %v2649 = vunpack.c.h.b16 %v1943
        %v2650 = vunpack.c.l.b16 %v1944
        %v2651 = vunpack.c.h.b16 %v1944
        %v2652 = vunpack.c.l.b16 %v1945
        %v2653 = vunpack.c.h.b16 %v1945
        %v2654 = vunpack.c.l.b16 %v1946
        %v2655 = vunpack.c.h.b16 %v1946
        %v2656 = vunpack.c.l.b16 %v1947
        %v2657 = vunpack.c.h.b16 %v1947
        %v2658 = vunpack.c.l.b16 %v1948
        %v2659 = vunpack.c.h.b16 %v1948
        %v2660 = vunpack.c.l.b16 %v1949
        %v2661 = vunpack.c.h.b16 %v1949
        %v2662 = vunpack.c.l.b16 %v1950
        %v2663 = vunpack.c.h.b16 %v1950
        %v2664 = vunpack.c.l.b16 %v1951
        %v2665 = vunpack.c.h.b16 %v1951
        %v2666 = vunpack.c.l.b16 %v1952
        %v2667 = vunpack.c.h.b16 %v1952
        %v2668 = vunpack.c.l.b16 %v1953
        %v2669 = vunpack.c.h.b16 %v1953
        %v2670 = vunpack.c.l.b16 %v1954
        %v2671 = vunpack.c.h.b16 %v1954
        %v2672 = vunpack.c.l.b16 %v1955
        %v2673 = vunpack.c.h.b16 %v1955
        %v2674 = vunpack.c.l.b16 %v1956
        %v2675 = vunpack.c.h.b16 %v1956
        %v2676 = vunpack.c.l.b16 %v1957
        %v2677 = vunpack.c.h.b16 %v1957
        %v2678 = vunpack.c.l.b16 %v1958
        %v2679 = vunpack.c.h.b16 %v1958
        %v2680 = vunpack.c.l.b16 %v1959
        %v2681 = vunpack.c.h.b16 %v1959
        %v2682 = vunpack.c.l.b16 %v1960
        %v2683 = vunpack.c.h.b16 %v1960
        %v2684 = vunpack.c.l.b16 %v1961
        %v2685 = vunpack.c.h.b16 %v1961
        %v2686 = vunpack.c.l.b16 %v1962
        %v2687 = vunpack.c.h.b16 %v1962
        %v2688 = vunpack.c.l.b16 %v1963
        %v2689 = vunpack.c.h.b16 %v1963
        %v2690 = vunpack.c.l.b16 %v1964
        %v2691 = vunpack.c.h.b16 %v1964
        %v2692 = vunpack.c.l.b16 %v1965
        %v2693 = vunpack.c.h.b16 %v1965
        %v2694 = vunpack.c.l.b16 %v1966
        %v2695 = vunpack.c.h.b16 %v1966
        %v2696 = vunpack.c.l.b16 %v1967
        %v2697 = vunpack.c.h.b16 %v1967
        %v2698 = vunpack.c.l.b16 %v1968
        %v2699 = vunpack.c.h.b16 %v1968
        %v2700 = vunpack.c.l.b16 %v1969
        %v2701 = vunpack.c.h.b16 %v1969
        %v2702 = vunpack.c.l.b16 %v1970
        %v2703 = vunpack.c.h.b16 %v1970
        %v2704 = vunpack.c.l.b16 %v1971
        %v2705 = vunpack.c.h.b16 %v1971
        %v2706 = vunpack.c.l.b16 %v1972
        %v2707 = vunpack.c.h.b16 %v1972
        %v2708 = vunpack.c.l.b16 %v1973
        %v2709 = vunpack.c.h.b16 %v1973
        %v2710 = vunpack.c.l.b16 %v1974
        %v2711 = vunpack.c.h.b16 %v1974
        %v2712 = vunpack.c.l.b16 %v1975
        %v2713 = vunpack.c.h.b16 %v1975
        %v2714 = vunpack.c.l.b16 %v1976
        %v2715 = vunpack.c.h.b16 %v1976
        %v2716 = vunpack.c.l.b16 %v1977
        %v2717 = vunpack.c.h.b16 %v1977
        %v2718 = vunpack.c.l.b16 %v1978
        %v2719 = vunpack.c.h.b16 %v1978
        %v2720 = vunpack.c.l.b16 %v1979
        %v2721 = vunpack.c.h.b16 %v1979
        %v2722 = vunpack.c.l.b16 %v1980
        %v2723 = vunpack.c.h.b16 %v1980
        %v2724 = vunpack.c.l.b16 %v1981
        %v2725 = vunpack.c.h.b16 %v1981
        %v2726 = vunpack.c.l.b16 %v1982
        %v2727 = vunpack.c.h.b16 %v1982
        %v2728 = vunpack.c.l.b16 %v1983
        %v2729 = vunpack.c.h.b16 %v1983
        %v2730 = vunpack.c.l.b16 %v1984
        %v2731 = vunpack.c.h.b16 %v1984
        %v2732 = vunpack.c.l.b16 %v1985
        %v2733 = vunpack.c.h.b16 %v1985
        %v2734 = vunpack.c.l.b16 %v1986
        %v2735 = vunpack.c.h.b16 %v1986
        %v2736 = vunpack.c.l.b16 %v1987
        %v2737 = vunpack.c.h.b16 %v1987
        %v2738 = vunpack.c.l.b16 %v1988
        %v2739 = vunpack.c.h.b16 %v1988
        %v2740 = vunpack.c.l.b16 %v1989
        %v2741 = vunpack.c.h.b16 %v1989
        %v2742 = vunpack.c.l.b16 %v1990
        %v2743 = vunpack.c.h.b16 %v1990
        %v2744 = vunpack.c.l.b16 %v1991
        %v2745 = vunpack.c.h.b16 %v1991
        %v2746 = vunpack.c.l.b16 %v1992
        %v2747 = vunpack.c.h.b16 %v1992
        %v2748 = vunpack.c.l.b16 %v1993
        %v2749 = vunpack.c.h.b16 %v1993
        %v2750 = vunpack.c.l.b16 %v1994
        %v2751 = vunpack.c.h.b16 %v1994
        %v2752 = vunpack.c.l.b16 %v1995
        %v2753 = vunpack.c.h.b16 %v1995
        %v2754 = vunpack.c.l.b16 %v1996
        %v2755 = vunpack.c.h.b16 %v1996
        %v2756 = vunpack.c.l.b16 %v1997
        %v2757 = vunpack.c.h.b16 %v1997
        %v2758 = vunpack.c.l.b16 %v1998
        %v2759 = vunpack.c.h.b16 %v1998
        %v2760 = vunpack.c.l.b16 %v1999
        %v2761 = vunpack.c.h.b16 %v1999
        %v2762 = vunpack.c.l.b16 %v2000
        %v2763 = vunpack.c.h.b16 %v2000
        %v2764 = vunpack.c.l.b16 %v2001
        %v2765 = vunpack.c.h.b16 %v2001
        %v2766 = vunpack.c.l.b16 %v2002
        %v2767 = vunpack.c.h.b16 %v2002
        %v2768 = vunpack.c.l.b16 %v2003
        %v2769 = vunpack.c.h.b16 %v2003
        %v2770 = vunpack.c.l.b16 %v2004
        %v2771 = vunpack.c.h.b16 %v2004
        %v2772 = vunpack.c.l.b16 %v2005
        %v2773 = vunpack.c.h.b16 %v2005
        %v2774 = vunpack.c.l.b16 %v2006
        %v2775 = vunpack.c.h.b16 %v2006
        %v2776 = vpack.c.b16 %v2268, %v2264
        %v2777 = vpack.c.b16 %v2269, %v2265
        %v2778 = vpack.c.b16 %v2270, %v2266
        %v2779 = vpack.c.b16 %v2271, %v2267
        %v2780 = vpack.c.b16 %v2276, %v2272
        %v2781 = vpack.c.b16 %v2277, %v2273
        %v2782 = vpack.c.b16 %v2278, %v2274
        %v2783 = vpack.c.b16 %v2279, %v2275
        %v2784 = vpack.c.b16 %v2284, %v2280
        %v2785 = vpack.c.b16 %v2285, %v2281
        %v2786 = vpack.c.b16 %v2286, %v2282
        %v2787 = vpack.c.b16 %v2287, %v2283
        %v2788 = vpack.c.b16 %v2292, %v2288
        %v2789 = vpack.c.b16 %v2293, %v2289
        %v2790 = vpack.c.b16 %v2294, %v2290
        %v2791 = vpack.c.b16 %v2295, %v2291
        %v2792 = vpack.c.b16 %v2300, %v2296
        %v2793 = vpack.c.b16 %v2301, %v2297
        %v2794 = vpack.c.b16 %v2302, %v2298
        %v2795 = vpack.c.b16 %v2303, %v2299
        %v2796 = vpack.c.b16 %v2308, %v2304
        %v2797 = vpack.c.b16 %v2309, %v2305
        %v2798 = vpack.c.b16 %v2310, %v2306
        %v2799 = vpack.c.b16 %v2311, %v2307
        %v2800 = vpack.c.b16 %v2316, %v2312
        %v2801 = vpack.c.b16 %v2317, %v2313
        %v2802 = vpack.c.b16 %v2318, %v2314
        %v2803 = vpack.c.b16 %v2319, %v2315
        %v2804 = vpack.c.b16 %v2324, %v2320
        %v2805 = vpack.c.b16 %v2325, %v2321
        %v2806 = vpack.c.b16 %v2326, %v2322
        %v2807 = vpack.c.b16 %v2327, %v2323
        %v2808 = vpack.c.b16 %v2332, %v2328
        %v2809 = vpack.c.b16 %v2333, %v2329
        %v2810 = vpack.c.b16 %v2334, %v2330
        %v2811 = vpack.c.b16 %v2335, %v2331
        %v2812 = vpack.c.b16 %v2340, %v2336
        %v2813 = vpack.c.b16 %v2341, %v2337
        %v2814 = vpack.c.b16 %v2342, %v2338
        %v2815 = vpack.c.b16 %v2343, %v2339
        %v2816 = vpack.c.b16 %v2348, %v2344
        %v2817 = vpack.c.b16 %v2349, %v2345
        %v2818 = vpack.c.b16 %v2350, %v2346
        %v2819 = vpack.c.b16 %v2351, %v2347
        %v2820 = vpack.c.b16 %v2356, %v2352
        %v2821 = vpack.c.b16 %v2357, %v2353
        %v2822 = vpack.c.b16 %v2358, %v2354
        %v2823 = vpack.c.b16 %v2359, %v2355
        %v2824 = vpack.c.b16 %v2364, %v2360
        %v2825 = vpack.c.b16 %v2365, %v2361
        %v2826 = vpack.c.b16 %v2366, %v2362
        %v2827 = vpack.c.b16 %v2367, %v2363
        %v2828 = vpack.c.b16 %v2372, %v2368
        %v2829 = vpack.c.b16 %v2373, %v2369
        %v2830 = vpack.c.b16 %v2374, %v2370
        %v2831 = vpack.c.b16 %v2375, %v2371
        %v2832 = vpack.c.b16 %v2380, %v2376
        %v2833 = vpack.c.b16 %v2381, %v2377
        %v2834 = vpack.c.b16 %v2382, %v2378
        %v2835 = vpack.c.b16 %v2383, %v2379
        %v2836 = vpack.c.b16 %v2388, %v2384
        %v2837 = vpack.c.b16 %v2389, %v2385
        %v2838 = vpack.c.b16 %v2390, %v2386
        %v2839 = vpack.c.b16 %v2391, %v2387
        %v2840 = vpack.c.b16 %v2396, %v2392
        %v2841 = vpack.c.b16 %v2397, %v2393
        %v2842 = vpack.c.b16 %v2398, %v2394
        %v2843 = vpack.c.b16 %v2399, %v2395
        %v2844 = vpack.c.b16 %v2404, %v2400
        %v2845 = vpack.c.b16 %v2405, %v2401
        %v2846 = vpack.c.b16 %v2406, %v2402
        %v2847 = vpack.c.b16 %v2407, %v2403
        %v2848 = vpack.c.b16 %v2412, %v2408
        %v2849 = vpack.c.b16 %v2413, %v2409
        %v2850 = vpack.c.b16 %v2414, %v2410
        %v2851 = vpack.c.b16 %v2415, %v2411
        %v2852 = vpack.c.b16 %v2420, %v2416
        %v2853 = vpack.c.b16 %v2421, %v2417
        %v2854 = vpack.c.b16 %v2422, %v2418
        %v2855 = vpack.c.b16 %v2423, %v2419
        %v2856 = vpack.c.b16 %v2428, %v2424
        %v2857 = vpack.c.b16 %v2429, %v2425
        %v2858 = vpack.c.b16 %v2430, %v2426
        %v2859 = vpack.c.b16 %v2431, %v2427
        %v2860 = vpack.c.b16 %v2436, %v2432
        %v2861 = vpack.c.b16 %v2437, %v2433
        %v2862 = vpack.c.b16 %v2438, %v2434
        %v2863 = vpack.c.b16 %v2439, %v2435
        %v2864 = vpack.c.b16 %v2444, %v2440
        %v2865 = vpack.c.b16 %v2445, %v2441
        %v2866 = vpack.c.b16 %v2446, %v2442
        %v2867 = vpack.c.b16 %v2447, %v2443
        %v2868 = vpack.c.b16 %v2452, %v2448
        %v2869 = vpack.c.b16 %v2453, %v2449
        %v2870 = vpack.c.b16 %v2454, %v2450
        %v2871 = vpack.c.b16 %v2455, %v2451
        %v2872 = vpack.c.b16 %v2460, %v2456
        %v2873 = vpack.c.b16 %v2461, %v2457
        %v2874 = vpack.c.b16 %v2462, %v2458
        %v2875 = vpack.c.b16 %v2463, %v2459
        %v2876 = vpack.c.b16 %v2468, %v2464
        %v2877 = vpack.c.b16 %v2469, %v2465
        %v2878 = vpack.c.b16 %v2470, %v2466
        %v2879 = vpack.c.b16 %v2471, %v2467
        %v2880 = vpack.c.b16 %v2476, %v2472
        %v2881 = vpack.c.b16 %v2477, %v2473
        %v2882 = vpack.c.b16 %v2478, %v2474
        %v2883 = vpack.c.b16 %v2479, %v2475
        %v2884 = vpack.c.b16 %v2484, %v2480
        %v2885 = vpack.c.b16 %v2485, %v2481
        %v2886 = vpack.c.b16 %v2486, %v2482
        %v2887 = vpack.c.b16 %v2487, %v2483
        %v2888 = vpack.c.b16 %v2492, %v2488
        %v2889 = vpack.c.b16 %v2493, %v2489
        %v2890 = vpack.c.b16 %v2494, %v2490
        %v2891 = vpack.c.b16 %v2495, %v2491
        %v2892 = vpack.c.b16 %v2500, %v2496
        %v2893 = vpack.c.b16 %v2501, %v2497
        %v2894 = vpack.c.b16 %v2502, %v2498
        %v2895 = vpack.c.b16 %v2503, %v2499
        %v2896 = vpack.c.b16 %v2508, %v2504
        %v2897 = vpack.c.b16 %v2509, %v2505
        %v2898 = vpack.c.b16 %v2510, %v2506
        %v2899 = vpack.c.b16 %v2511, %v2507
        %v2900 = vpack.c.b16 %v2516, %v2512
        %v2901 = vpack.c.b16 %v2517, %v2513
        %v2902 = vpack.c.b16 %v2518, %v2514
        %v2903 = vpack.c.b16 %v2519, %v2515
        %v2904 = vpack.c.b16 %v2524, %v2520
        %v2905 = vpack.c.b16 %v2525, %v2521
        %v2906 = vpack.c.b16 %v2526, %v2522
        %v2907 = vpack.c.b16 %v2527, %v2523
        %v2908 = vpack.c.b16 %v2532, %v2528
        %v2909 = vpack.c.b16 %v2533, %v2529
        %v2910 = vpack.c.b16 %v2534, %v2530
        %v2911 = vpack.c.b16 %v2535, %v2531
        %v2912 = vpack.c.b16 %v2540, %v2536
        %v2913 = vpack.c.b16 %v2541, %v2537
        %v2914 = vpack.c.b16 %v2542, %v2538
        %v2915 = vpack.c.b16 %v2543, %v2539
        %v2916 = vpack.c.b16 %v2548, %v2544
        %v2917 = vpack.c.b16 %v2549, %v2545
        %v2918 = vpack.c.b16 %v2550, %v2546
        %v2919 = vpack.c.b16 %v2551, %v2547
        %v2920 = vpack.c.b16 %v2556, %v2552
        %v2921 = vpack.c.b16 %v2557, %v2553
        %v2922 = vpack.c.b16 %v2558, %v2554
        %v2923 = vpack.c.b16 %v2559, %v2555
        %v2924 = vpack.c.b16 %v2564, %v2560
        %v2925 = vpack.c.b16 %v2565, %v2561
        %v2926 = vpack.c.b16 %v2566, %v2562
        %v2927 = vpack.c.b16 %v2567, %v2563
        %v2928 = vpack.c.b16 %v2572, %v2568
        %v2929 = vpack.c.b16 %v2573, %v2569
        %v2930 = vpack.c.b16 %v2574, %v2570
        %v2931 = vpack.c.b16 %v2575, %v2571
        %v2932 = vpack.c.b16 %v2580, %v2576
        %v2933 = vpack.c.b16 %v2581, %v2577
        %v2934 = vpack.c.b16 %v2582, %v2578
        %v2935 = vpack.c.b16 %v2583, %v2579
        %v2936 = vpack.c.b16 %v2588, %v2584
        %v2937 = vpack.c.b16 %v2589, %v2585
        %v2938 = vpack.c.b16 %v2590, %v2586
        %v2939 = vpack.c.b16 %v2591, %v2587
        %v2940 = vpack.c.b16 %v2596, %v2592
        %v2941 = vpack.c.b16 %v2597, %v2593
        %v2942 = vpack.c.b16 %v2598, %v2594
        %v2943 = vpack.c.b16 %v2599, %v2595
        %v2944 = vpack.c.b16 %v2604, %v2600
        %v2945 = vpack.c.b16 %v2605, %v2601
        %v2946 = vpack.c.b16 %v2606, %v2602
        %v2947 = vpack.c.b16 %v2607, %v2603
        %v2948 = vpack.c.b16 %v2612, %v2608
        %v2949 = vpack.c.b16 %v2613, %v2609
        %v2950 = vpack.c.b16 %v2614, %v2610
        %v2951 = vpack.c.b16 %v2615, %v2611
        %v2952 = vpack.c.b16 %v2620, %v2616
        %v2953 = vpack.c.b16 %v2621, %v2617
        %v2954 = vpack.c.b16 %v2622, %v2618
        %v2955 = vpack.c.b16 %v2623, %v2619
        %v2956 = vpack.c.b16 %v2628, %v2624
        %v2957 = vpack.c.b16 %v2629, %v2625
        %v2958 = vpack.c.b16 %v2630, %v2626
        %v2959 = vpack.c.b16 %v2631, %v2627
        %v2960 = vpack.c.b16 %v2636, %v2632
        %v2961 = vpack.c.b16 %v2637, %v2633
        %v2962 = vpack.c.b16 %v2638, %v2634
        %v2963 = vpack.c.b16 %v2639, %v2635
        %v2964 = vpack.c.b16 %v2644, %v2640
        %v2965 = vpack.c.b16 %v2645, %v2641
        %v2966 = vpack.c.b16 %v2646, %v2642
        %v2967 = vpack.c.b16 %v2647, %v2643
        %v2968 = vpack.c.b16 %v2652, %v2648
        %v2969 = vpack.c.b16 %v2653, %v2649
        %v2970 = vpack.c.b16 %v2654, %v2650
        %v2971 = vpack.c.b16 %v2655, %v2651
        %v2972 = vpack.c.b16 %v2660, %v2656
        %v2973 = vpack.c.b16 %v2661, %v2657
        %v2974 = vpack.c.b16 %v2662, %v2658
        %v2975 = vpack.c.b16 %v2663, %v2659
        %v2976 = vpack.c.b16 %v2668, %v2664
        %v2977 = vpack.c.b16 %v2669, %v2665
        %v2978 = vpack.c.b16 %v2670, %v2666
        %v2979 = vpack.c.b16 %v2671, %v2667
        %v2980 = vpack.c.b16 %v2676, %v2672
        %v2981 = vpack.c.b16 %v2677, %v2673
        %v2982 = vpack.c.b16 %v2678, %v2674
        %v2983 = vpack.c.b16 %v2679, %v2675
        %v2984 = vpack.c.b16 %v2684, %v2680
        %v2985 = vpack.c.b16 %v2685, %v2681
        %v2986 = vpack.c.b16 %v2686, %v2682
        %v2987 = vpack.c.b16 %v2687, %v2683
        %v2988 = vpack.c.b16 %v2692, %v2688
        %v2989 = vpack.c.b16 %v2693, %v2689
        %v2990 = vpack.c.b16 %v2694, %v2690
        %v2991 = vpack.c.b16 %v2695, %v2691
        %v2992 = vpack.c.b16 %v2700, %v2696
        %v2993 = vpack.c.b16 %v2701, %v2697
        %v2994 = vpack.c.b16 %v2702, %v2698
        %v2995 = vpack.c.b16 %v2703, %v2699
        %v2996 = vpack.c.b16 %v2708, %v2704
        %v2997 = vpack.c.b16 %v2709, %v2705
        %v2998 = vpack.c.b16 %v2710, %v2706
        %v2999 = vpack.c.b16 %v2711, %v2707
        %v3000 = vpack.c.b16 %v2716, %v2712
        %v3001 = vpack.c.b16 %v2717, %v2713
        %v3002 = vpack.c.b16 %v2718, %v2714
        %v3003 = vpack.c.b16 %v2719, %v2715
        %v3004 = vpack.c.b16 %v2724, %v2720
        %v3005 = vpack.c.b16 %v2725, %v2721
        %v3006 = vpack.c.b16 %v2726, %v2722
        %v3007 = vpack.c.b16 %v2727, %v2723
        %v3008 = vpack.c.b16 %v2732, %v2728
        %v3009 = vpack.c.b16 %v2733, %v2729
        %v3010 = vpack.c.b16 %v2734, %v2730
        %v3011 = vpack.c.b16 %v2735, %v2731
        %v3012 = vpack.c.b16 %v2740, %v2736
        %v3013 = vpack.c.b16 %v2741, %v2737
        %v3014 = vpack.c.b16 %v2742, %v2738
        %v3015 = vpack.c.b16 %v2743, %v2739
        %v3016 = vpack.c.b16 %v2748, %v2744
        %v3017 = vpack.c.b16 %v2749, %v2745
        %v3018 = vpack.c.b16 %v2750, %v2746
        %v3019 = vpack.c.b16 %v2751, %v2747
        %v3020 = vpack.c.b16 %v2756, %v2752
        %v3021 = vpack.c.b16 %v2757, %v2753
        %v3022 = vpack.c.b16 %v2758, %v2754
        %v3023 = vpack.c.b16 %v2759, %v2755
        %v3024 = vpack.c.b16 %v2764, %v2760
        %v3025 = vpack.c.b16 %v2765, %v2761
        %v3026 = vpack.c.b16 %v2766, %v2762
        %v3027 = vpack.c.b16 %v2767, %v2763
        %v3028 = vpack.c.b16 %v2772, %v2768
        %v3029 = vpack.c.b16 %v2773, %v2769
        %v3030 = vpack.c.b16 %v2774, %v2770
        %v3031 = vpack.c.b16 %v2775, %v2771
        %v3289 = vlaneseq
        %v3290 = vshrl.u32 %v3289, 7
        %v3291 = vsub.s32 0, %v3290
        %v3292 = vrot.slane %v2007, %v3291
        %v3293 = vlaneseq
        %v3294 = vshrl.u32 %v3293, 7
        %v3295 = vsub.s32 1, %v3294
        %v3296 = vrot.slane %v2007, %v3295
        %v3297 = vlaneseq
        %v3298 = vshrl.u32 %v3297, 7
        %v3299 = vsub.s32 2, %v3298
        %v3300 = vrot.slane %v2007, %v3299
        %v3301 = vlaneseq
        %v3302 = vshrl.u32 %v3301, 7
        %v3303 = vsub.s32 3, %v3302
        %v3304 = vrot.slane %v2007, %v3303
        %3309 = vmatprep.subr.bf16.mxu0 %v2777
        %3310 = vmatpush1.bf16.msra.mxu0 %v2776
        %3311 = vmatprep.subr.bf16.mxu0 %v2781
        %3312 = vmatpush1.bf16.msra.mxu0 %v2780
        %3313 = vmatprep.subr.bf16.mxu0 %v2785
        %3314 = vmatpush1.bf16.msra.mxu0 %v2784
        %3315 = vmatprep.subr.bf16.mxu0 %v2789
        %3316 = vmatpush1.bf16.msra.mxu0 %v2788
        %3317 = vmatprep.subr.bf16.mxu0 %v2793
        %3318 = vmatpush1.bf16.msra.mxu0 %v2792
        %3319 = vmatprep.subr.bf16.mxu0 %v2797
        %3320 = vmatpush1.bf16.msra.mxu0 %v2796
        %3321 = vmatprep.subr.bf16.mxu0 %v2801
        %3322 = vmatpush1.bf16.msra.mxu0 %v2800
        %3323 = vmatprep.subr.bf16.mxu0 %v2805
        %3324 = vmatpush1.bf16.msra.mxu0 %v2804
        %3325 = vmatprep.subr.bf16.mxu0 %v2809
        %3326 = vmatpush1.bf16.msra.mxu0 %v2808
        %3327 = vmatprep.subr.bf16.mxu0 %v2813
        %3328 = vmatpush1.bf16.msra.mxu0 %v2812
        %3329 = vmatprep.subr.bf16.mxu0 %v2817
        %3330 = vmatpush1.bf16.msra.mxu0 %v2816
        %3331 = vmatprep.subr.bf16.mxu0 %v2821
        %3332 = vmatpush1.bf16.msra.mxu0 %v2820
        %3333 = vmatprep.subr.bf16.mxu0 %v2825
        %3334 = vmatpush1.bf16.msra.mxu0 %v2824
        %3335 = vmatprep.subr.bf16.mxu0 %v2829
        %3336 = vmatpush1.bf16.msra.mxu0 %v2828
        %3337 = vmatprep.subr.bf16.mxu0 %v2833
        %3338 = vmatpush1.bf16.msra.mxu0 %v2832
        %3339 = vmatprep.subr.bf16.mxu0 %v2837
        %3340 = vmatpush1.bf16.msra.mxu0 %v2836
        %3341 = vmatprep.mubr.bf16.mxu0 %v1690
        %3342 = vmatmul.mubr.bf16.gmra.mrb[0].mxu0 %v1680
        %v3343 = vpop.f32.mrb[0].mxu0
        %v3344 = vadd.f32 %v3292, %v3343
        %v3345 = vpop.f32.mrb[0].mxu0
        %v3346 = vadd.f32 %v3296, %v3345
        %v3347 = vpop.f32.mrb[0].mxu0
        %v3348 = vpop.f32.mrb[0].mxu0
        %3349 = vdwg.mxu0
        %3350 = vmatprep.subr.bf16.mxu0 %v2841
        %3351 = vmatpush1.bf16.msra.mxu0 %v2840
        %3352 = vmatprep.subr.bf16.mxu0 %v2845
        %3353 = vmatpush1.bf16.msra.mxu0 %v2844
        %3354 = vmatprep.subr.bf16.mxu0 %v2849
        %3355 = vmatpush1.bf16.msra.mxu0 %v2848
        %3356 = vmatprep.subr.bf16.mxu0 %v2853
        %3357 = vmatpush1.bf16.msra.mxu0 %v2852
        %3358 = vmatprep.subr.bf16.mxu0 %v2857
        %3359 = vmatpush1.bf16.msra.mxu0 %v2856
        %3360 = vmatprep.subr.bf16.mxu0 %v2861
        %3361 = vmatpush1.bf16.msra.mxu0 %v2860
        %3362 = vmatprep.subr.bf16.mxu0 %v2865
        %3363 = vmatpush1.bf16.msra.mxu0 %v2864
        %3364 = vmatprep.subr.bf16.mxu0 %v2869
        %3365 = vmatpush1.bf16.msra.mxu0 %v2868
        %3366 = vmatprep.subr.bf16.mxu0 %v2873
        %3367 = vmatpush1.bf16.msra.mxu0 %v2872
        %3368 = vmatprep.subr.bf16.mxu0 %v2877
        %3369 = vmatpush1.bf16.msra.mxu0 %v2876
        %3370 = vmatprep.subr.bf16.mxu0 %v2881
        %3371 = vmatpush1.bf16.msra.mxu0 %v2880
        %3372 = vmatprep.subr.bf16.mxu0 %v2885
        %3373 = vmatpush1.bf16.msra.mxu0 %v2884
        %3374 = vmatprep.subr.bf16.mxu0 %v2889
        %3375 = vmatpush1.bf16.msra.mxu0 %v2888
        %3376 = vmatprep.subr.bf16.mxu0 %v2893
        %3377 = vmatpush1.bf16.msra.mxu0 %v2892
        %3378 = vmatprep.subr.bf16.mxu0 %v2897
        %3379 = vmatpush1.bf16.msra.mxu0 %v2896
        %3380 = vmatprep.subr.bf16.mxu0 %v2901
        %3381 = vmatpush1.bf16.msra.mxu0 %v2900
        %3382 = vmatprep.mubr.bf16.mxu0 %v1710
        %3383 = vmatmul.mubr.bf16.gmra.mrb[0].mxu0 %v1700
        %v3384 = vpop.f32.mrb[0].mxu0
        %v3385 = vadd.f32 %v3344, %v3384
        %v3386 = vpop.f32.mrb[0].mxu0
        %v3387 = vadd.f32 %v3346, %v3386
        %v3388 = vpop.f32.mrb[0].mxu0
        %v3389 = vpop.f32.mrb[0].mxu0
        %3390 = vdwg.mxu0
        %3391 = vmatprep.subr.bf16.mxu0 %v2905
        %3392 = vmatpush1.bf16.msra.mxu0 %v2904
        %3393 = vmatprep.subr.bf16.mxu0 %v2909
        %3394 = vmatpush1.bf16.msra.mxu0 %v2908
        %3395 = vmatprep.subr.bf16.mxu0 %v2913
        %3396 = vmatpush1.bf16.msra.mxu0 %v2912
        %3397 = vmatprep.subr.bf16.mxu0 %v2917
        %3398 = vmatpush1.bf16.msra.mxu0 %v2916
        %3399 = vmatprep.subr.bf16.mxu0 %v2921
        %3400 = vmatpush1.bf16.msra.mxu0 %v2920
        %3401 = vmatprep.subr.bf16.mxu0 %v2925
        %3402 = vmatpush1.bf16.msra.mxu0 %v2924
        %3403 = vmatprep.subr.bf16.mxu0 %v2929
        %3404 = vmatpush1.bf16.msra.mxu0 %v2928
        %3405 = vmatprep.subr.bf16.mxu0 %v2933
        %3406 = vmatpush1.bf16.msra.mxu0 %v2932
        %3407 = vmatprep.subr.bf16.mxu0 %v2937
        %3408 = vmatpush1.bf16.msra.mxu0 %v2936
        %3409 = vmatprep.subr.bf16.mxu0 %v2941
        %3410 = vmatpush1.bf16.msra.mxu0 %v2940
        %3411 = vmatprep.subr.bf16.mxu0 %v2945
        %3412 = vmatpush1.bf16.msra.mxu0 %v2944
        %3413 = vmatprep.subr.bf16.mxu0 %v2949
        %3414 = vmatpush1.bf16.msra.mxu0 %v2948
        %3415 = vmatprep.subr.bf16.mxu0 %v2953
        %3416 = vmatpush1.bf16.msra.mxu0 %v2952
        %3417 = vmatprep.subr.bf16.mxu0 %v2957
        %3418 = vmatpush1.bf16.msra.mxu0 %v2956
        %3419 = vmatprep.subr.bf16.mxu0 %v2961
        %3420 = vmatpush1.bf16.msra.mxu0 %v2960
        %3421 = vmatprep.subr.bf16.mxu0 %v2965
        %3422 = vmatpush1.bf16.msra.mxu0 %v2964
        %3423 = vmatprep.mubr.bf16.mxu0 %v1730
        %3424 = vmatmul.mubr.bf16.gmra.mrb[0].mxu0 %v1720
        %v3425 = vpop.f32.mrb[0].mxu0
        %v3426 = vadd.f32 %v3385, %v3425
        %v3427 = vpop.f32.mrb[0].mxu0
        %v3428 = vadd.f32 %v3387, %v3427
        %v3429 = vpop.f32.mrb[0].mxu0
        %v3430 = vpop.f32.mrb[0].mxu0
        %3431 = vdwg.mxu0
        %3432 = vmatprep.subr.bf16.mxu0 %v2969
        %3433 = vmatpush1.bf16.msra.mxu0 %v2968
        %3434 = vmatprep.subr.bf16.mxu0 %v2973
        %3435 = vmatpush1.bf16.msra.mxu0 %v2972
        %3436 = vmatprep.subr.bf16.mxu0 %v2977
        %3437 = vmatpush1.bf16.msra.mxu0 %v2976
        %3438 = vmatprep.subr.bf16.mxu0 %v2981
        %3439 = vmatpush1.bf16.msra.mxu0 %v2980
        %3440 = vmatprep.subr.bf16.mxu0 %v2985
        %3441 = vmatpush1.bf16.msra.mxu0 %v2984
        %3442 = vmatprep.subr.bf16.mxu0 %v2989
        %3443 = vmatpush1.bf16.msra.mxu0 %v2988
        %3444 = vmatprep.subr.bf16.mxu0 %v2993
        %3445 = vmatpush1.bf16.msra.mxu0 %v2992
        %3446 = vmatprep.subr.bf16.mxu0 %v2997
        %3447 = vmatpush1.bf16.msra.mxu0 %v2996
        %3448 = vmatprep.subr.bf16.mxu0 %v3001
        %3449 = vmatpush1.bf16.msra.mxu0 %v3000
        %3450 = vmatprep.subr.bf16.mxu0 %v3005
        %3451 = vmatpush1.bf16.msra.mxu0 %v3004
        %3452 = vmatprep.subr.bf16.mxu0 %v3009
        %3453 = vmatpush1.bf16.msra.mxu0 %v3008
        %3454 = vmatprep.subr.bf16.mxu0 %v3013
        %3455 = vmatpush1.bf16.msra.mxu0 %v3012
        %3456 = vmatprep.subr.bf16.mxu0 %v3017
        %3457 = vmatpush1.bf16.msra.mxu0 %v3016
        %3458 = vmatprep.subr.bf16.mxu0 %v3021
        %3459 = vmatpush1.bf16.msra.mxu0 %v3020
        %3460 = vmatprep.subr.bf16.mxu0 %v3025
        %3461 = vmatpush1.bf16.msra.mxu0 %v3024
        %3462 = vmatprep.subr.bf16.mxu0 %v3029
        %3463 = vmatpush1.bf16.msra.mxu0 %v3028
        %3464 = vmatprep.mubr.bf16.mxu0 %v1750
        %3465 = vmatmul.mubr.bf16.gmra.mrb[0].mxu0 %v1740
        %v3466 = vpop.f32.mrb[0].mxu0
        %v3467 = vadd.f32 %v3426, %v3466
        %v3468 = vpop.f32.mrb[0].mxu0
        %v3469 = vadd.f32 %v3428, %v3468
        %v3470 = vpop.f32.mrb[0].mxu0
        %v3471 = vpop.f32.mrb[0].mxu0
        %3472 = vdwg.mxu0
        %3473 = vmatprep.subr.bf16.mxu0 %v2779
        %3474 = vmatpush1.bf16.msra.mxu0 %v2778
        %3475 = vmatprep.subr.bf16.mxu0 %v2783
        %3476 = vmatpush1.bf16.msra.mxu0 %v2782
        %3477 = vmatprep.subr.bf16.mxu0 %v2787
        %3478 = vmatpush1.bf16.msra.mxu0 %v2786
        %3479 = vmatprep.subr.bf16.mxu0 %v2791
        %3480 = vmatpush1.bf16.msra.mxu0 %v2790
        %3481 = vmatprep.subr.bf16.mxu0 %v2795
        %3482 = vmatpush1.bf16.msra.mxu0 %v2794
        %3483 = vmatprep.subr.bf16.mxu0 %v2799
        %3484 = vmatpush1.bf16.msra.mxu0 %v2798
        %3485 = vmatprep.subr.bf16.mxu0 %v2803
        %3486 = vmatpush1.bf16.msra.mxu0 %v2802
        %3487 = vmatprep.subr.bf16.mxu0 %v2807
        %3488 = vmatpush1.bf16.msra.mxu0 %v2806
        %3489 = vmatprep.subr.bf16.mxu0 %v2811
        %3490 = vmatpush1.bf16.msra.mxu0 %v2810
        %3491 = vmatprep.subr.bf16.mxu0 %v2815
        %3492 = vmatpush1.bf16.msra.mxu0 %v2814
        %3493 = vmatprep.subr.bf16.mxu0 %v2819
        %3494 = vmatpush1.bf16.msra.mxu0 %v2818
        %3495 = vmatprep.subr.bf16.mxu0 %v2823
        %3496 = vmatpush1.bf16.msra.mxu0 %v2822
        %3497 = vmatprep.subr.bf16.mxu0 %v2827
        %3498 = vmatpush1.bf16.msra.mxu0 %v2826
        %3499 = vmatprep.subr.bf16.mxu0 %v2831
        %3500 = vmatpush1.bf16.msra.mxu0 %v2830
        %3501 = vmatprep.subr.bf16.mxu0 %v2835
        %3502 = vmatpush1.bf16.msra.mxu0 %v2834
        %3503 = vmatprep.subr.bf16.mxu0 %v2839
        %3504 = vmatpush1.bf16.msra.mxu0 %v2838
        %3505 = vmatprep.mubr.bf16.mxu0 %v1690
        %3506 = vmatmul.mubr.bf16.gmra.mrb[0].mxu0 %v1680
        %v3507 = vpop.f32.mrb[0].mxu0
        %v3508 = vadd.f32 %v3300, %v3507
        %v3509 = vpop.f32.mrb[0].mxu0
        %v3510 = vadd.f32 %v3304, %v3509
        %v3511 = vpop.f32.mrb[0].mxu0
        %v3512 = vpop.f32.mrb[0].mxu0
        %3513 = vdwg.mxu0
        %3514 = vmatprep.subr.bf16.mxu0 %v2843
        %3515 = vmatpush1.bf16.msra.mxu0 %v2842
        %3516 = vmatprep.subr.bf16.mxu0 %v2847
        %3517 = vmatpush1.bf16.msra.mxu0 %v2846
        %3518 = vmatprep.subr.bf16.mxu0 %v2851
        %3519 = vmatpush1.bf16.msra.mxu0 %v2850
        %3520 = vmatprep.subr.bf16.mxu0 %v2855
        %3521 = vmatpush1.bf16.msra.mxu0 %v2854
        %3522 = vmatprep.subr.bf16.mxu0 %v2859
        %3523 = vmatpush1.bf16.msra.mxu0 %v2858
        %3524 = vmatprep.subr.bf16.mxu0 %v2863
        %3525 = vmatpush1.bf16.msra.mxu0 %v2862
        %3526 = vmatprep.subr.bf16.mxu0 %v2867
        %3527 = vmatpush1.bf16.msra.mxu0 %v2866
        %3528 = vmatprep.subr.bf16.mxu0 %v2871
        %3529 = vmatpush1.bf16.msra.mxu0 %v2870
        %3530 = vmatprep.subr.bf16.mxu0 %v2875
        %3531 = vmatpush1.bf16.msra.mxu0 %v2874
        %3532 = vmatprep.subr.bf16.mxu0 %v2879
        %3533 = vmatpush1.bf16.msra.mxu0 %v2878
        %3534 = vmatprep.subr.bf16.mxu0 %v2883
        %3535 = vmatpush1.bf16.msra.mxu0 %v2882
        %3536 = vmatprep.subr.bf16.mxu0 %v2887
        %3537 = vmatpush1.bf16.msra.mxu0 %v2886
        %3538 = vmatprep.subr.bf16.mxu0 %v2891
        %3539 = vmatpush1.bf16.msra.mxu0 %v2890
        %3540 = vmatprep.subr.bf16.mxu0 %v2895
        %3541 = vmatpush1.bf16.msra.mxu0 %v2894
        %3542 = vmatprep.subr.bf16.mxu0 %v2899
        %3543 = vmatpush1.bf16.msra.mxu0 %v2898
        %3544 = vmatprep.subr.bf16.mxu0 %v2903
        %3545 = vmatpush1.bf16.msra.mxu0 %v2902
        %3546 = vmatprep.mubr.bf16.mxu0 %v1710
        %3547 = vmatmul.mubr.bf16.gmra.mrb[0].mxu0 %v1700
        %v3548 = vpop.f32.mrb[0].mxu0
        %v3549 = vadd.f32 %v3508, %v3548
        %v3550 = vpop.f32.mrb[0].mxu0
        %v3551 = vadd.f32 %v3510, %v3550
        %v3552 = vpop.f32.mrb[0].mxu0
        %v3553 = vpop.f32.mrb[0].mxu0
        %3554 = vdwg.mxu0
        %3555 = vmatprep.subr.bf16.mxu0 %v2907
        %3556 = vmatpush1.bf16.msra.mxu0 %v2906
        %3557 = vmatprep.subr.bf16.mxu0 %v2911
        %3558 = vmatpush1.bf16.msra.mxu0 %v2910
        %3559 = vmatprep.subr.bf16.mxu0 %v2915
        %3560 = vmatpush1.bf16.msra.mxu0 %v2914
        %3561 = vmatprep.subr.bf16.mxu0 %v2919
        %3562 = vmatpush1.bf16.msra.mxu0 %v2918
        %3563 = vmatprep.subr.bf16.mxu0 %v2923
        %3564 = vmatpush1.bf16.msra.mxu0 %v2922
        %3565 = vmatprep.subr.bf16.mxu0 %v2927
        %3566 = vmatpush1.bf16.msra.mxu0 %v2926
        %3567 = vmatprep.subr.bf16.mxu0 %v2931
        %3568 = vmatpush1.bf16.msra.mxu0 %v2930
        %3569 = vmatprep.subr.bf16.mxu0 %v2935
        %3570 = vmatpush1.bf16.msra.mxu0 %v2934
        %3571 = vmatprep.subr.bf16.mxu0 %v2939
        %3572 = vmatpush1.bf16.msra.mxu0 %v2938
        %3573 = vmatprep.subr.bf16.mxu0 %v2943
        %3574 = vmatpush1.bf16.msra.mxu0 %v2942
        %3575 = vmatprep.subr.bf16.mxu0 %v2947
        %3576 = vmatpush1.bf16.msra.mxu0 %v2946
        %3577 = vmatprep.subr.bf16.mxu0 %v2951
        %3578 = vmatpush1.bf16.msra.mxu0 %v2950
        %3579 = vmatprep.subr.bf16.mxu0 %v2955
        %3580 = vmatpush1.bf16.msra.mxu0 %v2954
        %3581 = vmatprep.subr.bf16.mxu0 %v2959
        %3582 = vmatpush1.bf16.msra.mxu0 %v2958
        %3583 = vmatprep.subr.bf16.mxu0 %v2963
        %3584 = vmatpush1.bf16.msra.mxu0 %v2962
        %3585 = vmatprep.subr.bf16.mxu0 %v2967
        %3586 = vmatpush1.bf16.msra.mxu0 %v2966
        %3587 = vmatprep.mubr.bf16.mxu0 %v1730
        %3588 = vmatmul.mubr.bf16.gmra.mrb[0].mxu0 %v1720
        %v3589 = vpop.f32.mrb[0].mxu0
        %v3590 = vadd.f32 %v3549, %v3589
        %v3591 = vpop.f32.mrb[0].mxu0
        %v3592 = vadd.f32 %v3551, %v3591
        %v3593 = vpop.f32.mrb[0].mxu0
        %v3594 = vpop.f32.mrb[0].mxu0
        %3595 = vdwg.mxu0
        %3596 = vmatprep.subr.bf16.mxu0 %v2971
        %3597 = vmatpush1.bf16.msra.mxu0 %v2970
        %3598 = vmatprep.subr.bf16.mxu0 %v2975
        %3599 = vmatpush1.bf16.msra.mxu0 %v2974
        %3600 = vmatprep.subr.bf16.mxu0 %v2979
        %3601 = vmatpush1.bf16.msra.mxu0 %v2978
        %3602 = vmatprep.subr.bf16.mxu0 %v2983
        %3603 = vmatpush1.bf16.msra.mxu0 %v2982
        %3604 = vmatprep.subr.bf16.mxu0 %v2987
        %3605 = vmatpush1.bf16.msra.mxu0 %v2986
        %3606 = vmatprep.subr.bf16.mxu0 %v2991
        %3607 = vmatpush1.bf16.msra.mxu0 %v2990
        %3608 = vmatprep.subr.bf16.mxu0 %v2995
        %3609 = vmatpush1.bf16.msra.mxu0 %v2994
        %3610 = vmatprep.subr.bf16.mxu0 %v2999
        %3611 = vmatpush1.bf16.msra.mxu0 %v2998
        %3612 = vmatprep.subr.bf16.mxu0 %v3003
        %3613 = vmatpush1.bf16.msra.mxu0 %v3002
        %3614 = vmatprep.subr.bf16.mxu0 %v3007
        %3615 = vmatpush1.bf16.msra.mxu0 %v3006
        %3616 = vmatprep.subr.bf16.mxu0 %v3011
        %3617 = vmatpush1.bf16.msra.mxu0 %v3010
        %3618 = vmatprep.subr.bf16.mxu0 %v3015
        %3619 = vmatpush1.bf16.msra.mxu0 %v3014
        %3620 = vmatprep.subr.bf16.mxu0 %v3019
        %3621 = vmatpush1.bf16.msra.mxu0 %v3018
        %3622 = vmatprep.subr.bf16.mxu0 %v3023
        %3623 = vmatpush1.bf16.msra.mxu0 %v3022
        %3624 = vmatprep.subr.bf16.mxu0 %v3027
        %3625 = vmatpush1.bf16.msra.mxu0 %v3026
        %3626 = vmatprep.subr.bf16.mxu0 %v3031
        %3627 = vmatpush1.bf16.msra.mxu0 %v3030
        %3628 = vmatprep.mubr.bf16.mxu0 %v1750
        %3629 = vmatmul.mubr.bf16.gmra.mrb[0].mxu0 %v1740
        %v3630 = vpop.f32.mrb[0].mxu0
        %v3631 = vadd.f32 %v3590, %v3630
        %v3632 = vpop.f32.mrb[0].mxu0
        %v3633 = vadd.f32 %v3592, %v3632
        %v3634 = vpop.f32.mrb[0].mxu0
        %v3635 = vpop.f32.mrb[0].mxu0
        %3636 = vdwg.mxu0
        %v3637 = vld [vmem:[#allocation14] sm:$0xff]
        %v3638 = vld [vmem:[#allocation14 + $0x8] sm:$0xff]
        %v3639 = vld [vmem:[#allocation14 + $0x10] sm:$0xff]
        %v3640 = vld [vmem:[#allocation14 + $0x18] sm:$0xff]
        %v3641 = vld [vmem:[#allocation14 + $0x20] sm:$0xff]
        %v3642 = vld [vmem:[#allocation14 + $0x28] sm:$0xff]
        %v3643 = vld [vmem:[#allocation14 + $0x30] sm:$0xff]
        %v3644 = vld [vmem:[#allocation14 + $0x38] sm:$0xff]
        %v3645 = vld [vmem:[#allocation14 + $0x40] sm:$0xff]
        %v3646 = vld [vmem:[#allocation14 + $0x48] sm:$0xff]
        %v3647 = vld [vmem:[#allocation14 + $0x50] sm:$0xff]
        %v3648 = vld [vmem:[#allocation14 + $0x58] sm:$0xff]
        %v3649 = vld [vmem:[#allocation14 + $0x60] sm:$0xff]
        %v3650 = vld [vmem:[#allocation14 + $0x68] sm:$0xff]
        %v3651 = vld [vmem:[#allocation14 + $0x70] sm:$0xff]
        %v3652 = vld [vmem:[#allocation14 + $0x78] sm:$0xff]
        %v3653 = vld [vmem:[#allocation14 + $0x80] sm:$0xff]
        %v3654 = vld [vmem:[#allocation14 + $0x88] sm:$0xff]
        %v3655 = vld [vmem:[#allocation14 + $0x90] sm:$0xff]
        %v3656 = vld [vmem:[#allocation14 + $0x98] sm:$0xff]
        %v3657 = vld [vmem:[#allocation14 + $0xa0] sm:$0xff]
        %v3658 = vld [vmem:[#allocation14 + $0xa8] sm:$0xff]
        %v3659 = vld [vmem:[#allocation14 + $0xb0] sm:$0xff]
        %v3660 = vld [vmem:[#allocation14 + $0xb8] sm:$0xff]
        %v3661 = vld [vmem:[#allocation14 + $0xc0] sm:$0xff]
        %v3662 = vld [vmem:[#allocation14 + $0xc8] sm:$0xff]
        %v3663 = vld [vmem:[#allocation14 + $0xd0] sm:$0xff]
        %v3664 = vld [vmem:[#allocation14 + $0xd8] sm:$0xff]
        %v3665 = vld [vmem:[#allocation14 + $0xe0] sm:$0xff]
        %v3666 = vld [vmem:[#allocation14 + $0xe8] sm:$0xff]
        %v3667 = vld [vmem:[#allocation14 + $0xf0] sm:$0xff]
        %v3668 = vld [vmem:[#allocation14 + $0xf8] sm:$0xff]
        %v3669 = vld [vmem:[#allocation14 + $0x100] sm:$0xff]
        %v3670 = vld [vmem:[#allocation14 + $0x108] sm:$0xff]
        %v3671 = vld [vmem:[#allocation14 + $0x110] sm:$0xff]
        %v3672 = vld [vmem:[#allocation14 + $0x118] sm:$0xff]
        %v3673 = vld [vmem:[#allocation14 + $0x120] sm:$0xff]
        %v3674 = vld [vmem:[#allocation14 + $0x128] sm:$0xff]
        %v3675 = vld [vmem:[#allocation14 + $0x130] sm:$0xff]
        %v3676 = vld [vmem:[#allocation14 + $0x138] sm:$0xff]
        %v3677 = vld [vmem:[#allocation14 + $0x140] sm:$0xff]
        %v3678 = vld [vmem:[#allocation14 + $0x148] sm:$0xff]
        %v3679 = vld [vmem:[#allocation14 + $0x150] sm:$0xff]
        %v3680 = vld [vmem:[#allocation14 + $0x158] sm:$0xff]
        %v3681 = vld [vmem:[#allocation14 + $0x160] sm:$0xff]
        %v3682 = vld [vmem:[#allocation14 + $0x168] sm:$0xff]
        %v3683 = vld [vmem:[#allocation14 + $0x170] sm:$0xff]
        %v3684 = vld [vmem:[#allocation14 + $0x178] sm:$0xff]
        %v3685 = vld [vmem:[#allocation14 + $0x180] sm:$0xff]
        %v3686 = vld [vmem:[#allocation14 + $0x188] sm:$0xff]
        %v3687 = vld [vmem:[#allocation14 + $0x190] sm:$0xff]
        %v3688 = vld [vmem:[#allocation14 + $0x198] sm:$0xff]
        %v3689 = vld [vmem:[#allocation14 + $0x1a0] sm:$0xff]
        %v3690 = vld [vmem:[#allocation14 + $0x1a8] sm:$0xff]
        %v3691 = vld [vmem:[#allocation14 + $0x1b0] sm:$0xff]
        %v3692 = vld [vmem:[#allocation14 + $0x1b8] sm:$0xff]
        %v3693 = vld [vmem:[#allocation14 + $0x1c0] sm:$0xff]
        %v3694 = vld [vmem:[#allocation14 + $0x1c8] sm:$0xff]
        %v3695 = vld [vmem:[#allocation14 + $0x1d0] sm:$0xff]
        %v3696 = vld [vmem:[#allocation14 + $0x1d8] sm:$0xff]
        %v3697 = vld [vmem:[#allocation14 + $0x1e0] sm:$0xff]
        %v3698 = vld [vmem:[#allocation14 + $0x1e8] sm:$0xff]
        %v3699 = vld [vmem:[#allocation14 + $0x1f0] sm:$0xff]
        %v3700 = vld [vmem:[#allocation14 + $0x1f8] sm:$0xff]
        %v3701 = vld [vmem:[#allocation14 + $0x200] sm:$0xff]
        %v3702 = vld [vmem:[#allocation14 + $0x208] sm:$0xff]
        %v3703 = vld [vmem:[#allocation14 + $0x210] sm:$0xff]
        %v3704 = vld [vmem:[#allocation14 + $0x218] sm:$0xff]
        %v3705 = vld [vmem:[#allocation14 + $0x220] sm:$0xff]
        %v3706 = vld [vmem:[#allocation14 + $0x228] sm:$0xff]
        %v3707 = vld [vmem:[#allocation14 + $0x230] sm:$0xff]
        %v3708 = vld [vmem:[#allocation14 + $0x238] sm:$0xff]
        %v3709 = vld [vmem:[#allocation14 + $0x240] sm:$0xff]
        %v3710 = vld [vmem:[#allocation14 + $0x248] sm:$0xff]
        %v3711 = vld [vmem:[#allocation14 + $0x250] sm:$0xff]
        %v3712 = vld [vmem:[#allocation14 + $0x258] sm:$0xff]
        %v3713 = vld [vmem:[#allocation14 + $0x260] sm:$0xff]
        %v3714 = vld [vmem:[#allocation14 + $0x268] sm:$0xff]
        %v3715 = vld [vmem:[#allocation14 + $0x270] sm:$0xff]
        %v3716 = vld [vmem:[#allocation14 + $0x278] sm:$0xff]
        %v3717 = vld [vmem:[#allocation14 + $0x280] sm:$0xff]
        %v3718 = vld [vmem:[#allocation14 + $0x288] sm:$0xff]
        %v3719 = vld [vmem:[#allocation14 + $0x290] sm:$0xff]
        %v3720 = vld [vmem:[#allocation14 + $0x298] sm:$0xff]
        %v3721 = vld [vmem:[#allocation14 + $0x2a0] sm:$0xff]
        %v3722 = vld [vmem:[#allocation14 + $0x2a8] sm:$0xff]
        %v3723 = vld [vmem:[#allocation14 + $0x2b0] sm:$0xff]
        %v3724 = vld [vmem:[#allocation14 + $0x2b8] sm:$0xff]
        %v3725 = vld [vmem:[#allocation14 + $0x2c0] sm:$0xff]
        %v3726 = vld [vmem:[#allocation14 + $0x2c8] sm:$0xff]
        %v3727 = vld [vmem:[#allocation14 + $0x2d0] sm:$0xff]
        %v3728 = vld [vmem:[#allocation14 + $0x2d8] sm:$0xff]
        %v3729 = vld [vmem:[#allocation14 + $0x2e0] sm:$0xff]
        %v3730 = vld [vmem:[#allocation14 + $0x2e8] sm:$0xff]
        %v3731 = vld [vmem:[#allocation14 + $0x2f0] sm:$0xff]
        %v3732 = vld [vmem:[#allocation14 + $0x2f8] sm:$0xff]
        %v3733 = vld [vmem:[#allocation14 + $0x300] sm:$0xff]
        %v3734 = vld [vmem:[#allocation14 + $0x308] sm:$0xff]
        %v3735 = vld [vmem:[#allocation14 + $0x310] sm:$0xff]
        %v3736 = vld [vmem:[#allocation14 + $0x318] sm:$0xff]
        %v3737 = vld [vmem:[#allocation14 + $0x320] sm:$0xff]
        %v3738 = vld [vmem:[#allocation14 + $0x328] sm:$0xff]
        %v3739 = vld [vmem:[#allocation14 + $0x330] sm:$0xff]
        %v3740 = vld [vmem:[#allocation14 + $0x338] sm:$0xff]
        %v3741 = vld [vmem:[#allocation14 + $0x340] sm:$0xff]
        %v3742 = vld [vmem:[#allocation14 + $0x348] sm:$0xff]
        %v3743 = vld [vmem:[#allocation14 + $0x350] sm:$0xff]
        %v3744 = vld [vmem:[#allocation14 + $0x358] sm:$0xff]
        %v3745 = vld [vmem:[#allocation14 + $0x360] sm:$0xff]
        %v3746 = vld [vmem:[#allocation14 + $0x368] sm:$0xff]
        %v3747 = vld [vmem:[#allocation14 + $0x370] sm:$0xff]
        %v3748 = vld [vmem:[#allocation14 + $0x378] sm:$0xff]
        %v3749 = vld [vmem:[#allocation14 + $0x380] sm:$0xff]
        %v3750 = vld [vmem:[#allocation14 + $0x388] sm:$0xff]
        %v3751 = vld [vmem:[#allocation14 + $0x390] sm:$0xff]
        %v3752 = vld [vmem:[#allocation14 + $0x398] sm:$0xff]
        %v3753 = vld [vmem:[#allocation14 + $0x3a0] sm:$0xff]
        %v3754 = vld [vmem:[#allocation14 + $0x3a8] sm:$0xff]
        %v3755 = vld [vmem:[#allocation14 + $0x3b0] sm:$0xff]
        %v3756 = vld [vmem:[#allocation14 + $0x3b8] sm:$0xff]
        %v3757 = vld [vmem:[#allocation14 + $0x3c0] sm:$0xff]
        %v3758 = vld [vmem:[#allocation14 + $0x3c8] sm:$0xff]
        %v3759 = vld [vmem:[#allocation14 + $0x3d0] sm:$0xff]
        %v3760 = vld [vmem:[#allocation14 + $0x3d8] sm:$0xff]
        %v3761 = vld [vmem:[#allocation14 + $0x3e0] sm:$0xff]
        %v3762 = vld [vmem:[#allocation14 + $0x3e8] sm:$0xff]
        %v3763 = vld [vmem:[#allocation14 + $0x3f0] sm:$0xff]
        %v3764 = vld [vmem:[#allocation14 + $0x3f8] sm:$0xff]
        %v3765 = vld [vmem:[#allocation14 + $0x400] sm:$0xff]
        %v3766 = vld [vmem:[#allocation14 + $0x408] sm:$0xff]
        %v3767 = vld [vmem:[#allocation14 + $0x410] sm:$0xff]
        %v3768 = vld [vmem:[#allocation14 + $0x418] sm:$0xff]
        %v3769 = vld [vmem:[#allocation14 + $0x420] sm:$0xff]
        %v3770 = vld [vmem:[#allocation14 + $0x428] sm:$0xff]
        %v3771 = vld [vmem:[#allocation14 + $0x430] sm:$0xff]
        %v3772 = vld [vmem:[#allocation14 + $0x438] sm:$0xff]
        %v3773 = vld [vmem:[#allocation14 + $0x440] sm:$0xff]
        %v3774 = vld [vmem:[#allocation14 + $0x448] sm:$0xff]
        %v3775 = vld [vmem:[#allocation14 + $0x450] sm:$0xff]
        %v3776 = vld [vmem:[#allocation14 + $0x458] sm:$0xff]
        %v3777 = vld [vmem:[#allocation14 + $0x460] sm:$0xff]
        %v3778 = vld [vmem:[#allocation14 + $0x468] sm:$0xff]
        %v3779 = vld [vmem:[#allocation14 + $0x470] sm:$0xff]
        %v3780 = vld [vmem:[#allocation14 + $0x478] sm:$0xff]
        %v3781 = vld [vmem:[#allocation14 + $0x480] sm:$0xff]
        %v3782 = vld [vmem:[#allocation14 + $0x488] sm:$0xff]
        %v3783 = vld [vmem:[#allocation14 + $0x490] sm:$0xff]
        %v3784 = vld [vmem:[#allocation14 + $0x498] sm:$0xff]
        %v3785 = vld [vmem:[#allocation14 + $0x4a0] sm:$0xff]
        %v3786 = vld [vmem:[#allocation14 + $0x4a8] sm:$0xff]
        %v3787 = vld [vmem:[#allocation14 + $0x4b0] sm:$0xff]
        %v3788 = vld [vmem:[#allocation14 + $0x4b8] sm:$0xff]
        %v3789 = vld [vmem:[#allocation14 + $0x4c0] sm:$0xff]
        %v3790 = vld [vmem:[#allocation14 + $0x4c8] sm:$0xff]
        %v3791 = vld [vmem:[#allocation14 + $0x4d0] sm:$0xff]
        %v3792 = vld [vmem:[#allocation14 + $0x4d8] sm:$0xff]
        %v3793 = vld [vmem:[#allocation14 + $0x4e0] sm:$0xff]
        %v3794 = vld [vmem:[#allocation14 + $0x4e8] sm:$0xff]
        %v3795 = vld [vmem:[#allocation14 + $0x4f0] sm:$0xff]
        %v3796 = vld [vmem:[#allocation14 + $0x4f8] sm:$0xff]
        %v3797 = vld [vmem:[#allocation14 + $0x500] sm:$0xff]
        %v3798 = vld [vmem:[#allocation14 + $0x508] sm:$0xff]
        %v3799 = vld [vmem:[#allocation14 + $0x510] sm:$0xff]
        %v3800 = vld [vmem:[#allocation14 + $0x518] sm:$0xff]
        %v3801 = vld [vmem:[#allocation14 + $0x520] sm:$0xff]
        %v3802 = vld [vmem:[#allocation14 + $0x528] sm:$0xff]
        %v3803 = vld [vmem:[#allocation14 + $0x530] sm:$0xff]
        %v3804 = vld [vmem:[#allocation14 + $0x538] sm:$0xff]
        %v3805 = vld [vmem:[#allocation14 + $0x540] sm:$0xff]
        %v3806 = vld [vmem:[#allocation14 + $0x548] sm:$0xff]
        %v3807 = vld [vmem:[#allocation14 + $0x550] sm:$0xff]
        %v3808 = vld [vmem:[#allocation14 + $0x558] sm:$0xff]
        %v3809 = vld [vmem:[#allocation14 + $0x560] sm:$0xff]
        %v3810 = vld [vmem:[#allocation14 + $0x568] sm:$0xff]
        %v3811 = vld [vmem:[#allocation14 + $0x570] sm:$0xff]
        %v3812 = vld [vmem:[#allocation14 + $0x578] sm:$0xff]
        %v3813 = vld [vmem:[#allocation14 + $0x580] sm:$0xff]
        %v3814 = vld [vmem:[#allocation14 + $0x588] sm:$0xff]
        %v3815 = vld [vmem:[#allocation14 + $0x590] sm:$0xff]
        %v3816 = vld [vmem:[#allocation14 + $0x598] sm:$0xff]
        %v3817 = vld [vmem:[#allocation14 + $0x5a0] sm:$0xff]
        %v3818 = vld [vmem:[#allocation14 + $0x5a8] sm:$0xff]
        %v3819 = vld [vmem:[#allocation14 + $0x5b0] sm:$0xff]
        %v3820 = vld [vmem:[#allocation14 + $0x5b8] sm:$0xff]
        %v3821 = vld [vmem:[#allocation14 + $0x5c0] sm:$0xff]
        %v3822 = vld [vmem:[#allocation14 + $0x5c8] sm:$0xff]
        %v3823 = vld [vmem:[#allocation14 + $0x5d0] sm:$0xff]
        %v3824 = vld [vmem:[#allocation14 + $0x5d8] sm:$0xff]
        %v3825 = vld [vmem:[#allocation14 + $0x5e0] sm:$0xff]
        %v3826 = vld [vmem:[#allocation14 + $0x5e8] sm:$0xff]
        %v3827 = vld [vmem:[#allocation14 + $0x5f0] sm:$0xff]
        %v3828 = vld [vmem:[#allocation14 + $0x5f8] sm:$0xff]
        %v3829 = vld [vmem:[#allocation14 + $0x600] sm:$0xff]
        %v3830 = vld [vmem:[#allocation14 + $0x608] sm:$0xff]
        %v3831 = vld [vmem:[#allocation14 + $0x610] sm:$0xff]
        %v3832 = vld [vmem:[#allocation14 + $0x618] sm:$0xff]
        %v3833 = vld [vmem:[#allocation14 + $0x620] sm:$0xff]
        %v3834 = vld [vmem:[#allocation14 + $0x628] sm:$0xff]
        %v3835 = vld [vmem:[#allocation14 + $0x630] sm:$0xff]
        %v3836 = vld [vmem:[#allocation14 + $0x638] sm:$0xff]
        %v3837 = vld [vmem:[#allocation14 + $0x640] sm:$0xff]
        %v3838 = vld [vmem:[#allocation14 + $0x648] sm:$0xff]
        %v3839 = vld [vmem:[#allocation14 + $0x650] sm:$0xff]
        %v3840 = vld [vmem:[#allocation14 + $0x658] sm:$0xff]
        %v3841 = vld [vmem:[#allocation14 + $0x660] sm:$0xff]
        %v3842 = vld [vmem:[#allocation14 + $0x668] sm:$0xff]
        %v3843 = vld [vmem:[#allocation14 + $0x670] sm:$0xff]
        %v3844 = vld [vmem:[#allocation14 + $0x678] sm:$0xff]
        %v3845 = vld [vmem:[#allocation14 + $0x680] sm:$0xff]
        %v3846 = vld [vmem:[#allocation14 + $0x688] sm:$0xff]
        %v3847 = vld [vmem:[#allocation14 + $0x690] sm:$0xff]
        %v3848 = vld [vmem:[#allocation14 + $0x698] sm:$0xff]
        %v3849 = vld [vmem:[#allocation14 + $0x6a0] sm:$0xff]
        %v3850 = vld [vmem:[#allocation14 + $0x6a8] sm:$0xff]
        %v3851 = vld [vmem:[#allocation14 + $0x6b0] sm:$0xff]
        %v3852 = vld [vmem:[#allocation14 + $0x6b8] sm:$0xff]
        %v3853 = vld [vmem:[#allocation14 + $0x6c0] sm:$0xff]
        %v3854 = vld [vmem:[#allocation14 + $0x6c8] sm:$0xff]
        %v3855 = vld [vmem:[#allocation14 + $0x6d0] sm:$0xff]
        %v3856 = vld [vmem:[#allocation14 + $0x6d8] sm:$0xff]
        %v3857 = vld [vmem:[#allocation14 + $0x6e0] sm:$0xff]
        %v3858 = vld [vmem:[#allocation14 + $0x6e8] sm:$0xff]
        %v3859 = vld [vmem:[#allocation14 + $0x6f0] sm:$0xff]
        %v3860 = vld [vmem:[#allocation14 + $0x6f8] sm:$0xff]
        %v3861 = vld [vmem:[#allocation14 + $0x700] sm:$0xff]
        %v3862 = vld [vmem:[#allocation14 + $0x708] sm:$0xff]
        %v3863 = vld [vmem:[#allocation14 + $0x710] sm:$0xff]
        %v3864 = vld [vmem:[#allocation14 + $0x718] sm:$0xff]
        %v3865 = vld [vmem:[#allocation14 + $0x720] sm:$0xff]
        %v3866 = vld [vmem:[#allocation14 + $0x728] sm:$0xff]
        %v3867 = vld [vmem:[#allocation14 + $0x730] sm:$0xff]
        %v3868 = vld [vmem:[#allocation14 + $0x738] sm:$0xff]
        %v3869 = vld [vmem:[#allocation14 + $0x740] sm:$0xff]
        %v3870 = vld [vmem:[#allocation14 + $0x748] sm:$0xff]
        %v3871 = vld [vmem:[#allocation14 + $0x750] sm:$0xff]
        %v3872 = vld [vmem:[#allocation14 + $0x758] sm:$0xff]
        %v3873 = vld [vmem:[#allocation14 + $0x760] sm:$0xff]
        %v3874 = vld [vmem:[#allocation14 + $0x768] sm:$0xff]
        %v3875 = vld [vmem:[#allocation14 + $0x770] sm:$0xff]
        %v3876 = vld [vmem:[#allocation14 + $0x778] sm:$0xff]
        %v3877 = vld [vmem:[#allocation14 + $0x780] sm:$0xff]
        %v3878 = vld [vmem:[#allocation14 + $0x788] sm:$0xff]
        %v3879 = vld [vmem:[#allocation14 + $0x790] sm:$0xff]
        %v3880 = vld [vmem:[#allocation14 + $0x798] sm:$0xff]
        %v3881 = vld [vmem:[#allocation14 + $0x7a0] sm:$0xff]
        %v3882 = vld [vmem:[#allocation14 + $0x7a8] sm:$0xff]
        %v3883 = vld [vmem:[#allocation14 + $0x7b0] sm:$0xff]
        %v3884 = vld [vmem:[#allocation14 + $0x7b8] sm:$0xff]
        %v3885 = vld [vmem:[#allocation14 + $0x7c0] sm:$0xff]
        %v3886 = vld [vmem:[#allocation14 + $0x7c8] sm:$0xff]
        %v3887 = vld [vmem:[#allocation14 + $0x7d0] sm:$0xff]
        %v3888 = vld [vmem:[#allocation14 + $0x7d8] sm:$0xff]
        %v3889 = vld [vmem:[#allocation14 + $0x7e0] sm:$0xff]
        %v3890 = vld [vmem:[#allocation14 + $0x7e8] sm:$0xff]
        %v3891 = vld [vmem:[#allocation14 + $0x7f0] sm:$0xff]
        %v3892 = vld [vmem:[#allocation14 + $0x7f8] sm:$0xff]
        %v3893 = vlaneseq
        %v3894 = vshrl.u32 %v3893, 7
        %v3895 = vsub.s32 0, %v3894
        %v3896 = vrot.slane %v3467, %v3895
        %v3897 = vlaneseq
        %v3898 = vshrl.u32 %v3897, 7
        %v3899 = vsub.s32 0, %v3898
        %v3900 = vrot.slane %v3469, %v3899
        %v3901 = vlaneseq
        %v3902 = vshrl.u32 %v3901, 7
        %v3903 = vsub.s32 0, %v3902
        %v3904 = vrot.slane %v3631, %v3903
        %v3905 = vlaneseq
        %v3906 = vshrl.u32 %v3905, 7
        %v3907 = vsub.s32 0, %v3906
        %v3908 = vrot.slane %v3633, %v3907
        %v4165 = vunpack.c.l.b16 %v3637
        %v4166 = vunpack.c.h.b16 %v3637
        %v4167 = vunpack.c.l.b16 %v3638
        %v4168 = vunpack.c.h.b16 %v3638
        %v4169 = vunpack.c.l.b16 %v3639
        %v4170 = vunpack.c.h.b16 %v3639
        %v4171 = vunpack.c.l.b16 %v3640
        %v4172 = vunpack.c.h.b16 %v3640
        %v4173 = vunpack.c.l.b16 %v3641
        %v4174 = vunpack.c.h.b16 %v3641
        %v4175 = vunpack.c.l.b16 %v3642
        %v4176 = vunpack.c.h.b16 %v3642
        %v4177 = vunpack.c.l.b16 %v3643
        %v4178 = vunpack.c.h.b16 %v3643
        %v4179 = vunpack.c.l.b16 %v3644
        %v4180 = vunpack.c.h.b16 %v3644
        %v4181 = vunpack.c.l.b16 %v3645
        %v4182 = vunpack.c.h.b16 %v3645
        %v4183 = vunpack.c.l.b16 %v3646
        %v4184 = vunpack.c.h.b16 %v3646
        %v4185 = vunpack.c.l.b16 %v3647
        %v4186 = vunpack.c.h.b16 %v3647
        %v4187 = vunpack.c.l.b16 %v3648
        %v4188 = vunpack.c.h.b16 %v3648
        %v4189 = vunpack.c.l.b16 %v3649
        %v4190 = vunpack.c.h.b16 %v3649
        %v4191 = vunpack.c.l.b16 %v3650
        %v4192 = vunpack.c.h.b16 %v3650
        %v4193 = vunpack.c.l.b16 %v3651
        %v4194 = vunpack.c.h.b16 %v3651
        %v4195 = vunpack.c.l.b16 %v3652
        %v4196 = vunpack.c.h.b16 %v3652
        %v4197 = vunpack.c.l.b16 %v3653
        %v4198 = vunpack.c.h.b16 %v3653
        %v4199 = vunpack.c.l.b16 %v3654
        %v4200 = vunpack.c.h.b16 %v3654
        %v4201 = vunpack.c.l.b16 %v3655
        %v4202 = vunpack.c.h.b16 %v3655
        %v4203 = vunpack.c.l.b16 %v3656
        %v4204 = vunpack.c.h.b16 %v3656
        %v4205 = vunpack.c.l.b16 %v3657
        %v4206 = vunpack.c.h.b16 %v3657
        %v4207 = vunpack.c.l.b16 %v3658
        %v4208 = vunpack.c.h.b16 %v3658
        %v4209 = vunpack.c.l.b16 %v3659
        %v4210 = vunpack.c.h.b16 %v3659
        %v4211 = vunpack.c.l.b16 %v3660
        %v4212 = vunpack.c.h.b16 %v3660
        %v4213 = vunpack.c.l.b16 %v3661
        %v4214 = vunpack.c.h.b16 %v3661
        %v4215 = vunpack.c.l.b16 %v3662
        %v4216 = vunpack.c.h.b16 %v3662
        %v4217 = vunpack.c.l.b16 %v3663
        %v4218 = vunpack.c.h.b16 %v3663
        %v4219 = vunpack.c.l.b16 %v3664
        %v4220 = vunpack.c.h.b16 %v3664
        %v4221 = vunpack.c.l.b16 %v3665
        %v4222 = vunpack.c.h.b16 %v3665
        %v4223 = vunpack.c.l.b16 %v3666
        %v4224 = vunpack.c.h.b16 %v3666
        %v4225 = vunpack.c.l.b16 %v3667
        %v4226 = vunpack.c.h.b16 %v3667
        %v4227 = vunpack.c.l.b16 %v3668
        %v4228 = vunpack.c.h.b16 %v3668
        %v4229 = vunpack.c.l.b16 %v3669
        %v4230 = vunpack.c.h.b16 %v3669
        %v4231 = vunpack.c.l.b16 %v3670
        %v4232 = vunpack.c.h.b16 %v3670
        %v4233 = vunpack.c.l.b16 %v3671
        %v4234 = vunpack.c.h.b16 %v3671
        %v4235 = vunpack.c.l.b16 %v3672
        %v4236 = vunpack.c.h.b16 %v3672
        %v4237 = vunpack.c.l.b16 %v3673
        %v4238 = vunpack.c.h.b16 %v3673
        %v4239 = vunpack.c.l.b16 %v3674
        %v4240 = vunpack.c.h.b16 %v3674
        %v4241 = vunpack.c.l.b16 %v3675
        %v4242 = vunpack.c.h.b16 %v3675
        %v4243 = vunpack.c.l.b16 %v3676
        %v4244 = vunpack.c.h.b16 %v3676
        %v4245 = vunpack.c.l.b16 %v3677
        %v4246 = vunpack.c.h.b16 %v3677
        %v4247 = vunpack.c.l.b16 %v3678
        %v4248 = vunpack.c.h.b16 %v3678
        %v4249 = vunpack.c.l.b16 %v3679
        %v4250 = vunpack.c.h.b16 %v3679
        %v4251 = vunpack.c.l.b16 %v3680
        %v4252 = vunpack.c.h.b16 %v3680
        %v4253 = vunpack.c.l.b16 %v3681
        %v4254 = vunpack.c.h.b16 %v3681
        %v4255 = vunpack.c.l.b16 %v3682
        %v4256 = vunpack.c.h.b16 %v3682
        %v4257 = vunpack.c.l.b16 %v3683
        %v4258 = vunpack.c.h.b16 %v3683
        %v4259 = vunpack.c.l.b16 %v3684
        %v4260 = vunpack.c.h.b16 %v3684
        %v4261 = vunpack.c.l.b16 %v3685
        %v4262 = vunpack.c.h.b16 %v3685
        %v4263 = vunpack.c.l.b16 %v3686
        %v4264 = vunpack.c.h.b16 %v3686
        %v4265 = vunpack.c.l.b16 %v3687
        %v4266 = vunpack.c.h.b16 %v3687
        %v4267 = vunpack.c.l.b16 %v3688
        %v4268 = vunpack.c.h.b16 %v3688
        %v4269 = vunpack.c.l.b16 %v3689
        %v4270 = vunpack.c.h.b16 %v3689
        %v4271 = vunpack.c.l.b16 %v3690
        %v4272 = vunpack.c.h.b16 %v3690
        %v4273 = vunpack.c.l.b16 %v3691
        %v4274 = vunpack.c.h.b16 %v3691
        %v4275 = vunpack.c.l.b16 %v3692
        %v4276 = vunpack.c.h.b16 %v3692
        %v4277 = vunpack.c.l.b16 %v3693
        %v4278 = vunpack.c.h.b16 %v3693
        %v4279 = vunpack.c.l.b16 %v3694
        %v4280 = vunpack.c.h.b16 %v3694
        %v4281 = vunpack.c.l.b16 %v3695
        %v4282 = vunpack.c.h.b16 %v3695
        %v4283 = vunpack.c.l.b16 %v3696
        %v4284 = vunpack.c.h.b16 %v3696
        %v4285 = vunpack.c.l.b16 %v3697
        %v4286 = vunpack.c.h.b16 %v3697
        %v4287 = vunpack.c.l.b16 %v3698
        %v4288 = vunpack.c.h.b16 %v3698
        %v4289 = vunpack.c.l.b16 %v3699
        %v4290 = vunpack.c.h.b16 %v3699
        %v4291 = vunpack.c.l.b16 %v3700
        %v4292 = vunpack.c.h.b16 %v3700
        %v4293 = vunpack.c.l.b16 %v3701
        %v4294 = vunpack.c.h.b16 %v3701
        %v4295 = vunpack.c.l.b16 %v3702
        %v4296 = vunpack.c.h.b16 %v3702
        %v4297 = vunpack.c.l.b16 %v3703
        %v4298 = vunpack.c.h.b16 %v3703
        %v4299 = vunpack.c.l.b16 %v3704
        %v4300 = vunpack.c.h.b16 %v3704
        %v4301 = vunpack.c.l.b16 %v3705
        %v4302 = vunpack.c.h.b16 %v3705
        %v4303 = vunpack.c.l.b16 %v3706
        %v4304 = vunpack.c.h.b16 %v3706
        %v4305 = vunpack.c.l.b16 %v3707
        %v4306 = vunpack.c.h.b16 %v3707
        %v4307 = vunpack.c.l.b16 %v3708
        %v4308 = vunpack.c.h.b16 %v3708
        %v4309 = vunpack.c.l.b16 %v3709
        %v4310 = vunpack.c.h.b16 %v3709
        %v4311 = vunpack.c.l.b16 %v3710
        %v4312 = vunpack.c.h.b16 %v3710
        %v4313 = vunpack.c.l.b16 %v3711
        %v4314 = vunpack.c.h.b16 %v3711
        %v4315 = vunpack.c.l.b16 %v3712
        %v4316 = vunpack.c.h.b16 %v3712
        %v4317 = vunpack.c.l.b16 %v3713
        %v4318 = vunpack.c.h.b16 %v3713
        %v4319 = vunpack.c.l.b16 %v3714
        %v4320 = vunpack.c.h.b16 %v3714
        %v4321 = vunpack.c.l.b16 %v3715
        %v4322 = vunpack.c.h.b16 %v3715
        %v4323 = vunpack.c.l.b16 %v3716
        %v4324 = vunpack.c.h.b16 %v3716
        %v4325 = vunpack.c.l.b16 %v3717
        %v4326 = vunpack.c.h.b16 %v3717
        %v4327 = vunpack.c.l.b16 %v3718
        %v4328 = vunpack.c.h.b16 %v3718
        %v4329 = vunpack.c.l.b16 %v3719
        %v4330 = vunpack.c.h.b16 %v3719
        %v4331 = vunpack.c.l.b16 %v3720
        %v4332 = vunpack.c.h.b16 %v3720
        %v4333 = vunpack.c.l.b16 %v3721
        %v4334 = vunpack.c.h.b16 %v3721
        %v4335 = vunpack.c.l.b16 %v3722
        %v4336 = vunpack.c.h.b16 %v3722
        %v4337 = vunpack.c.l.b16 %v3723
        %v4338 = vunpack.c.h.b16 %v3723
        %v4339 = vunpack.c.l.b16 %v3724
        %v4340 = vunpack.c.h.b16 %v3724
        %v4341 = vunpack.c.l.b16 %v3725
        %v4342 = vunpack.c.h.b16 %v3725
        %v4343 = vunpack.c.l.b16 %v3726
        %v4344 = vunpack.c.h.b16 %v3726
        %v4345 = vunpack.c.l.b16 %v3727
        %v4346 = vunpack.c.h.b16 %v3727
        %v4347 = vunpack.c.l.b16 %v3728
        %v4348 = vunpack.c.h.b16 %v3728
        %v4349 = vunpack.c.l.b16 %v3729
        %v4350 = vunpack.c.h.b16 %v3729
        %v4351 = vunpack.c.l.b16 %v3730
        %v4352 = vunpack.c.h.b16 %v3730
        %v4353 = vunpack.c.l.b16 %v3731
        %v4354 = vunpack.c.h.b16 %v3731
        %v4355 = vunpack.c.l.b16 %v3732
        %v4356 = vunpack.c.h.b16 %v3732
        %v4357 = vunpack.c.l.b16 %v3733
        %v4358 = vunpack.c.h.b16 %v3733
        %v4359 = vunpack.c.l.b16 %v3734
        %v4360 = vunpack.c.h.b16 %v3734
        %v4361 = vunpack.c.l.b16 %v3735
        %v4362 = vunpack.c.h.b16 %v3735
        %v4363 = vunpack.c.l.b16 %v3736
        %v4364 = vunpack.c.h.b16 %v3736
        %v4365 = vunpack.c.l.b16 %v3737
        %v4366 = vunpack.c.h.b16 %v3737
        %v4367 = vunpack.c.l.b16 %v3738
        %v4368 = vunpack.c.h.b16 %v3738
        %v4369 = vunpack.c.l.b16 %v3739
        %v4370 = vunpack.c.h.b16 %v3739
        %v4371 = vunpack.c.l.b16 %v3740
        %v4372 = vunpack.c.h.b16 %v3740
        %v4373 = vunpack.c.l.b16 %v3741
        %v4374 = vunpack.c.h.b16 %v3741
        %v4375 = vunpack.c.l.b16 %v3742
        %v4376 = vunpack.c.h.b16 %v3742
        %v4377 = vunpack.c.l.b16 %v3743
        %v4378 = vunpack.c.h.b16 %v3743
        %v4379 = vunpack.c.l.b16 %v3744
        %v4380 = vunpack.c.h.b16 %v3744
        %v4381 = vunpack.c.l.b16 %v3745
        %v4382 = vunpack.c.h.b16 %v3745
        %v4383 = vunpack.c.l.b16 %v3746
        %v4384 = vunpack.c.h.b16 %v3746
        %v4385 = vunpack.c.l.b16 %v3747
        %v4386 = vunpack.c.h.b16 %v3747
        %v4387 = vunpack.c.l.b16 %v3748
        %v4388 = vunpack.c.h.b16 %v3748
        %v4389 = vunpack.c.l.b16 %v3749
        %v4390 = vunpack.c.h.b16 %v3749
        %v4391 = vunpack.c.l.b16 %v3750
        %v4392 = vunpack.c.h.b16 %v3750
        %v4393 = vunpack.c.l.b16 %v3751
        %v4394 = vunpack.c.h.b16 %v3751
        %v4395 = vunpack.c.l.b16 %v3752
        %v4396 = vunpack.c.h.b16 %v3752
        %v4397 = vunpack.c.l.b16 %v3753
        %v4398 = vunpack.c.h.b16 %v3753
        %v4399 = vunpack.c.l.b16 %v3754
        %v4400 = vunpack.c.h.b16 %v3754
        %v4401 = vunpack.c.l.b16 %v3755
        %v4402 = vunpack.c.h.b16 %v3755
        %v4403 = vunpack.c.l.b16 %v3756
        %v4404 = vunpack.c.h.b16 %v3756
        %v4405 = vunpack.c.l.b16 %v3757
        %v4406 = vunpack.c.h.b16 %v3757
        %v4407 = vunpack.c.l.b16 %v3758
        %v4408 = vunpack.c.h.b16 %v3758
        %v4409 = vunpack.c.l.b16 %v3759
        %v4410 = vunpack.c.h.b16 %v3759
        %v4411 = vunpack.c.l.b16 %v3760
        %v4412 = vunpack.c.h.b16 %v3760
        %v4413 = vunpack.c.l.b16 %v3761
        %v4414 = vunpack.c.h.b16 %v3761
        %v4415 = vunpack.c.l.b16 %v3762
        %v4416 = vunpack.c.h.b16 %v3762
        %v4417 = vunpack.c.l.b16 %v3763
        %v4418 = vunpack.c.h.b16 %v3763
        %v4419 = vunpack.c.l.b16 %v3764
        %v4420 = vunpack.c.h.b16 %v3764
        %v4421 = vunpack.c.l.b16 %v3765
        %v4422 = vunpack.c.h.b16 %v3765
        %v4423 = vunpack.c.l.b16 %v3766
        %v4424 = vunpack.c.h.b16 %v3766
        %v4425 = vunpack.c.l.b16 %v3767
        %v4426 = vunpack.c.h.b16 %v3767
        %v4427 = vunpack.c.l.b16 %v3768
        %v4428 = vunpack.c.h.b16 %v3768
        %v4429 = vunpack.c.l.b16 %v3769
        %v4430 = vunpack.c.h.b16 %v3769
        %v4431 = vunpack.c.l.b16 %v3770
        %v4432 = vunpack.c.h.b16 %v3770
        %v4433 = vunpack.c.l.b16 %v3771
        %v4434 = vunpack.c.h.b16 %v3771
        %v4435 = vunpack.c.l.b16 %v3772
        %v4436 = vunpack.c.h.b16 %v3772
        %v4437 = vunpack.c.l.b16 %v3773
        %v4438 = vunpack.c.h.b16 %v3773
        %v4439 = vunpack.c.l.b16 %v3774
        %v4440 = vunpack.c.h.b16 %v3774
        %v4441 = vunpack.c.l.b16 %v3775
        %v4442 = vunpack.c.h.b16 %v3775
        %v4443 = vunpack.c.l.b16 %v3776
        %v4444 = vunpack.c.h.b16 %v3776
        %v4445 = vunpack.c.l.b16 %v3777
        %v4446 = vunpack.c.h.b16 %v3777
        %v4447 = vunpack.c.l.b16 %v3778
        %v4448 = vunpack.c.h.b16 %v3778
        %v4449 = vunpack.c.l.b16 %v3779
        %v4450 = vunpack.c.h.b16 %v3779
        %v4451 = vunpack.c.l.b16 %v3780
        %v4452 = vunpack.c.h.b16 %v3780
        %v4453 = vunpack.c.l.b16 %v3781
        %v4454 = vunpack.c.h.b16 %v3781
        %v4455 = vunpack.c.l.b16 %v3782
        %v4456 = vunpack.c.h.b16 %v3782
        %v4457 = vunpack.c.l.b16 %v3783
        %v4458 = vunpack.c.h.b16 %v3783
        %v4459 = vunpack.c.l.b16 %v3784
        %v4460 = vunpack.c.h.b16 %v3784
        %v4461 = vunpack.c.l.b16 %v3785
        %v4462 = vunpack.c.h.b16 %v3785
        %v4463 = vunpack.c.l.b16 %v3786
        %v4464 = vunpack.c.h.b16 %v3786
        %v4465 = vunpack.c.l.b16 %v3787
        %v4466 = vunpack.c.h.b16 %v3787
        %v4467 = vunpack.c.l.b16 %v3788
        %v4468 = vunpack.c.h.b16 %v3788
        %v4469 = vunpack.c.l.b16 %v3789
        %v4470 = vunpack.c.h.b16 %v3789
        %v4471 = vunpack.c.l.b16 %v3790
        %v4472 = vunpack.c.h.b16 %v3790
        %v4473 = vunpack.c.l.b16 %v3791
        %v4474 = vunpack.c.h.b16 %v3791
        %v4475 = vunpack.c.l.b16 %v3792
        %v4476 = vunpack.c.h.b16 %v3792
        %v4477 = vunpack.c.l.b16 %v3793
        %v4478 = vunpack.c.h.b16 %v3793
        %v4479 = vunpack.c.l.b16 %v3794
        %v4480 = vunpack.c.h.b16 %v3794
        %v4481 = vunpack.c.l.b16 %v3795
        %v4482 = vunpack.c.h.b16 %v3795
        %v4483 = vunpack.c.l.b16 %v3796
        %v4484 = vunpack.c.h.b16 %v3796
        %v4485 = vunpack.c.l.b16 %v3797
        %v4486 = vunpack.c.h.b16 %v3797
        %v4487 = vunpack.c.l.b16 %v3798
        %v4488 = vunpack.c.h.b16 %v3798
        %v4489 = vunpack.c.l.b16 %v3799
        %v4490 = vunpack.c.h.b16 %v3799
        %v4491 = vunpack.c.l.b16 %v3800
        %v4492 = vunpack.c.h.b16 %v3800
        %v4493 = vunpack.c.l.b16 %v3801
        %v4494 = vunpack.c.h.b16 %v3801
        %v4495 = vunpack.c.l.b16 %v3802
        %v4496 = vunpack.c.h.b16 %v3802
        %v4497 = vunpack.c.l.b16 %v3803
        %v4498 = vunpack.c.h.b16 %v3803
        %v4499 = vunpack.c.l.b16 %v3804
        %v4500 = vunpack.c.h.b16 %v3804
        %v4501 = vunpack.c.l.b16 %v3805
        %v4502 = vunpack.c.h.b16 %v3805
        %v4503 = vunpack.c.l.b16 %v3806
        %v4504 = vunpack.c.h.b16 %v3806
        %v4505 = vunpack.c.l.b16 %v3807
        %v4506 = vunpack.c.h.b16 %v3807
        %v4507 = vunpack.c.l.b16 %v3808
        %v4508 = vunpack.c.h.b16 %v3808
        %v4509 = vunpack.c.l.b16 %v3809
        %v4510 = vunpack.c.h.b16 %v3809
        %v4511 = vunpack.c.l.b16 %v3810
        %v4512 = vunpack.c.h.b16 %v3810
        %v4513 = vunpack.c.l.b16 %v3811
        %v4514 = vunpack.c.h.b16 %v3811
        %v4515 = vunpack.c.l.b16 %v3812
        %v4516 = vunpack.c.h.b16 %v3812
        %v4517 = vunpack.c.l.b16 %v3813
        %v4518 = vunpack.c.h.b16 %v3813
        %v4519 = vunpack.c.l.b16 %v3814
        %v4520 = vunpack.c.h.b16 %v3814
        %v4521 = vunpack.c.l.b16 %v3815
        %v4522 = vunpack.c.h.b16 %v3815
        %v4523 = vunpack.c.l.b16 %v3816
        %v4524 = vunpack.c.h.b16 %v3816
        %v4525 = vunpack.c.l.b16 %v3817
        %v4526 = vunpack.c.h.b16 %v3817
        %v4527 = vunpack.c.l.b16 %v3818
        %v4528 = vunpack.c.h.b16 %v3818
        %v4529 = vunpack.c.l.b16 %v3819
        %v4530 = vunpack.c.h.b16 %v3819
        %v4531 = vunpack.c.l.b16 %v3820
        %v4532 = vunpack.c.h.b16 %v3820
        %v4533 = vunpack.c.l.b16 %v3821
        %v4534 = vunpack.c.h.b16 %v3821
        %v4535 = vunpack.c.l.b16 %v3822
        %v4536 = vunpack.c.h.b16 %v3822
        %v4537 = vunpack.c.l.b16 %v3823
        %v4538 = vunpack.c.h.b16 %v3823
        %v4539 = vunpack.c.l.b16 %v3824
        %v4540 = vunpack.c.h.b16 %v3824
        %v4541 = vunpack.c.l.b16 %v3825
        %v4542 = vunpack.c.h.b16 %v3825
        %v4543 = vunpack.c.l.b16 %v3826
        %v4544 = vunpack.c.h.b16 %v3826
        %v4545 = vunpack.c.l.b16 %v3827
        %v4546 = vunpack.c.h.b16 %v3827
        %v4547 = vunpack.c.l.b16 %v3828
        %v4548 = vunpack.c.h.b16 %v3828
        %v4549 = vunpack.c.l.b16 %v3829
        %v4550 = vunpack.c.h.b16 %v3829
        %v4551 = vunpack.c.l.b16 %v3830
        %v4552 = vunpack.c.h.b16 %v3830
        %v4553 = vunpack.c.l.b16 %v3831
        %v4554 = vunpack.c.h.b16 %v3831
        %v4555 = vunpack.c.l.b16 %v3832
        %v4556 = vunpack.c.h.b16 %v3832
        %v4557 = vunpack.c.l.b16 %v3833
        %v4558 = vunpack.c.h.b16 %v3833
        %v4559 = vunpack.c.l.b16 %v3834
        %v4560 = vunpack.c.h.b16 %v3834
        %v4561 = vunpack.c.l.b16 %v3835
        %v4562 = vunpack.c.h.b16 %v3835
        %v4563 = vunpack.c.l.b16 %v3836
        %v4564 = vunpack.c.h.b16 %v3836
        %v4565 = vunpack.c.l.b16 %v3837
        %v4566 = vunpack.c.h.b16 %v3837
        %v4567 = vunpack.c.l.b16 %v3838
        %v4568 = vunpack.c.h.b16 %v3838
        %v4569 = vunpack.c.l.b16 %v3839
        %v4570 = vunpack.c.h.b16 %v3839
        %v4571 = vunpack.c.l.b16 %v3840
        %v4572 = vunpack.c.h.b16 %v3840
        %v4573 = vunpack.c.l.b16 %v3841
        %v4574 = vunpack.c.h.b16 %v3841
        %v4575 = vunpack.c.l.b16 %v3842
        %v4576 = vunpack.c.h.b16 %v3842
        %v4577 = vunpack.c.l.b16 %v3843
        %v4578 = vunpack.c.h.b16 %v3843
        %v4579 = vunpack.c.l.b16 %v3844
        %v4580 = vunpack.c.h.b16 %v3844
        %v4581 = vunpack.c.l.b16 %v3845
        %v4582 = vunpack.c.h.b16 %v3845
        %v4583 = vunpack.c.l.b16 %v3846
        %v4584 = vunpack.c.h.b16 %v3846
        %v4585 = vunpack.c.l.b16 %v3847
        %v4586 = vunpack.c.h.b16 %v3847
        %v4587 = vunpack.c.l.b16 %v3848
        %v4588 = vunpack.c.h.b16 %v3848
        %v4589 = vunpack.c.l.b16 %v3849
        %v4590 = vunpack.c.h.b16 %v3849
        %v4591 = vunpack.c.l.b16 %v3850
        %v4592 = vunpack.c.h.b16 %v3850
        %v4593 = vunpack.c.l.b16 %v3851
        %v4594 = vunpack.c.h.b16 %v3851
        %v4595 = vunpack.c.l.b16 %v3852
        %v4596 = vunpack.c.h.b16 %v3852
        %v4597 = vunpack.c.l.b16 %v3853
        %v4598 = vunpack.c.h.b16 %v3853
        %v4599 = vunpack.c.l.b16 %v3854
        %v4600 = vunpack.c.h.b16 %v3854
        %v4601 = vunpack.c.l.b16 %v3855
        %v4602 = vunpack.c.h.b16 %v3855
        %v4603 = vunpack.c.l.b16 %v3856
        %v4604 = vunpack.c.h.b16 %v3856
        %v4605 = vunpack.c.l.b16 %v3857
        %v4606 = vunpack.c.h.b16 %v3857
        %v4607 = vunpack.c.l.b16 %v3858
        %v4608 = vunpack.c.h.b16 %v3858
        %v4609 = vunpack.c.l.b16 %v3859
        %v4610 = vunpack.c.h.b16 %v3859
        %v4611 = vunpack.c.l.b16 %v3860
        %v4612 = vunpack.c.h.b16 %v3860
        %v4613 = vunpack.c.l.b16 %v3861
        %v4614 = vunpack.c.h.b16 %v3861
        %v4615 = vunpack.c.l.b16 %v3862
        %v4616 = vunpack.c.h.b16 %v3862
        %v4617 = vunpack.c.l.b16 %v3863
        %v4618 = vunpack.c.h.b16 %v3863
        %v4619 = vunpack.c.l.b16 %v3864
        %v4620 = vunpack.c.h.b16 %v3864
        %v4621 = vunpack.c.l.b16 %v3865
        %v4622 = vunpack.c.h.b16 %v3865
        %v4623 = vunpack.c.l.b16 %v3866
        %v4624 = vunpack.c.h.b16 %v3866
        %v4625 = vunpack.c.l.b16 %v3867
        %v4626 = vunpack.c.h.b16 %v3867
        %v4627 = vunpack.c.l.b16 %v3868
        %v4628 = vunpack.c.h.b16 %v3868
        %v4629 = vunpack.c.l.b16 %v3869
        %v4630 = vunpack.c.h.b16 %v3869
        %v4631 = vunpack.c.l.b16 %v3870
        %v4632 = vunpack.c.h.b16 %v3870
        %v4633 = vunpack.c.l.b16 %v3871
        %v4634 = vunpack.c.h.b16 %v3871
        %v4635 = vunpack.c.l.b16 %v3872
        %v4636 = vunpack.c.h.b16 %v3872
        %v4637 = vunpack.c.l.b16 %v3873
        %v4638 = vunpack.c.h.b16 %v3873
        %v4639 = vunpack.c.l.b16 %v3874
        %v4640 = vunpack.c.h.b16 %v3874
        %v4641 = vunpack.c.l.b16 %v3875
        %v4642 = vunpack.c.h.b16 %v3875
        %v4643 = vunpack.c.l.b16 %v3876
        %v4644 = vunpack.c.h.b16 %v3876
        %v4645 = vunpack.c.l.b16 %v3877
        %v4646 = vunpack.c.h.b16 %v3877
        %v4647 = vunpack.c.l.b16 %v3878
        %v4648 = vunpack.c.h.b16 %v3878
        %v4649 = vunpack.c.l.b16 %v3879
        %v4650 = vunpack.c.h.b16 %v3879
        %v4651 = vunpack.c.l.b16 %v3880
        %v4652 = vunpack.c.h.b16 %v3880
        %v4653 = vunpack.c.l.b16 %v3881
        %v4654 = vunpack.c.h.b16 %v3881
        %v4655 = vunpack.c.l.b16 %v3882
        %v4656 = vunpack.c.h.b16 %v3882
        %v4657 = vunpack.c.l.b16 %v3883
        %v4658 = vunpack.c.h.b16 %v3883
        %v4659 = vunpack.c.l.b16 %v3884
        %v4660 = vunpack.c.h.b16 %v3884
        %v4661 = vunpack.c.l.b16 %v3885
        %v4662 = vunpack.c.h.b16 %v3885
        %v4663 = vunpack.c.l.b16 %v3886
        %v4664 = vunpack.c.h.b16 %v3886
        %v4665 = vunpack.c.l.b16 %v3887
        %v4666 = vunpack.c.h.b16 %v3887
        %v4667 = vunpack.c.l.b16 %v3888
        %v4668 = vunpack.c.h.b16 %v3888
        %v4669 = vunpack.c.l.b16 %v3889
        %v4670 = vunpack.c.h.b16 %v3889
        %v4671 = vunpack.c.l.b16 %v3890
        %v4672 = vunpack.c.h.b16 %v3890
        %v4673 = vunpack.c.l.b16 %v3891
        %v4674 = vunpack.c.h.b16 %v3891
        %v4675 = vunpack.c.l.b16 %v3892
        %v4676 = vunpack.c.h.b16 %v3892
        %v4677 = vpack.c.b16 %v4169, %v4165
        %v4678 = vpack.c.b16 %v4170, %v4166
        %v4679 = vpack.c.b16 %v4171, %v4167
        %v4680 = vpack.c.b16 %v4172, %v4168
        %v4681 = vpack.c.b16 %v4177, %v4173
        %v4682 = vpack.c.b16 %v4178, %v4174
        %v4683 = vpack.c.b16 %v4179, %v4175
        %v4684 = vpack.c.b16 %v4180, %v4176
        %v4685 = vpack.c.b16 %v4185, %v4181
        %v4686 = vpack.c.b16 %v4186, %v4182
        %v4687 = vpack.c.b16 %v4187, %v4183
        %v4688 = vpack.c.b16 %v4188, %v4184
        %v4689 = vpack.c.b16 %v4193, %v4189
        %v4690 = vpack.c.b16 %v4194, %v4190
        %v4691 = vpack.c.b16 %v4195, %v4191
        %v4692 = vpack.c.b16 %v4196, %v4192
        %v4693 = vpack.c.b16 %v4201, %v4197
        %v4694 = vpack.c.b16 %v4202, %v4198
        %v4695 = vpack.c.b16 %v4203, %v4199
        %v4696 = vpack.c.b16 %v4204, %v4200
        %v4697 = vpack.c.b16 %v4209, %v4205
        %v4698 = vpack.c.b16 %v4210, %v4206
        %v4699 = vpack.c.b16 %v4211, %v4207
        %v4700 = vpack.c.b16 %v4212, %v4208
        %v4701 = vpack.c.b16 %v4217, %v4213
        %v4702 = vpack.c.b16 %v4218, %v4214
        %v4703 = vpack.c.b16 %v4219, %v4215
        %v4704 = vpack.c.b16 %v4220, %v4216
        %v4705 = vpack.c.b16 %v4225, %v4221
        %v4706 = vpack.c.b16 %v4226, %v4222
        %v4707 = vpack.c.b16 %v4227, %v4223
        %v4708 = vpack.c.b16 %v4228, %v4224
        %v4709 = vpack.c.b16 %v4233, %v4229
        %v4710 = vpack.c.b16 %v4234, %v4230
        %v4711 = vpack.c.b16 %v4235, %v4231
        %v4712 = vpack.c.b16 %v4236, %v4232
        %v4713 = vpack.c.b16 %v4241, %v4237
        %v4714 = vpack.c.b16 %v4242, %v4238
        %v4715 = vpack.c.b16 %v4243, %v4239
        %v4716 = vpack.c.b16 %v4244, %v4240
        %v4717 = vpack.c.b16 %v4249, %v4245
        %v4718 = vpack.c.b16 %v4250, %v4246
        %v4719 = vpack.c.b16 %v4251, %v4247
        %v4720 = vpack.c.b16 %v4252, %v4248
        %v4721 = vpack.c.b16 %v4257, %v4253
        %v4722 = vpack.c.b16 %v4258, %v4254
        %v4723 = vpack.c.b16 %v4259, %v4255
        %v4724 = vpack.c.b16 %v4260, %v4256
        %v4725 = vpack.c.b16 %v4265, %v4261
        %v4726 = vpack.c.b16 %v4266, %v4262
        %v4727 = vpack.c.b16 %v4267, %v4263
        %v4728 = vpack.c.b16 %v4268, %v4264
        %v4729 = vpack.c.b16 %v4273, %v4269
        %v4730 = vpack.c.b16 %v4274, %v4270
        %v4731 = vpack.c.b16 %v4275, %v4271
        %v4732 = vpack.c.b16 %v4276, %v4272
        %v4733 = vpack.c.b16 %v4281, %v4277
        %v4734 = vpack.c.b16 %v4282, %v4278
        %v4735 = vpack.c.b16 %v4283, %v4279
        %v4736 = vpack.c.b16 %v4284, %v4280
        %v4737 = vpack.c.b16 %v4289, %v4285
        %v4738 = vpack.c.b16 %v4290, %v4286
        %v4739 = vpack.c.b16 %v4291, %v4287
        %v4740 = vpack.c.b16 %v4292, %v4288
        %v4741 = vpack.c.b16 %v4297, %v4293
        %v4742 = vpack.c.b16 %v4298, %v4294
        %v4743 = vpack.c.b16 %v4299, %v4295
        %v4744 = vpack.c.b16 %v4300, %v4296
        %v4745 = vpack.c.b16 %v4305, %v4301
        %v4746 = vpack.c.b16 %v4306, %v4302
        %v4747 = vpack.c.b16 %v4307, %v4303
        %v4748 = vpack.c.b16 %v4308, %v4304
        %v4749 = vpack.c.b16 %v4313, %v4309
        %v4750 = vpack.c.b16 %v4314, %v4310
        %v4751 = vpack.c.b16 %v4315, %v4311
        %v4752 = vpack.c.b16 %v4316, %v4312
        %v4753 = vpack.c.b16 %v4321, %v4317
        %v4754 = vpack.c.b16 %v4322, %v4318
        %v4755 = vpack.c.b16 %v4323, %v4319
        %v4756 = vpack.c.b16 %v4324, %v4320
        %v4757 = vpack.c.b16 %v4329, %v4325
        %v4758 = vpack.c.b16 %v4330, %v4326
        %v4759 = vpack.c.b16 %v4331, %v4327
        %v4760 = vpack.c.b16 %v4332, %v4328
        %v4761 = vpack.c.b16 %v4337, %v4333
        %v4762 = vpack.c.b16 %v4338, %v4334
        %v4763 = vpack.c.b16 %v4339, %v4335
        %v4764 = vpack.c.b16 %v4340, %v4336
        %v4765 = vpack.c.b16 %v4345, %v4341
        %v4766 = vpack.c.b16 %v4346, %v4342
        %v4767 = vpack.c.b16 %v4347, %v4343
        %v4768 = vpack.c.b16 %v4348, %v4344
        %v4769 = vpack.c.b16 %v4353, %v4349
        %v4770 = vpack.c.b16 %v4354, %v4350
        %v4771 = vpack.c.b16 %v4355, %v4351
        %v4772 = vpack.c.b16 %v4356, %v4352
        %v4773 = vpack.c.b16 %v4361, %v4357
        %v4774 = vpack.c.b16 %v4362, %v4358
        %v4775 = vpack.c.b16 %v4363, %v4359
        %v4776 = vpack.c.b16 %v4364, %v4360
        %v4777 = vpack.c.b16 %v4369, %v4365
        %v4778 = vpack.c.b16 %v4370, %v4366
        %v4779 = vpack.c.b16 %v4371, %v4367
        %v4780 = vpack.c.b16 %v4372, %v4368
        %v4781 = vpack.c.b16 %v4377, %v4373
        %v4782 = vpack.c.b16 %v4378, %v4374
        %v4783 = vpack.c.b16 %v4379, %v4375
        %v4784 = vpack.c.b16 %v4380, %v4376
        %v4785 = vpack.c.b16 %v4385, %v4381
        %v4786 = vpack.c.b16 %v4386, %v4382
        %v4787 = vpack.c.b16 %v4387, %v4383
        %v4788 = vpack.c.b16 %v4388, %v4384
        %v4789 = vpack.c.b16 %v4393, %v4389
        %v4790 = vpack.c.b16 %v4394, %v4390
        %v4791 = vpack.c.b16 %v4395, %v4391
        %v4792 = vpack.c.b16 %v4396, %v4392
        %v4793 = vpack.c.b16 %v4401, %v4397
        %v4794 = vpack.c.b16 %v4402, %v4398
        %v4795 = vpack.c.b16 %v4403, %v4399
        %v4796 = vpack.c.b16 %v4404, %v4400
        %v4797 = vpack.c.b16 %v4409, %v4405
        %v4798 = vpack.c.b16 %v4410, %v4406
        %v4799 = vpack.c.b16 %v4411, %v4407
        %v4800 = vpack.c.b16 %v4412, %v4408
        %v4801 = vpack.c.b16 %v4417, %v4413
        %v4802 = vpack.c.b16 %v4418, %v4414
        %v4803 = vpack.c.b16 %v4419, %v4415
        %v4804 = vpack.c.b16 %v4420, %v4416
        %v4805 = vpack.c.b16 %v4425, %v4421
        %v4806 = vpack.c.b16 %v4426, %v4422
        %v4807 = vpack.c.b16 %v4427, %v4423
        %v4808 = vpack.c.b16 %v4428, %v4424
        %v4809 = vpack.c.b16 %v4433, %v4429
        %v4810 = vpack.c.b16 %v4434, %v4430
        %v4811 = vpack.c.b16 %v4435, %v4431
        %v4812 = vpack.c.b16 %v4436, %v4432
        %v4813 = vpack.c.b16 %v4441, %v4437
        %v4814 = vpack.c.b16 %v4442, %v4438
        %v4815 = vpack.c.b16 %v4443, %v4439
        %v4816 = vpack.c.b16 %v4444, %v4440
        %v4817 = vpack.c.b16 %v4449, %v4445
        %v4818 = vpack.c.b16 %v4450, %v4446
        %v4819 = vpack.c.b16 %v4451, %v4447
        %v4820 = vpack.c.b16 %v4452, %v4448
        %v4821 = vpack.c.b16 %v4457, %v4453
        %v4822 = vpack.c.b16 %v4458, %v4454
        %v4823 = vpack.c.b16 %v4459, %v4455
        %v4824 = vpack.c.b16 %v4460, %v4456
        %v4825 = vpack.c.b16 %v4465, %v4461
        %v4826 = vpack.c.b16 %v4466, %v4462
        %v4827 = vpack.c.b16 %v4467, %v4463
        %v4828 = vpack.c.b16 %v4468, %v4464
        %v4829 = vpack.c.b16 %v4473, %v4469
        %v4830 = vpack.c.b16 %v4474, %v4470
        %v4831 = vpack.c.b16 %v4475, %v4471
        %v4832 = vpack.c.b16 %v4476, %v4472
        %v4833 = vpack.c.b16 %v4481, %v4477
        %v4834 = vpack.c.b16 %v4482, %v4478
        %v4835 = vpack.c.b16 %v4483, %v4479
        %v4836 = vpack.c.b16 %v4484, %v4480
        %v4837 = vpack.c.b16 %v4489, %v4485
        %v4838 = vpack.c.b16 %v4490, %v4486
        %v4839 = vpack.c.b16 %v4491, %v4487
        %v4840 = vpack.c.b16 %v4492, %v4488
        %v4841 = vpack.c.b16 %v4497, %v4493
        %v4842 = vpack.c.b16 %v4498, %v4494
        %v4843 = vpack.c.b16 %v4499, %v4495
        %v4844 = vpack.c.b16 %v4500, %v4496
        %v4845 = vpack.c.b16 %v4505, %v4501
        %v4846 = vpack.c.b16 %v4506, %v4502
        %v4847 = vpack.c.b16 %v4507, %v4503
        %v4848 = vpack.c.b16 %v4508, %v4504
        %v4849 = vpack.c.b16 %v4513, %v4509
        %v4850 = vpack.c.b16 %v4514, %v4510
        %v4851 = vpack.c.b16 %v4515, %v4511
        %v4852 = vpack.c.b16 %v4516, %v4512
        %v4853 = vpack.c.b16 %v4521, %v4517
        %v4854 = vpack.c.b16 %v4522, %v4518
        %v4855 = vpack.c.b16 %v4523, %v4519
        %v4856 = vpack.c.b16 %v4524, %v4520
        %v4857 = vpack.c.b16 %v4529, %v4525
        %v4858 = vpack.c.b16 %v4530, %v4526
        %v4859 = vpack.c.b16 %v4531, %v4527
        %v4860 = vpack.c.b16 %v4532, %v4528
        %v4861 = vpack.c.b16 %v4537, %v4533
        %v4862 = vpack.c.b16 %v4538, %v4534
        %v4863 = vpack.c.b16 %v4539, %v4535
        %v4864 = vpack.c.b16 %v4540, %v4536
        %v4865 = vpack.c.b16 %v4545, %v4541
        %v4866 = vpack.c.b16 %v4546, %v4542
        %v4867 = vpack.c.b16 %v4547, %v4543
        %v4868 = vpack.c.b16 %v4548, %v4544
        %v4869 = vpack.c.b16 %v4553, %v4549
        %v4870 = vpack.c.b16 %v4554, %v4550
        %v4871 = vpack.c.b16 %v4555, %v4551
        %v4872 = vpack.c.b16 %v4556, %v4552
        %v4873 = vpack.c.b16 %v4561, %v4557
        %v4874 = vpack.c.b16 %v4562, %v4558
        %v4875 = vpack.c.b16 %v4563, %v4559
        %v4876 = vpack.c.b16 %v4564, %v4560
        %v4877 = vpack.c.b16 %v4569, %v4565
        %v4878 = vpack.c.b16 %v4570, %v4566
        %v4879 = vpack.c.b16 %v4571, %v4567
        %v4880 = vpack.c.b16 %v4572, %v4568
        %v4881 = vpack.c.b16 %v4577, %v4573
        %v4882 = vpack.c.b16 %v4578, %v4574
        %v4883 = vpack.c.b16 %v4579, %v4575
        %v4884 = vpack.c.b16 %v4580, %v4576
        %v4885 = vpack.c.b16 %v4585, %v4581
        %v4886 = vpack.c.b16 %v4586, %v4582
        %v4887 = vpack.c.b16 %v4587, %v4583
        %v4888 = vpack.c.b16 %v4588, %v4584
        %v4889 = vpack.c.b16 %v4593, %v4589
        %v4890 = vpack.c.b16 %v4594, %v4590
        %v4891 = vpack.c.b16 %v4595, %v4591
        %v4892 = vpack.c.b16 %v4596, %v4592
        %v4893 = vpack.c.b16 %v4601, %v4597
        %v4894 = vpack.c.b16 %v4602, %v4598
        %v4895 = vpack.c.b16 %v4603, %v4599
        %v4896 = vpack.c.b16 %v4604, %v4600
        %v4897 = vpack.c.b16 %v4609, %v4605
        %v4898 = vpack.c.b16 %v4610, %v4606
        %v4899 = vpack.c.b16 %v4611, %v4607
        %v4900 = vpack.c.b16 %v4612, %v4608
        %v4901 = vpack.c.b16 %v4617, %v4613
        %v4902 = vpack.c.b16 %v4618, %v4614
        %v4903 = vpack.c.b16 %v4619, %v4615
        %v4904 = vpack.c.b16 %v4620, %v4616
        %v4905 = vpack.c.b16 %v4625, %v4621
        %v4906 = vpack.c.b16 %v4626, %v4622
        %v4907 = vpack.c.b16 %v4627, %v4623
        %v4908 = vpack.c.b16 %v4628, %v4624
        %v4909 = vpack.c.b16 %v4633, %v4629
        %v4910 = vpack.c.b16 %v4634, %v4630
        %v4911 = vpack.c.b16 %v4635, %v4631
        %v4912 = vpack.c.b16 %v4636, %v4632
        %v4913 = vpack.c.b16 %v4641, %v4637
        %v4914 = vpack.c.b16 %v4642, %v4638
        %v4915 = vpack.c.b16 %v4643, %v4639
        %v4916 = vpack.c.b16 %v4644, %v4640
        %v4917 = vpack.c.b16 %v4649, %v4645
        %v4918 = vpack.c.b16 %v4650, %v4646
        %v4919 = vpack.c.b16 %v4651, %v4647
        %v4920 = vpack.c.b16 %v4652, %v4648
        %v4921 = vpack.c.b16 %v4657, %v4653
        %v4922 = vpack.c.b16 %v4658, %v4654
        %v4923 = vpack.c.b16 %v4659, %v4655
        %v4924 = vpack.c.b16 %v4660, %v4656
        %v4925 = vpack.c.b16 %v4665, %v4661
        %v4926 = vpack.c.b16 %v4666, %v4662
        %v4927 = vpack.c.b16 %v4667, %v4663
        %v4928 = vpack.c.b16 %v4668, %v4664
        %v4929 = vpack.c.b16 %v4673, %v4669
        %v4930 = vpack.c.b16 %v4674, %v4670
        %v4931 = vpack.c.b16 %v4675, %v4671
        %v4932 = vpack.c.b16 %v4676, %v4672
        %5189 = vmatprep.subr.bf16.mxu0 %v4678
        %5190 = vmatpush1.bf16.msra.mxu0 %v4677
        %5191 = vmatprep.subr.bf16.mxu0 %v4682
        %5192 = vmatpush1.bf16.msra.mxu0 %v4681
        %5193 = vmatprep.subr.bf16.mxu0 %v4686
        %5194 = vmatpush1.bf16.msra.mxu0 %v4685
        %5195 = vmatprep.subr.bf16.mxu0 %v4690
        %5196 = vmatpush1.bf16.msra.mxu0 %v4689
        %5197 = vmatprep.subr.bf16.mxu0 %v4694
        %5198 = vmatpush1.bf16.msra.mxu0 %v4693
        %5199 = vmatprep.subr.bf16.mxu0 %v4698
        %5200 = vmatpush1.bf16.msra.mxu0 %v4697
        %5201 = vmatprep.subr.bf16.mxu0 %v4702
        %5202 = vmatpush1.bf16.msra.mxu0 %v4701
        %5203 = vmatprep.subr.bf16.mxu0 %v4706
        %5204 = vmatpush1.bf16.msra.mxu0 %v4705
        %5205 = vmatprep.subr.bf16.mxu0 %v4710
        %5206 = vmatpush1.bf16.msra.mxu0 %v4709
        %5207 = vmatprep.subr.bf16.mxu0 %v4714
        %5208 = vmatpush1.bf16.msra.mxu0 %v4713
        %5209 = vmatprep.subr.bf16.mxu0 %v4718
        %5210 = vmatpush1.bf16.msra.mxu0 %v4717
        %5211 = vmatprep.subr.bf16.mxu0 %v4722
        %5212 = vmatpush1.bf16.msra.mxu0 %v4721
        %5213 = vmatprep.subr.bf16.mxu0 %v4726
        %5214 = vmatpush1.bf16.msra.mxu0 %v4725
        %5215 = vmatprep.subr.bf16.mxu0 %v4730
        %5216 = vmatpush1.bf16.msra.mxu0 %v4729
        %5217 = vmatprep.subr.bf16.mxu0 %v4734
        %5218 = vmatpush1.bf16.msra.mxu0 %v4733
        %5219 = vmatprep.subr.bf16.mxu0 %v4738
        %5220 = vmatpush1.bf16.msra.mxu0 %v4737
        %5221 = vmatprep.mubr.bf16.mxu0 %v1664
        %5222 = vmatmul.mubr.bf16.gmra.mrb[0].mxu0 %v1663
        %v5223 = vpop.f32.mrb[0].mxu0
        %v5224 = vadd.f32 %v3896, %v5223
        %v5225 = vpop.f32.mrb[0].mxu0
        %v5226 = vadd.f32 %v3900, %v5225
        %v5227 = vpop.f32.mrb[0].mxu0
        %v5228 = vadd.f32 %v3896, %v5227
        %v5229 = vpop.f32.mrb[0].mxu0
        %v5230 = vadd.f32 %v3900, %v5229
        %5231 = vdwg.mxu0
        %5232 = vmatprep.subr.bf16.mxu0 %v4742
        %5233 = vmatpush1.bf16.msra.mxu0 %v4741
        %5234 = vmatprep.subr.bf16.mxu0 %v4746
        %5235 = vmatpush1.bf16.msra.mxu0 %v4745
        %5236 = vmatprep.subr.bf16.mxu0 %v4750
        %5237 = vmatpush1.bf16.msra.mxu0 %v4749
        %5238 = vmatprep.subr.bf16.mxu0 %v4754
        %5239 = vmatpush1.bf16.msra.mxu0 %v4753
        %5240 = vmatprep.subr.bf16.mxu0 %v4758
        %5241 = vmatpush1.bf16.msra.mxu0 %v4757
        %5242 = vmatprep.subr.bf16.mxu0 %v4762
        %5243 = vmatpush1.bf16.msra.mxu0 %v4761
        %5244 = vmatprep.subr.bf16.mxu0 %v4766
        %5245 = vmatpush1.bf16.msra.mxu0 %v4765
        %5246 = vmatprep.subr.bf16.mxu0 %v4770
        %5247 = vmatpush1.bf16.msra.mxu0 %v4769
        %5248 = vmatprep.subr.bf16.mxu0 %v4774
        %5249 = vmatpush1.bf16.msra.mxu0 %v4773
        %5250 = vmatprep.subr.bf16.mxu0 %v4778
        %5251 = vmatpush1.bf16.msra.mxu0 %v4777
        %5252 = vmatprep.subr.bf16.mxu0 %v4782
        %5253 = vmatpush1.bf16.msra.mxu0 %v4781
        %5254 = vmatprep.subr.bf16.mxu0 %v4786
        %5255 = vmatpush1.bf16.msra.mxu0 %v4785
        %5256 = vmatprep.subr.bf16.mxu0 %v4790
        %5257 = vmatpush1.bf16.msra.mxu0 %v4789
        %5258 = vmatprep.subr.bf16.mxu0 %v4794
        %5259 = vmatpush1.bf16.msra.mxu0 %v4793
        %5260 = vmatprep.subr.bf16.mxu0 %v4798
        %5261 = vmatpush1.bf16.msra.mxu0 %v4797
        %5262 = vmatprep.subr.bf16.mxu0 %v4802
        %5263 = vmatpush1.bf16.msra.mxu0 %v4801
        %5264 = vmatprep.mubr.bf16.mxu0 %v1666
        %5265 = vmatmul.mubr.bf16.gmra.mrb[0].mxu0 %v1665
        %v5266 = vpop.f32.mrb[0].mxu0
        %v5267 = vadd.f32 %v5224, %v5266
        %v5268 = vpop.f32.mrb[0].mxu0
        %v5269 = vadd.f32 %v5226, %v5268
        %v5270 = vpop.f32.mrb[0].mxu0
        %v5271 = vadd.f32 %v5228, %v5270
        %v5272 = vpop.f32.mrb[0].mxu0
        %v5273 = vadd.f32 %v5230, %v5272
        %5274 = vdwg.mxu0
        %5275 = vmatprep.subr.bf16.mxu0 %v4806
        %5276 = vmatpush1.bf16.msra.mxu0 %v4805
        %5277 = vmatprep.subr.bf16.mxu0 %v4810
        %5278 = vmatpush1.bf16.msra.mxu0 %v4809
        %5279 = vmatprep.subr.bf16.mxu0 %v4814
        %5280 = vmatpush1.bf16.msra.mxu0 %v4813
        %5281 = vmatprep.subr.bf16.mxu0 %v4818
        %5282 = vmatpush1.bf16.msra.mxu0 %v4817
        %5283 = vmatprep.subr.bf16.mxu0 %v4822
        %5284 = vmatpush1.bf16.msra.mxu0 %v4821
        %5285 = vmatprep.subr.bf16.mxu0 %v4826
        %5286 = vmatpush1.bf16.msra.mxu0 %v4825
        %5287 = vmatprep.subr.bf16.mxu0 %v4830
        %5288 = vmatpush1.bf16.msra.mxu0 %v4829
        %5289 = vmatprep.subr.bf16.mxu0 %v4834
        %5290 = vmatpush1.bf16.msra.mxu0 %v4833
        %5291 = vmatprep.subr.bf16.mxu0 %v4838
        %5292 = vmatpush1.bf16.msra.mxu0 %v4837
        %5293 = vmatprep.subr.bf16.mxu0 %v4842
        %5294 = vmatpush1.bf16.msra.mxu0 %v4841
        %5295 = vmatprep.subr.bf16.mxu0 %v4846
        %5296 = vmatpush1.bf16.msra.mxu0 %v4845
        %5297 = vmatprep.subr.bf16.mxu0 %v4850
        %5298 = vmatpush1.bf16.msra.mxu0 %v4849
        %5299 = vmatprep.subr.bf16.mxu0 %v4854
        %5300 = vmatpush1.bf16.msra.mxu0 %v4853
        %5301 = vmatprep.subr.bf16.mxu0 %v4858
        %5302 = vmatpush1.bf16.msra.mxu0 %v4857
        %5303 = vmatprep.subr.bf16.mxu0 %v4862
        %5304 = vmatpush1.bf16.msra.mxu0 %v4861
        %5305 = vmatprep.subr.bf16.mxu0 %v4866
        %5306 = vmatpush1.bf16.msra.mxu0 %v4865
        %5307 = vmatprep.mubr.bf16.mxu0 %v1668
        %5308 = vmatmul.mubr.bf16.gmra.mrb[0].mxu0 %v1667
        %v5309 = vpop.f32.mrb[0].mxu0
        %v5310 = vadd.f32 %v5267, %v5309
        %v5311 = vpop.f32.mrb[0].mxu0
        %v5312 = vadd.f32 %v5269, %v5311
        %v5313 = vpop.f32.mrb[0].mxu0
        %v5314 = vadd.f32 %v5271, %v5313
        %v5315 = vpop.f32.mrb[0].mxu0
        %v5316 = vadd.f32 %v5273, %v5315
        %5317 = vdwg.mxu0
        %5318 = vmatprep.subr.bf16.mxu0 %v4870
        %5319 = vmatpush1.bf16.msra.mxu0 %v4869
        %5320 = vmatprep.subr.bf16.mxu0 %v4874
        %5321 = vmatpush1.bf16.msra.mxu0 %v4873
        %5322 = vmatprep.subr.bf16.mxu0 %v4878
        %5323 = vmatpush1.bf16.msra.mxu0 %v4877
        %5324 = vmatprep.subr.bf16.mxu0 %v4882
        %5325 = vmatpush1.bf16.msra.mxu0 %v4881
        %5326 = vmatprep.subr.bf16.mxu0 %v4886
        %5327 = vmatpush1.bf16.msra.mxu0 %v4885
        %5328 = vmatprep.subr.bf16.mxu0 %v4890
        %5329 = vmatpush1.bf16.msra.mxu0 %v4889
        %5330 = vmatprep.subr.bf16.mxu0 %v4894
        %5331 = vmatpush1.bf16.msra.mxu0 %v4893
        %5332 = vmatprep.subr.bf16.mxu0 %v4898
        %5333 = vmatpush1.bf16.msra.mxu0 %v4897
        %5334 = vmatprep.subr.bf16.mxu0 %v4902
        %5335 = vmatpush1.bf16.msra.mxu0 %v4901
        %5336 = vmatprep.subr.bf16.mxu0 %v4906
        %5337 = vmatpush1.bf16.msra.mxu0 %v4905
        %5338 = vmatprep.subr.bf16.mxu0 %v4910
        %5339 = vmatpush1.bf16.msra.mxu0 %v4909
        %5340 = vmatprep.subr.bf16.mxu0 %v4914
        %5341 = vmatpush1.bf16.msra.mxu0 %v4913
        %5342 = vmatprep.subr.bf16.mxu0 %v4918
        %5343 = vmatpush1.bf16.msra.mxu0 %v4917
        %5344 = vmatprep.subr.bf16.mxu0 %v4922
        %5345 = vmatpush1.bf16.msra.mxu0 %v4921
        %5346 = vmatprep.subr.bf16.mxu0 %v4926
        %5347 = vmatpush1.bf16.msra.mxu0 %v4925
        %5348 = vmatprep.subr.bf16.mxu0 %v4930
        %5349 = vmatpush1.bf16.msra.mxu0 %v4929
        %5350 = vmatprep.mubr.bf16.mxu0 %v1670
        %5351 = vmatmul.mubr.bf16.gmra.mrb[0].mxu0 %v1669
        %v5352 = vpop.f32.mrb[0].mxu0
        %v5353 = vadd.f32 %v5310, %v5352
        %v5354 = vpop.f32.mrb[0].mxu0
        %v5355 = vadd.f32 %v5312, %v5354
        %v5356 = vpop.f32.mrb[0].mxu0
        %v5357 = vadd.f32 %v5314, %v5356
        %v5358 = vpop.f32.mrb[0].mxu0
        %v5359 = vadd.f32 %v5316, %v5358
        %5360 = vdwg.mxu0
        %5361 = vmatprep.subr.bf16.mxu0 %v4680
        %5362 = vmatpush1.bf16.msra.mxu0 %v4679
        %5363 = vmatprep.subr.bf16.mxu0 %v4684
        %5364 = vmatpush1.bf16.msra.mxu0 %v4683
        %5365 = vmatprep.subr.bf16.mxu0 %v4688
        %5366 = vmatpush1.bf16.msra.mxu0 %v4687
        %5367 = vmatprep.subr.bf16.mxu0 %v4692
        %5368 = vmatpush1.bf16.msra.mxu0 %v4691
        %5369 = vmatprep.subr.bf16.mxu0 %v4696
        %5370 = vmatpush1.bf16.msra.mxu0 %v4695
        %5371 = vmatprep.subr.bf16.mxu0 %v4700
        %5372 = vmatpush1.bf16.msra.mxu0 %v4699
        %5373 = vmatprep.subr.bf16.mxu0 %v4704
        %5374 = vmatpush1.bf16.msra.mxu0 %v4703
        %5375 = vmatprep.subr.bf16.mxu0 %v4708
        %5376 = vmatpush1.bf16.msra.mxu0 %v4707
        %5377 = vmatprep.subr.bf16.mxu0 %v4712
        %5378 = vmatpush1.bf16.msra.mxu0 %v4711
        %5379 = vmatprep.subr.bf16.mxu0 %v4716
        %5380 = vmatpush1.bf16.msra.mxu0 %v4715
        %5381 = vmatprep.subr.bf16.mxu0 %v4720
        %5382 = vmatpush1.bf16.msra.mxu0 %v4719
        %5383 = vmatprep.subr.bf16.mxu0 %v4724
        %5384 = vmatpush1.bf16.msra.mxu0 %v4723
        %5385 = vmatprep.subr.bf16.mxu0 %v4728
        %5386 = vmatpush1.bf16.msra.mxu0 %v4727
        %5387 = vmatprep.subr.bf16.mxu0 %v4732
        %5388 = vmatpush1.bf16.msra.mxu0 %v4731
        %5389 = vmatprep.subr.bf16.mxu0 %v4736
        %5390 = vmatpush1.bf16.msra.mxu0 %v4735
        %5391 = vmatprep.subr.bf16.mxu0 %v4740
        %5392 = vmatpush1.bf16.msra.mxu0 %v4739
        %5393 = vmatprep.mubr.bf16.mxu0 %v1664
        %5394 = vmatmul.mubr.bf16.gmra.mrb[0].mxu0 %v1663
        %v5395 = vpop.f32.mrb[0].mxu0
        %v5396 = vadd.f32 %v3904, %v5395
        %v5397 = vpop.f32.mrb[0].mxu0
        %v5398 = vadd.f32 %v3908, %v5397
        %v5399 = vpop.f32.mrb[0].mxu0
        %v5400 = vadd.f32 %v3904, %v5399
        %v5401 = vpop.f32.mrb[0].mxu0
        %v5402 = vadd.f32 %v3908, %v5401
        %5403 = vdwg.mxu0
        %5404 = vmatprep.subr.bf16.mxu0 %v4744
        %5405 = vmatpush1.bf16.msra.mxu0 %v4743
        %5406 = vmatprep.subr.bf16.mxu0 %v4748
        %5407 = vmatpush1.bf16.msra.mxu0 %v4747
        %5408 = vmatprep.subr.bf16.mxu0 %v4752
        %5409 = vmatpush1.bf16.msra.mxu0 %v4751
        %5410 = vmatprep.subr.bf16.mxu0 %v4756
        %5411 = vmatpush1.bf16.msra.mxu0 %v4755
        %5412 = vmatprep.subr.bf16.mxu0 %v4760
        %5413 = vmatpush1.bf16.msra.mxu0 %v4759
        %5414 = vmatprep.subr.bf16.mxu0 %v4764
        %5415 = vmatpush1.bf16.msra.mxu0 %v4763
        %5416 = vmatprep.subr.bf16.mxu0 %v4768
        %5417 = vmatpush1.bf16.msra.mxu0 %v4767
        %5418 = vmatprep.subr.bf16.mxu0 %v4772
        %5419 = vmatpush1.bf16.msra.mxu0 %v4771
        %5420 = vmatprep.subr.bf16.mxu0 %v4776
        %5421 = vmatpush1.bf16.msra.mxu0 %v4775
        %5422 = vmatprep.subr.bf16.mxu0 %v4780
        %5423 = vmatpush1.bf16.msra.mxu0 %v4779
        %5424 = vmatprep.subr.bf16.mxu0 %v4784
        %5425 = vmatpush1.bf16.msra.mxu0 %v4783
        %5426 = vmatprep.subr.bf16.mxu0 %v4788
        %5427 = vmatpush1.bf16.msra.mxu0 %v4787
        %5428 = vmatprep.subr.bf16.mxu0 %v4792
        %5429 = vmatpush1.bf16.msra.mxu0 %v4791
        %5430 = vmatprep.subr.bf16.mxu0 %v4796
        %5431 = vmatpush1.bf16.msra.mxu0 %v4795
        %5432 = vmatprep.subr.bf16.mxu0 %v4800
        %5433 = vmatpush1.bf16.msra.mxu0 %v4799
        %5434 = vmatprep.subr.bf16.mxu0 %v4804
        %5435 = vmatpush1.bf16.msra.mxu0 %v4803
        %5436 = vmatprep.mubr.bf16.mxu0 %v1666
        %5437 = vmatmul.mubr.bf16.gmra.mrb[0].mxu0 %v1665
        %v5438 = vpop.f32.mrb[0].mxu0
        %v5439 = vadd.f32 %v5396, %v5438
        %v5440 = vpop.f32.mrb[0].mxu0
        %v5441 = vadd.f32 %v5398, %v5440
        %v5442 = vpop.f32.mrb[0].mxu0
        %v5443 = vadd.f32 %v5400, %v5442
        %v5444 = vpop.f32.mrb[0].mxu0
        %v5445 = vadd.f32 %v5402, %v5444
        %5446 = vdwg.mxu0
        %5447 = vmatprep.subr.bf16.mxu0 %v4808
        %5448 = vmatpush1.bf16.msra.mxu0 %v4807
        %5449 = vmatprep.subr.bf16.mxu0 %v4812
        %5450 = vmatpush1.bf16.msra.mxu0 %v4811
        %5451 = vmatprep.subr.bf16.mxu0 %v4816
        %5452 = vmatpush1.bf16.msra.mxu0 %v4815
        %5453 = vmatprep.subr.bf16.mxu0 %v4820
        %5454 = vmatpush1.bf16.msra.mxu0 %v4819
        %5455 = vmatprep.subr.bf16.mxu0 %v4824
        %5456 = vmatpush1.bf16.msra.mxu0 %v4823
        %5457 = vmatprep.subr.bf16.mxu0 %v4828
        %5458 = vmatpush1.bf16.msra.mxu0 %v4827
        %5459 = vmatprep.subr.bf16.mxu0 %v4832
        %5460 = vmatpush1.bf16.msra.mxu0 %v4831
        %5461 = vmatprep.subr.bf16.mxu0 %v4836
        %5462 = vmatpush1.bf16.msra.mxu0 %v4835
        %5463 = vmatprep.subr.bf16.mxu0 %v4840
        %5464 = vmatpush1.bf16.msra.mxu0 %v4839
        %5465 = vmatprep.subr.bf16.mxu0 %v4844
        %5466 = vmatpush1.bf16.msra.mxu0 %v4843
        %5467 = vmatprep.subr.bf16.mxu0 %v4848
        %5468 = vmatpush1.bf16.msra.mxu0 %v4847
        %5469 = vmatprep.subr.bf16.mxu0 %v4852
        %5470 = vmatpush1.bf16.msra.mxu0 %v4851
        %5471 = vmatprep.subr.bf16.mxu0 %v4856
        %5472 = vmatpush1.bf16.msra.mxu0 %v4855
        %5473 = vmatprep.subr.bf16.mxu0 %v4860
        %5474 = vmatpush1.bf16.msra.mxu0 %v4859
        %5475 = vmatprep.subr.bf16.mxu0 %v4864
        %5476 = vmatpush1.bf16.msra.mxu0 %v4863
        %5477 = vmatprep.subr.bf16.mxu0 %v4868
        %5478 = vmatpush1.bf16.msra.mxu0 %v4867
        %5479 = vmatprep.mubr.bf16.mxu0 %v1668
        %5480 = vmatmul.mubr.bf16.gmra.mrb[0].mxu0 %v1667
        %v5481 = vpop.f32.mrb[0].mxu0
        %v5482 = vadd.f32 %v5439, %v5481
        %v5483 = vpop.f32.mrb[0].mxu0
        %v5484 = vadd.f32 %v5441, %v5483
        %v5485 = vpop.f32.mrb[0].mxu0
        %v5486 = vadd.f32 %v5443, %v5485
        %v5487 = vpop.f32.mrb[0].mxu0
        %v5488 = vadd.f32 %v5445, %v5487
        %5489 = vdwg.mxu0
        %5490 = vmatprep.subr.bf16.mxu0 %v4872
        %5491 = vmatpush1.bf16.msra.mxu0 %v4871
        %5492 = vmatprep.subr.bf16.mxu0 %v4876
        %5493 = vmatpush1.bf16.msra.mxu0 %v4875
        %5494 = vmatprep.subr.bf16.mxu0 %v4880
        %5495 = vmatpush1.bf16.msra.mxu0 %v4879
        %5496 = vmatprep.subr.bf16.mxu0 %v4884
        %5497 = vmatpush1.bf16.msra.mxu0 %v4883
        %5498 = vmatprep.subr.bf16.mxu0 %v4888
        %5499 = vmatpush1.bf16.msra.mxu0 %v4887
        %5500 = vmatprep.subr.bf16.mxu0 %v4892
        %5501 = vmatpush1.bf16.msra.mxu0 %v4891
        %5502 = vmatprep.subr.bf16.mxu0 %v4896
        %5503 = vmatpush1.bf16.msra.mxu0 %v4895
        %5504 = vmatprep.subr.bf16.mxu0 %v4900
        %5505 = vmatpush1.bf16.msra.mxu0 %v4899
        %5506 = vmatprep.subr.bf16.mxu0 %v4904
        %5507 = vmatpush1.bf16.msra.mxu0 %v4903
        %5508 = vmatprep.subr.bf16.mxu0 %v4908
        %5509 = vmatpush1.bf16.msra.mxu0 %v4907
        %5510 = vmatprep.subr.bf16.mxu0 %v4912
        %5511 = vmatpush1.bf16.msra.mxu0 %v4911
        %5512 = vmatprep.subr.bf16.mxu0 %v4916
        %5513 = vmatpush1.bf16.msra.mxu0 %v4915
        %5514 = vmatprep.subr.bf16.mxu0 %v4920
        %5515 = vmatpush1.bf16.msra.mxu0 %v4919
        %5516 = vmatprep.subr.bf16.mxu0 %v4924
        %5517 = vmatpush1.bf16.msra.mxu0 %v4923
        %5518 = vmatprep.subr.bf16.mxu0 %v4928
        %5519 = vmatpush1.bf16.msra.mxu0 %v4927
        %5520 = vmatprep.subr.bf16.mxu0 %v4932
        %5521 = vmatpush1.bf16.msra.mxu0 %v4931
        %5522 = vmatprep.mubr.bf16.mxu0 %v1670
        %5523 = vmatmul.mubr.bf16.gmra.mrb[0].mxu0 %v1669
        %v5524 = vpop.f32.mrb[0].mxu0
        %v5525 = vadd.f32 %v5482, %v5524
        %v5526 = vpop.f32.mrb[0].mxu0
        %v5527 = vadd.f32 %v5484, %v5526
        %v5528 = vpop.f32.mrb[0].mxu0
        %v5529 = vadd.f32 %v5486, %v5528
        %v5530 = vpop.f32.mrb[0].mxu0
        %v5531 = vadd.f32 %v5488, %v5530
        %5532 = vdwg.mxu0
        %v5533 = vmax.f32 %v5353, 0.0
        %v5534 = vmax.f32 %v5355, 0.0
        %v5535 = vmax.f32 %v5525, 0.0
        %v5536 = vmax.f32 %v5527, 0.0
        %v5537 = vmax.f32 %v5357, 0.0
        %v5538 = vmax.f32 %v5359, 0.0
        %v5539 = vmax.f32 %v5529, 0.0
        %v5540 = vmax.f32 %v5531, 0.0
        %v5541 = vpack.c.bf16 %v5537, %v5533
        %v5542 = vpack.c.bf16 %v5538, %v5534
        %v5543 = vpack.c.bf16 %v5539, %v5535
        %v5544 = vpack.c.bf16 %v5540, %v5536
        %v5545 = vld [vmem:[#allocation17] sm:$0xff]
        %v5546 = vld [vmem:[#allocation17 + $0x8] sm:$0xff]
        %v5547 = vld [vmem:[#allocation17 + $0x10] sm:$0xff]
        %v5548 = vld [vmem:[#allocation17 + $0x18] sm:$0xff]
        %v5549 = vld [vmem:[#allocation17 + $0x20] sm:$0xff]
        %v5550 = vld [vmem:[#allocation17 + $0x28] sm:$0xff]
        %v5551 = vld [vmem:[#allocation17 + $0x30] sm:$0xff]
        %v5552 = vld [vmem:[#allocation17 + $0x38] sm:$0xff]
        %v5553 = vld [vmem:[#allocation17 + $0x40] sm:$0xff]
        %v5554 = vld [vmem:[#allocation17 + $0x48] sm:$0xff]
        %v5555 = vld [vmem:[#allocation17 + $0x50] sm:$0xff]
        %v5556 = vld [vmem:[#allocation17 + $0x58] sm:$0xff]
        %v5557 = vld [vmem:[#allocation17 + $0x60] sm:$0xff]
        %v5558 = vld [vmem:[#allocation17 + $0x68] sm:$0xff]
        %v5559 = vld [vmem:[#allocation17 + $0x70] sm:$0xff]
        %v5560 = vld [vmem:[#allocation17 + $0x78] sm:$0xff]
        %v5561 = vld [vmem:[#allocation17 + $0x80] sm:$0xff]
        %v5562 = vld [vmem:[#allocation17 + $0x88] sm:$0xff]
        %v5563 = vld [vmem:[#allocation17 + $0x90] sm:$0xff]
        %v5564 = vld [vmem:[#allocation17 + $0x98] sm:$0xff]
        %v5565 = vld [vmem:[#allocation17 + $0xa0] sm:$0xff]
        %v5566 = vld [vmem:[#allocation17 + $0xa8] sm:$0xff]
        %v5567 = vld [vmem:[#allocation17 + $0xb0] sm:$0xff]
        %v5568 = vld [vmem:[#allocation17 + $0xb8] sm:$0xff]
        %v5569 = vld [vmem:[#allocation17 + $0xc0] sm:$0xff]
        %v5570 = vld [vmem:[#allocation17 + $0xc8] sm:$0xff]
        %v5571 = vld [vmem:[#allocation17 + $0xd0] sm:$0xff]
        %v5572 = vld [vmem:[#allocation17 + $0xd8] sm:$0xff]
        %v5573 = vld [vmem:[#allocation17 + $0xe0] sm:$0xff]
        %v5574 = vld [vmem:[#allocation17 + $0xe8] sm:$0xff]
        %v5575 = vld [vmem:[#allocation17 + $0xf0] sm:$0xff]
        %v5576 = vld [vmem:[#allocation17 + $0xf8] sm:$0xff]
        %v5577 = vld [vmem:[#allocation17 + $0x100] sm:$0xff]
        %v5578 = vld [vmem:[#allocation17 + $0x108] sm:$0xff]
        %v5579 = vld [vmem:[#allocation17 + $0x110] sm:$0xff]
        %v5580 = vld [vmem:[#allocation17 + $0x118] sm:$0xff]
        %v5581 = vld [vmem:[#allocation17 + $0x120] sm:$0xff]
        %v5582 = vld [vmem:[#allocation17 + $0x128] sm:$0xff]
        %v5583 = vld [vmem:[#allocation17 + $0x130] sm:$0xff]
        %v5584 = vld [vmem:[#allocation17 + $0x138] sm:$0xff]
        %v5585 = vld [vmem:[#allocation17 + $0x140] sm:$0xff]
        %v5586 = vld [vmem:[#allocation17 + $0x148] sm:$0xff]
        %v5587 = vld [vmem:[#allocation17 + $0x150] sm:$0xff]
        %v5588 = vld [vmem:[#allocation17 + $0x158] sm:$0xff]
        %v5589 = vld [vmem:[#allocation17 + $0x160] sm:$0xff]
        %v5590 = vld [vmem:[#allocation17 + $0x168] sm:$0xff]
        %v5591 = vld [vmem:[#allocation17 + $0x170] sm:$0xff]
        %v5592 = vld [vmem:[#allocation17 + $0x178] sm:$0xff]
        %v5593 = vld [vmem:[#allocation17 + $0x180] sm:$0xff]
        %v5594 = vld [vmem:[#allocation17 + $0x188] sm:$0xff]
        %v5595 = vld [vmem:[#allocation17 + $0x190] sm:$0xff]
        %v5596 = vld [vmem:[#allocation17 + $0x198] sm:$0xff]
        %v5597 = vld [vmem:[#allocation17 + $0x1a0] sm:$0xff]
        %v5598 = vld [vmem:[#allocation17 + $0x1a8] sm:$0xff]
        %v5599 = vld [vmem:[#allocation17 + $0x1b0] sm:$0xff]
        %v5600 = vld [vmem:[#allocation17 + $0x1b8] sm:$0xff]
        %v5601 = vld [vmem:[#allocation17 + $0x1c0] sm:$0xff]
        %v5602 = vld [vmem:[#allocation17 + $0x1c8] sm:$0xff]
        %v5603 = vld [vmem:[#allocation17 + $0x1d0] sm:$0xff]
        %v5604 = vld [vmem:[#allocation17 + $0x1d8] sm:$0xff]
        %v5605 = vld [vmem:[#allocation17 + $0x1e0] sm:$0xff]
        %v5606 = vld [vmem:[#allocation17 + $0x1e8] sm:$0xff]
        %v5607 = vld [vmem:[#allocation17 + $0x1f0] sm:$0xff]
        %v5608 = vld [vmem:[#allocation17 + $0x1f8] sm:$0xff]
        %v5609 = vld [vmem:[%s15] sm:$0x3]
        %v5611 = vlaneseq
        %v5612 = vshrl.u32 %v5611, 7
        %v5613 = vsub.s32 0, %v5612
        %v5614 = vrot.slane %v5609, %v5613
        %v5615 = vlaneseq
        %v5616 = vshrl.u32 %v5615, 7
        %v5617 = vsub.s32 1, %v5616
        %v5618 = vrot.slane %v5609, %v5617
        %v5685 = vunpack.c.l.b16 %v5545
        %v5686 = vunpack.c.h.b16 %v5545
        %v5687 = vunpack.c.l.b16 %v5546
        %v5688 = vunpack.c.h.b16 %v5546
        %v5689 = vunpack.c.l.b16 %v5547
        %v5690 = vunpack.c.h.b16 %v5547
        %v5691 = vunpack.c.l.b16 %v5548
        %v5692 = vunpack.c.h.b16 %v5548
        %v5693 = vunpack.c.l.b16 %v5549
        %v5694 = vunpack.c.h.b16 %v5549
        %v5695 = vunpack.c.l.b16 %v5550
        %v5696 = vunpack.c.h.b16 %v5550
        %v5697 = vunpack.c.l.b16 %v5551
        %v5698 = vunpack.c.h.b16 %v5551
        %v5699 = vunpack.c.l.b16 %v5552
        %v5700 = vunpack.c.h.b16 %v5552
        %v5701 = vunpack.c.l.b16 %v5553
        %v5702 = vunpack.c.h.b16 %v5553
        %v5703 = vunpack.c.l.b16 %v5554
        %v5704 = vunpack.c.h.b16 %v5554
        %v5705 = vunpack.c.l.b16 %v5555
        %v5706 = vunpack.c.h.b16 %v5555
        %v5707 = vunpack.c.l.b16 %v5556
        %v5708 = vunpack.c.h.b16 %v5556
        %v5709 = vunpack.c.l.b16 %v5557
        %v5710 = vunpack.c.h.b16 %v5557
        %v5711 = vunpack.c.l.b16 %v5558
        %v5712 = vunpack.c.h.b16 %v5558
        %v5713 = vunpack.c.l.b16 %v5559
        %v5714 = vunpack.c.h.b16 %v5559
        %v5715 = vunpack.c.l.b16 %v5560
        %v5716 = vunpack.c.h.b16 %v5560
        %v5717 = vunpack.c.l.b16 %v5561
        %v5718 = vunpack.c.h.b16 %v5561
        %v5719 = vunpack.c.l.b16 %v5562
        %v5720 = vunpack.c.h.b16 %v5562
        %v5721 = vunpack.c.l.b16 %v5563
        %v5722 = vunpack.c.h.b16 %v5563
        %v5723 = vunpack.c.l.b16 %v5564
        %v5724 = vunpack.c.h.b16 %v5564
        %v5725 = vunpack.c.l.b16 %v5565
        %v5726 = vunpack.c.h.b16 %v5565
        %v5727 = vunpack.c.l.b16 %v5566
        %v5728 = vunpack.c.h.b16 %v5566
        %v5729 = vunpack.c.l.b16 %v5567
        %v5730 = vunpack.c.h.b16 %v5567
        %v5731 = vunpack.c.l.b16 %v5568
        %v5732 = vunpack.c.h.b16 %v5568
        %v5733 = vunpack.c.l.b16 %v5569
        %v5734 = vunpack.c.h.b16 %v5569
        %v5735 = vunpack.c.l.b16 %v5570
        %v5736 = vunpack.c.h.b16 %v5570
        %v5737 = vunpack.c.l.b16 %v5571
        %v5738 = vunpack.c.h.b16 %v5571
        %v5739 = vunpack.c.l.b16 %v5572
        %v5740 = vunpack.c.h.b16 %v5572
        %v5741 = vunpack.c.l.b16 %v5573
        %v5742 = vunpack.c.h.b16 %v5573
        %v5743 = vunpack.c.l.b16 %v5574
        %v5744 = vunpack.c.h.b16 %v5574
        %v5745 = vunpack.c.l.b16 %v5575
        %v5746 = vunpack.c.h.b16 %v5575
        %v5747 = vunpack.c.l.b16 %v5576
        %v5748 = vunpack.c.h.b16 %v5576
        %v5749 = vunpack.c.l.b16 %v5577
        %v5750 = vunpack.c.h.b16 %v5577
        %v5751 = vunpack.c.l.b16 %v5578
        %v5752 = vunpack.c.h.b16 %v5578
        %v5753 = vunpack.c.l.b16 %v5579
        %v5754 = vunpack.c.h.b16 %v5579
        %v5755 = vunpack.c.l.b16 %v5580
        %v5756 = vunpack.c.h.b16 %v5580
        %v5757 = vunpack.c.l.b16 %v5581
        %v5758 = vunpack.c.h.b16 %v5581
        %v5759 = vunpack.c.l.b16 %v5582
        %v5760 = vunpack.c.h.b16 %v5582
        %v5761 = vunpack.c.l.b16 %v5583
        %v5762 = vunpack.c.h.b16 %v5583
        %v5763 = vunpack.c.l.b16 %v5584
        %v5764 = vunpack.c.h.b16 %v5584
        %v5765 = vunpack.c.l.b16 %v5585
        %v5766 = vunpack.c.h.b16 %v5585
        %v5767 = vunpack.c.l.b16 %v5586
        %v5768 = vunpack.c.h.b16 %v5586
        %v5769 = vunpack.c.l.b16 %v5587
        %v5770 = vunpack.c.h.b16 %v5587
        %v5771 = vunpack.c.l.b16 %v5588
        %v5772 = vunpack.c.h.b16 %v5588
        %v5773 = vunpack.c.l.b16 %v5589
        %v5774 = vunpack.c.h.b16 %v5589
        %v5775 = vunpack.c.l.b16 %v5590
        %v5776 = vunpack.c.h.b16 %v5590
        %v5777 = vunpack.c.l.b16 %v5591
        %v5778 = vunpack.c.h.b16 %v5591
        %v5779 = vunpack.c.l.b16 %v5592
        %v5780 = vunpack.c.h.b16 %v5592
        %v5781 = vunpack.c.l.b16 %v5593
        %v5782 = vunpack.c.h.b16 %v5593
        %v5783 = vunpack.c.l.b16 %v5594
        %v5784 = vunpack.c.h.b16 %v5594
        %v5785 = vunpack.c.l.b16 %v5595
        %v5786 = vunpack.c.h.b16 %v5595
        %v5787 = vunpack.c.l.b16 %v5596
        %v5788 = vunpack.c.h.b16 %v5596
        %v5789 = vunpack.c.l.b16 %v5597
        %v5790 = vunpack.c.h.b16 %v5597
        %v5791 = vunpack.c.l.b16 %v5598
        %v5792 = vunpack.c.h.b16 %v5598
        %v5793 = vunpack.c.l.b16 %v5599
        %v5794 = vunpack.c.h.b16 %v5599
        %v5795 = vunpack.c.l.b16 %v5600
        %v5796 = vunpack.c.h.b16 %v5600
        %v5797 = vunpack.c.l.b16 %v5601
        %v5798 = vunpack.c.h.b16 %v5601
        %v5799 = vunpack.c.l.b16 %v5602
        %v5800 = vunpack.c.h.b16 %v5602
        %v5801 = vunpack.c.l.b16 %v5603
        %v5802 = vunpack.c.h.b16 %v5603
        %v5803 = vunpack.c.l.b16 %v5604
        %v5804 = vunpack.c.h.b16 %v5604
        %v5805 = vunpack.c.l.b16 %v5605
        %v5806 = vunpack.c.h.b16 %v5605
        %v5807 = vunpack.c.l.b16 %v5606
        %v5808 = vunpack.c.h.b16 %v5606
        %v5809 = vunpack.c.l.b16 %v5607
        %v5810 = vunpack.c.h.b16 %v5607
        %v5811 = vunpack.c.l.b16 %v5608
        %v5812 = vunpack.c.h.b16 %v5608
        %v5813 = vpack.c.b16 %v5687, %v5685
        %v5814 = vpack.c.b16 %v5688, %v5686
        %v5815 = vpack.c.b16 %v5691, %v5689
        %v5816 = vpack.c.b16 %v5692, %v5690
        %v5817 = vpack.c.b16 %v5695, %v5693
        %v5818 = vpack.c.b16 %v5696, %v5694
        %v5819 = vpack.c.b16 %v5699, %v5697
        %v5820 = vpack.c.b16 %v5700, %v5698
        %v5821 = vpack.c.b16 %v5703, %v5701
        %v5822 = vpack.c.b16 %v5704, %v5702
        %v5823 = vpack.c.b16 %v5707, %v5705
        %v5824 = vpack.c.b16 %v5708, %v5706
        %v5825 = vpack.c.b16 %v5711, %v5709
        %v5826 = vpack.c.b16 %v5712, %v5710
        %v5827 = vpack.c.b16 %v5715, %v5713
        %v5828 = vpack.c.b16 %v5716, %v5714
        %v5829 = vpack.c.b16 %v5719, %v5717
        %v5830 = vpack.c.b16 %v5720, %v5718
        %v5831 = vpack.c.b16 %v5723, %v5721
        %v5832 = vpack.c.b16 %v5724, %v5722
        %v5833 = vpack.c.b16 %v5727, %v5725
        %v5834 = vpack.c.b16 %v5728, %v5726
        %v5835 = vpack.c.b16 %v5731, %v5729
        %v5836 = vpack.c.b16 %v5732, %v5730
        %v5837 = vpack.c.b16 %v5735, %v5733
        %v5838 = vpack.c.b16 %v5736, %v5734
        %v5839 = vpack.c.b16 %v5739, %v5737
        %v5840 = vpack.c.b16 %v5740, %v5738
        %v5841 = vpack.c.b16 %v5743, %v5741
        %v5842 = vpack.c.b16 %v5744, %v5742
        %v5843 = vpack.c.b16 %v5747, %v5745
        %v5844 = vpack.c.b16 %v5748, %v5746
        %v5845 = vpack.c.b16 %v5751, %v5749
        %v5846 = vpack.c.b16 %v5752, %v5750
        %v5847 = vpack.c.b16 %v5755, %v5753
        %v5848 = vpack.c.b16 %v5756, %v5754
        %v5849 = vpack.c.b16 %v5759, %v5757
        %v5850 = vpack.c.b16 %v5760, %v5758
        %v5851 = vpack.c.b16 %v5763, %v5761
        %v5852 = vpack.c.b16 %v5764, %v5762
        %v5853 = vpack.c.b16 %v5767, %v5765
        %v5854 = vpack.c.b16 %v5768, %v5766
        %v5855 = vpack.c.b16 %v5771, %v5769
        %v5856 = vpack.c.b16 %v5772, %v5770
        %v5857 = vpack.c.b16 %v5775, %v5773
        %v5858 = vpack.c.b16 %v5776, %v5774
        %v5859 = vpack.c.b16 %v5779, %v5777
        %v5860 = vpack.c.b16 %v5780, %v5778
        %v5861 = vpack.c.b16 %v5783, %v5781
        %v5862 = vpack.c.b16 %v5784, %v5782
        %v5863 = vpack.c.b16 %v5787, %v5785
        %v5864 = vpack.c.b16 %v5788, %v5786
        %v5865 = vpack.c.b16 %v5791, %v5789
        %v5866 = vpack.c.b16 %v5792, %v5790
        %v5867 = vpack.c.b16 %v5795, %v5793
        %v5868 = vpack.c.b16 %v5796, %v5794
        %v5869 = vpack.c.b16 %v5799, %v5797
        %v5870 = vpack.c.b16 %v5800, %v5798
        %v5871 = vpack.c.b16 %v5803, %v5801
        %v5872 = vpack.c.b16 %v5804, %v5802
        %v5873 = vpack.c.b16 %v5807, %v5805
        %v5874 = vpack.c.b16 %v5808, %v5806
        %v5875 = vpack.c.b16 %v5811, %v5809
        %v5876 = vpack.c.b16 %v5812, %v5810
        %5941 = vmatprep.subr.bf16.mxu0 %v5814
        %5942 = vmatpush1.bf16.msra.mxu0 %v5813
        %5943 = vmatprep.subr.bf16.mxu0 %v5816
        %5944 = vmatpush1.bf16.msra.mxu0 %v5815
        %5945 = vmatprep.subr.bf16.mxu0 %v5818
        %5946 = vmatpush1.bf16.msra.mxu0 %v5817
        %5947 = vmatprep.subr.bf16.mxu0 %v5820
        %5948 = vmatpush1.bf16.msra.mxu0 %v5819
        %5949 = vmatprep.subr.bf16.mxu0 %v5822
        %5950 = vmatpush1.bf16.msra.mxu0 %v5821
        %5951 = vmatprep.subr.bf16.mxu0 %v5824
        %5952 = vmatpush1.bf16.msra.mxu0 %v5823
        %5953 = vmatprep.subr.bf16.mxu0 %v5826
        %5954 = vmatpush1.bf16.msra.mxu0 %v5825
        %5955 = vmatprep.subr.bf16.mxu0 %v5828
        %5956 = vmatpush1.bf16.msra.mxu0 %v5827
        %5957 = vmatprep.subr.bf16.mxu0 %v5830
        %5958 = vmatpush1.bf16.msra.mxu0 %v5829
        %5959 = vmatprep.subr.bf16.mxu0 %v5832
        %5960 = vmatpush1.bf16.msra.mxu0 %v5831
        %5961 = vmatprep.subr.bf16.mxu0 %v5834
        %5962 = vmatpush1.bf16.msra.mxu0 %v5833
        %5963 = vmatprep.subr.bf16.mxu0 %v5836
        %5964 = vmatpush1.bf16.msra.mxu0 %v5835
        %5965 = vmatprep.subr.bf16.mxu0 %v5838
        %5966 = vmatpush1.bf16.msra.mxu0 %v5837
        %5967 = vmatprep.subr.bf16.mxu0 %v5840
        %5968 = vmatpush1.bf16.msra.mxu0 %v5839
        %5969 = vmatprep.subr.bf16.mxu0 %v5842
        %5970 = vmatpush1.bf16.msra.mxu0 %v5841
        %5971 = vmatprep.subr.bf16.mxu0 %v5844
        %5972 = vmatpush1.bf16.msra.mxu0 %v5843
        %5973 = vmatprep.mubr.bf16.mxu0 %v5542
        %5974 = vmatmul.mubr.bf16.gmra.mrb[0].mxu0 %v5541
        %v5975 = vpop.f32.mrb[0].mxu0
        %v5976 = vadd.f32 %v5614, %v5975
        %v5977 = vpop.f32.mrb[0].mxu0
        %v5978 = vadd.f32 %v5618, %v5977
        %v5979 = vpop.f32.mrb[0].mxu0
        %v5980 = vadd.f32 %v5614, %v5979
        %v5981 = vpop.f32.mrb[0].mxu0
        %v5982 = vadd.f32 %v5618, %v5981
        %5983 = vdwg.mxu0
        %5984 = vmatprep.subr.bf16.mxu0 %v5846
        %5985 = vmatpush1.bf16.msra.mxu0 %v5845
        %5986 = vmatprep.subr.bf16.mxu0 %v5848
        %5987 = vmatpush1.bf16.msra.mxu0 %v5847
        %5988 = vmatprep.subr.bf16.mxu0 %v5850
        %5989 = vmatpush1.bf16.msra.mxu0 %v5849
        %5990 = vmatprep.subr.bf16.mxu0 %v5852
        %5991 = vmatpush1.bf16.msra.mxu0 %v5851
        %5992 = vmatprep.subr.bf16.mxu0 %v5854
        %5993 = vmatpush1.bf16.msra.mxu0 %v5853
        %5994 = vmatprep.subr.bf16.mxu0 %v5856
        %5995 = vmatpush1.bf16.msra.mxu0 %v5855
        %5996 = vmatprep.subr.bf16.mxu0 %v5858
        %5997 = vmatpush1.bf16.msra.mxu0 %v5857
        %5998 = vmatprep.subr.bf16.mxu0 %v5860
        %5999 = vmatpush1.bf16.msra.mxu0 %v5859
        %6000 = vmatprep.subr.bf16.mxu0 %v5862
        %6001 = vmatpush1.bf16.msra.mxu0 %v5861
        %6002 = vmatprep.subr.bf16.mxu0 %v5864
        %6003 = vmatpush1.bf16.msra.mxu0 %v5863
        %6004 = vmatprep.subr.bf16.mxu0 %v5866
        %6005 = vmatpush1.bf16.msra.mxu0 %v5865
        %6006 = vmatprep.subr.bf16.mxu0 %v5868
        %6007 = vmatpush1.bf16.msra.mxu0 %v5867
        %6008 = vmatprep.subr.bf16.mxu0 %v5870
        %6009 = vmatpush1.bf16.msra.mxu0 %v5869
        %6010 = vmatprep.subr.bf16.mxu0 %v5872
        %6011 = vmatpush1.bf16.msra.mxu0 %v5871
        %6012 = vmatprep.subr.bf16.mxu0 %v5874
        %6013 = vmatpush1.bf16.msra.mxu0 %v5873
        %6014 = vmatprep.subr.bf16.mxu0 %v5876
        %6015 = vmatpush1.bf16.msra.mxu0 %v5875
        %6016 = vmatprep.mubr.bf16.mxu0 %v5544
        %6017 = vmatmul.mubr.bf16.gmra.mrb[0].mxu0 %v5543
        %v6018 = vpop.f32.mrb[0].mxu0
        %v6019 = vadd.f32 %v5976, %v6018
        %v6020 = vpop.f32.mrb[0].mxu0
        %v6021 = vadd.f32 %v5978, %v6020
        %v6022 = vpop.f32.mrb[0].mxu0
        %v6023 = vadd.f32 %v5980, %v6022
        %v6024 = vpop.f32.mrb[0].mxu0
        %v6025 = vadd.f32 %v5982, %v6024
        %6026 = vdwg.mxu0
        %v6027 = vmax.f32 %v6019, 0.0
        %v6028 = vmax.f32 %v6021, 0.0
        %v6029 = vmax.f32 %v6023, 0.0
        %v6030 = vmax.f32 %v6025, 0.0
        %v6031 = vpack.c.bf16 %v6029, %v6027
        %v6032 = vpack.c.bf16 %v6030, %v6028
        %v6033 = vld [vmem:[#allocation19] sm:$0xf]
        %v6034 = vld [vmem:[#allocation19 + $0x4] sm:$0xf]
        %v6035 = vld [vmem:[#allocation19 + $0x8] sm:$0xf]
        %v6036 = vld [vmem:[#allocation19 + $0xc] sm:$0xf]
        %v6037 = vld [vmem:[#allocation19 + $0x10] sm:$0xf]
        %v6038 = vld [vmem:[#allocation19 + $0x14] sm:$0xf]
        %v6039 = vld [vmem:[#allocation19 + $0x18] sm:$0xf]
        %v6040 = vld [vmem:[#allocation19 + $0x1c] sm:$0xf]
        %v6041 = vld [vmem:[#allocation19 + $0x20] sm:$0xf]
        %v6042 = vld [vmem:[#allocation19 + $0x24] sm:$0xf]
        %v6043 = vld [vmem:[#allocation19 + $0x28] sm:$0xf]
        %v6044 = vld [vmem:[#allocation19 + $0x2c] sm:$0xf]
        %v6045 = vld [vmem:[#allocation19 + $0x30] sm:$0xf]
        %v6046 = vld [vmem:[#allocation19 + $0x34] sm:$0xf]
        %v6047 = vld [vmem:[#allocation19 + $0x38] sm:$0xf]
        %v6048 = vld [vmem:[#allocation19 + $0x3c] sm:$0xf]
        %v6049 = vld [vmem:[#allocation19 + $0x40] sm:$0xf]
        %v6050 = vld [vmem:[#allocation19 + $0x44] sm:$0xf]
        %v6051 = vld [vmem:[#allocation19 + $0x48] sm:$0xf]
        %v6052 = vld [vmem:[#allocation19 + $0x4c] sm:$0xf]
        %v6053 = vld [vmem:[#allocation19 + $0x50] sm:$0xf]
        %v6054 = vld [vmem:[#allocation19 + $0x54] sm:$0xf]
        %v6055 = vld [vmem:[#allocation19 + $0x58] sm:$0xf]
        %v6056 = vld [vmem:[#allocation19 + $0x5c] sm:$0xf]
        %v6057 = vld [vmem:[#allocation19 + $0x60] sm:$0xf]
        %v6058 = vld [vmem:[#allocation19 + $0x64] sm:$0xf]
        %v6059 = vld [vmem:[#allocation19 + $0x68] sm:$0xf]
        %v6060 = vld [vmem:[#allocation19 + $0x6c] sm:$0xf]
        %v6061 = vld [vmem:[#allocation19 + $0x70] sm:$0xf]
        %v6062 = vld [vmem:[#allocation19 + $0x74] sm:$0xf]
        %v6063 = vld [vmem:[#allocation19 + $0x78] sm:$0xf]
        %v6064 = vld [vmem:[#allocation19 + $0x7c] sm:$0xf]
        %v6065 = vld [vmem:[%s17] sm:$0x1]
        %v6067 = vlaneseq
        %v6068 = vshrl.u32 %v6067, 7
        %v6069 = vsub.s32 0, %v6068
        %v6070 = vrot.slane %v6065, %v6069
        %v6104 = vunpack.c.l.b16 %v6033
        %v6105 = vunpack.c.l.b16 %v6034
        %v6106 = vunpack.c.l.b16 %v6035
        %v6107 = vunpack.c.l.b16 %v6036
        %v6108 = vunpack.c.l.b16 %v6037
        %v6109 = vunpack.c.l.b16 %v6038
        %v6110 = vunpack.c.l.b16 %v6039
        %v6111 = vunpack.c.l.b16 %v6040
        %v6112 = vunpack.c.l.b16 %v6041
        %v6113 = vunpack.c.l.b16 %v6042
        %v6114 = vunpack.c.l.b16 %v6043
        %v6115 = vunpack.c.l.b16 %v6044
        %v6116 = vunpack.c.l.b16 %v6045
        %v6117 = vunpack.c.l.b16 %v6046
        %v6118 = vunpack.c.l.b16 %v6047
        %v6119 = vunpack.c.l.b16 %v6048
        %v6120 = vunpack.c.l.b16 %v6049
        %v6121 = vunpack.c.l.b16 %v6050
        %v6122 = vunpack.c.l.b16 %v6051
        %v6123 = vunpack.c.l.b16 %v6052
        %v6124 = vunpack.c.l.b16 %v6053
        %v6125 = vunpack.c.l.b16 %v6054
        %v6126 = vunpack.c.l.b16 %v6055
        %v6127 = vunpack.c.l.b16 %v6056
        %v6128 = vunpack.c.l.b16 %v6057
        %v6129 = vunpack.c.l.b16 %v6058
        %v6130 = vunpack.c.l.b16 %v6059
        %v6131 = vunpack.c.l.b16 %v6060
        %v6132 = vunpack.c.l.b16 %v6061
        %v6133 = vunpack.c.l.b16 %v6062
        %v6134 = vunpack.c.l.b16 %v6063
        %v6135 = vunpack.c.l.b16 %v6064
        %v6136 = vpack.c.b16 %v6105, %v6104
        %v6137 = vpack.c.b16 %v6107, %v6106
        %v6138 = vpack.c.b16 %v6109, %v6108
        %v6139 = vpack.c.b16 %v6111, %v6110
        %v6140 = vpack.c.b16 %v6113, %v6112
        %v6141 = vpack.c.b16 %v6115, %v6114
        %v6142 = vpack.c.b16 %v6117, %v6116
        %v6143 = vpack.c.b16 %v6119, %v6118
        %v6144 = vpack.c.b16 %v6121, %v6120
        %v6145 = vpack.c.b16 %v6123, %v6122
        %v6146 = vpack.c.b16 %v6125, %v6124
        %v6147 = vpack.c.b16 %v6127, %v6126
        %v6148 = vpack.c.b16 %v6129, %v6128
        %v6149 = vpack.c.b16 %v6131, %v6130
        %v6150 = vpack.c.b16 %v6133, %v6132
        %v6151 = vpack.c.b16 %v6135, %v6134
        %6168 = vmatprep.subr.bf16.mxu0 0
        %6169 = vmatpush1.bf16.msra.mxu0 %v6136
        %6170 = vmatprep.subr.bf16.mxu0 0
        %6171 = vmatpush1.bf16.msra.mxu0 %v6137
        %6172 = vmatprep.subr.bf16.mxu0 0
        %6173 = vmatpush1.bf16.msra.mxu0 %v6138
        %6174 = vmatprep.subr.bf16.mxu0 0
        %6175 = vmatpush1.bf16.msra.mxu0 %v6139
        %6176 = vmatprep.subr.bf16.mxu0 0
        %6177 = vmatpush1.bf16.msra.mxu0 %v6140
        %6178 = vmatprep.subr.bf16.mxu0 0
        %6179 = vmatpush1.bf16.msra.mxu0 %v6141
        %6180 = vmatprep.subr.bf16.mxu0 0
        %6181 = vmatpush1.bf16.msra.mxu0 %v6142
        %6182 = vmatprep.subr.bf16.mxu0 0
        %6183 = vmatpush1.bf16.msra.mxu0 %v6143
        %6184 = vmatprep.subr.bf16.mxu0 0
        %6185 = vmatpush1.bf16.msra.mxu0 %v6144
        %6186 = vmatprep.subr.bf16.mxu0 0
        %6187 = vmatpush1.bf16.msra.mxu0 %v6145
        %6188 = vmatprep.subr.bf16.mxu0 0
        %6189 = vmatpush1.bf16.msra.mxu0 %v6146
        %6190 = vmatprep.subr.bf16.mxu0 0
        %6191 = vmatpush1.bf16.msra.mxu0 %v6147
        %6192 = vmatprep.subr.bf16.mxu0 0
        %6193 = vmatpush1.bf16.msra.mxu0 %v6148
        %6194 = vmatprep.subr.bf16.mxu0 0
        %6195 = vmatpush1.bf16.msra.mxu0 %v6149
        %6196 = vmatprep.subr.bf16.mxu0 0
        %6197 = vmatpush1.bf16.msra.mxu0 %v6150
        %6198 = vmatprep.subr.bf16.mxu0 0
        %6199 = vmatpush1.bf16.msra.mxu0 %v6151
        %6200 = vmatprep.mubr.bf16.mxu0 %v6032
        %6201 = vmatmul.mubr.bf16.gmra.mrb[0].mxu0 %v6031
        %v6202 = vpop.f32.mrb[0].mxu0
        %v6203 = vadd.f32 %v6070, %v6202
        %v6204 = vpop.f32.mrb[0].mxu0
        %v6205 = vpop.f32.mrb[0].mxu0
        %v6206 = vadd.f32 %v6070, %v6205
        %v6207 = vpop.f32.mrb[0].mxu0
        %6208 = vdwg.mxu0
        %v6209 = vpack.c.bf16 %v6206, %v6203
        %v6211 = vunpack.c.l.b16 %v6209
        %v6212 = vunpack.c.h.b16 %v6209
        %v6213 = vpack.c.b16 %v6211, %v6211
        %v6214 = vpack.c.b16 %v6212, %v6212
        %6217 = vst [vmem:[%s718] sm:$0xf] %v6213
        %6218 = vst [vmem:[%s718 + $0x4] sm:$0xf] %v6214
        %s6219 = sand.u32 %s429, 1
        %s6220 = scalar_lea.sflag [#allocation4], %s6219
        %s6221 = sand.u32 %s429, 1
        %s6222 = smul.addr %s6221, 8
        %s6223 = scalar_lea.vmem [#allocation20], %s6222
        // Predicated region
        $region137: #{tpu_custom_call.1} parent=91 // pred_check
          %p6224 = pneg %p439
        $region138: #{tpu_custom_call.1} parent=91 // pred_check_branch
          %6226 = sbr.rel (%p6224) target = $region140
        $region139: #{tpu_custom_call.1} parent=91 // pred_region
          %s6228 = ssub.s32 128, 128
          %6229 = vsyncadd %s6220, %s6228
          %s6230 = smul.addr %s38, 2
          %s6231 = smul.addr %s6230, 64
          %s6232 = scalar_lea.hbm %s18, %s6231
          %s6233 = sshll.u32 %s6223, 4
          %s6234 = int_to_ptr.vmem [resolvable:$true] %s6233
          %6239 = dma.vmem_to_hbm [thread:$0]  %s6234, 128, %s6232, %s6220, 64, 64, 4
        $region140: #{tpu_custom_call.1} parent=91 // pred_fallthru
          _
      $region92: #{tpu_custom_call.1} parent=5 // pred_fallthru
        _
      %p6240 = scmp.le.s32.totalorder 2, %s33
      // Predicated region
      $region141: #{tpu_custom_call.1} parent=5 // pred_check
        %p6241 = pneg %p6240
      $region142: #{tpu_custom_call.1} parent=5 // pred_check_branch
        %6243 = sbr.rel (%p6241) target = $region144
      $region143: #{tpu_custom_call.1} parent=5 // pred_region
        %s6244 = ssub.s32 %s33, 2
        // Predicated region
        $region145: #{tpu_custom_call.1} parent=143 // pred_check
          %p6245 = pneg %p445
        $region146: #{tpu_custom_call.1} parent=143 // pred_check_branch
          %6247 = sbr.rel (%p6245) target = $region148
        $region147: #{tpu_custom_call.1} parent=143 // pred_region
          %s6248 = sand.u32 %s430, 1
          %s6249 = scalar_lea.sflag [#allocation4], %s6248
          %s6250 = sand.u32 %s430, 1
          %s6251 = smul.addr %s6250, 8
          %s6252 = scalar_lea.vmem [#allocation20], %s6251
          %6253 = dma.done %s6249, 128
        $region148: #{tpu_custom_call.1} parent=143 // pred_fallthru
          _
      $region144: #{tpu_custom_call.1} parent=5 // pred_fallthru
        _
    $region6: #{tpu_custom_call.1} parent=1 // loop_footer
      %s37 = sadd.s32 1, %s33
    $region7: #{tpu_custom_call.1} parent=1 // loop_footer_branch
      %32 = sbr.rel target = $region3
    $region8: #{tpu_custom_call.1} parent=1 // loop_exit
      _
    %6254 = vsyncpa [#allocation3], 1
    %s6255 = scalar_lea.sflag [#allocation3], 1
    %6256 = vsyncpa %s6255, 1
    %6257 = vsyncpa [#allocation6], 1
    %6258 = vsyncpa [#allocation9], 1
    %6259 = vsyncpa [#allocation12], 1
    %6260 = vsyncpa [#allocation15], 1
    %6261 = vsyncpa [#allocation18], 1
    %6262 = vsyncpa [#allocation4], 1
    %s6263 = scalar_lea.sflag [#allocation4], 1
    %6264 = vsyncpa %s6263, 1

</llo_original>
